<compile_context>
chip_gen: v5e
topology: v5e:2x2
jax: 0.10.0
libtpu: 0.0.40
codegen_flags: <defaults>
</compile_context>

<pallas_src>
import jax
import jax.numpy as jnp
from jax.experimental import pallas as pl
from jax.experimental.pallas import tpu as pltpu

_MIB = 1024 * 1024
_SMALL_TENSOR_BYTES = 2 * _MIB          # below this, the pure-XLA path wins


def _tpu_budget():
    """Return (vmem_capacity_bytes, min_grid_steps) with safe fallbacks."""
    vmem_bytes = 64 * _MIB                       # conservative default (v7x per-TC)
    try:
        vmem_bytes = int(pltpu.get_tpu_info().vmem_capacity_bytes)
    except Exception:
        pass
    min_steps = 1                                # single TC: fewest, largest blocks
    try:
        kind = str(getattr(jax.devices()[0], "device_kind", "")).lower()
        # Chips with 2 TensorCores that share the 'parallel' grid axis.
        if ("v4" in kind) or ("v5p" in kind) or ("7" in kind):
            min_steps = 4
    except Exception:
        pass
    return vmem_bytes, min_steps


def _plan_tiles(rows, lane, itemsize, n_inputs):
    """Pick (tile_rows, grid, vmem_limit) for the row-tiled reduce kernel."""
    vmem_bytes, min_steps = _tpu_budget()
    # Leave headroom for Mosaic internals; cap at ~100 MiB even on 128 MiB parts.
    budget = max(8 * _MIB, min(vmem_bytes - 16 * _MIB, 100 * _MIB))
    row_bytes = lane * itemsize
    # Double-buffered pipeline keeps 2*(n_inputs + 1) blocks resident.
    target_rows = max(8, budget // (2 * (n_inputs + 1) * row_bytes))
    # On multi-TC chips keep >= min_steps grid steps so both cores get work.
    target_rows = min(target_rows, max(8, -(-rows // min_steps)))
    tile_rows = max(8, (target_rows // 8) * 8)   # multiple-of-8 sublanes
    if tile_rows >= rows:
        tile_rows = rows                         # full extent is always legal
    grid = pl.cdiv(rows, tile_rows)
    footprint = 2 * (n_inputs + 1) * tile_rows * row_bytes
    vmem_limit = int(min(vmem_bytes - 4 * _MIB,
                         max(32 * _MIB, footprint + 8 * _MIB)))
    return tile_rows, grid, vmem_limit


def _make_reduce_kernel(n_inputs: int, fusion_type: str):
    """Elementwise add/avg across `n_inputs` same-shaped refs (f32 accumulate)."""
    inv_n = 1.0 / n_inputs

    def kernel(*refs):
        in_refs = refs[:n_inputs]
        o_ref = refs[n_inputs]
        acc = in_refs[0][...].astype(jnp.float32)
        for r in in_refs[1:]:
            acc = acc + r[...].astype(jnp.float32)
        if fusion_type == "avg":
            acc = acc * inv_n
        o_ref[...] = acc.astype(o_ref.dtype)

    return kernel


def _reduce_jnp(inputs, fusion_type):
    if fusion_type == "add":
        return jnp.sum(jnp.stack(inputs, -1), -1)
    return jnp.mean(jnp.stack(inputs, -1), -1)


def _fuse_reduce(inputs, fusion_type: str):
    """'add' / 'avg' over a tuple of same-shaped arrays via a row-tiled kernel."""
    n = len(inputs)
    shape = inputs[0].shape
    dtype = inputs[0].dtype
    itemsize = jnp.dtype(dtype).itemsize

    n_elems = 1
    for d in shape:
        n_elems *= d

    # Fast paths: tiny tensors, integer or mixed dtypes -> pure XLA.
    if (n * n_elems * itemsize < _SMALL_TENSOR_BYTES
            or not jnp.issubdtype(dtype, jnp.floating)
            or any(x.dtype != dtype for x in inputs)):
        return _reduce_jnp(inputs, fusion_type)

    # 128-aligned prefix goes through Pallas; the (<128-element) tail stays in
    # jnp.  No jnp.pad copies of full inputs: the op is HBM-bandwidth bound.
    main = (n_elems // 128) * 128
    tail = n_elems - main
    if main == 0:
        return _reduce_jnp(inputs, fusion_type)

    # Widest lane-dense width (multiple of 128) that divides the prefix.
    lane = 128
    for cand in (1024, 512, 256):
        if main % cand == 0:
            lane = cand
            break
    rows = main // lane

    flats = [x.reshape(-1) for x in inputs]
    mains = [f[:main].reshape(rows, lane) for f in flats]

    tile_rows, grid, vmem_limit = _plan_tiles(rows, lane, itemsize, n)
    spec = pl.BlockSpec((tile_rows, lane), lambda i: (i, 0))

    main_out = pl.pallas_call(
        _make_reduce_kernel(n, fusion_type),
        out_shape=jax.ShapeDtypeStruct((rows, lane), dtype),
        grid=(grid,),
        in_specs=[spec] * n,
        out_specs=spec,
        compiler_params=pltpu.CompilerParams(
            dimension_semantics=("parallel",),
            vmem_limit_bytes=vmem_limit,
        ),
    )(*mains)

    out_flat = main_out.reshape(-1)
    if tail:
        tail_acc = flats[0][main:].astype(jnp.float32)
        for f in flats[1:]:
            tail_acc = tail_acc + f[main:].astype(jnp.float32)
        if fusion_type == "avg":
            tail_acc = tail_acc * (1.0 / n)
        out_flat = jnp.concatenate([out_flat, tail_acc.astype(dtype)])
    return out_flat.reshape(shape)


def fc_fusion(inputs, fusion_type: str = "concat"):
    """Pallas/JAX implementation of FcFusion.forward for a tuple/list/dict."""
    assert fusion_type in ("add", "avg", "concat")
    assert isinstance(inputs, (tuple, list, dict))
    if isinstance(inputs, dict):
        inputs = tuple(inputs.values())
    inputs = tuple(inputs)
    assert len(inputs) >= 1

    if fusion_type == "concat":
        # Pure data movement: XLA's concatenate is straight DMA placement and
        # fuses into consumers; a standalone Pallas copy kernel adds a VMEM
        # round trip + per-step overhead for zero compute value (perf review).
        return jnp.concatenate(inputs, axis=-1)

    shape = inputs[0].shape
    for x in inputs:
        assert x.shape == shape, "add/avg fusion requires identical input shapes"
    return _fuse_reduce(inputs, fusion_type)


def _reference(inputs, fusion_type):
    xs = tuple(inputs)
    if fusion_type == "add":
        return jnp.sum(jnp.stack(xs, -1), -1)
    elif fusion_type == "avg":
        return jnp.mean(jnp.stack(xs, -1), -1)
    else:
        return jnp.concatenate(xs, -1)


if __name__ == "__main__":
    key = jax.random.PRNGKey(0)
    n_inputs = 3

    # Small module-consistent shapes (jnp fast path) plus two larger shapes
    # that exercise the Pallas reduce kernel (aligned + unaligned tail).
    cases = [
        (2, 8, 32),      # tiny FC-head size -> jnp fast path
        (2, 8, 128),     # tiny, lane-aligned -> jnp fast path
        (4, 384, 512),   # aligned, Pallas reduce kernel
        (5, 97, 1027),   # element count % 128 != 0 -> Pallas prefix + jnp tail
    ]

    for ci, shape in enumerate(cases):
        keys = jax.random.split(jax.random.fold_in(key, ci), n_inputs)
        inputs = tuple(
            jax.random.normal(k, shape, dtype=jnp.float32) for k in keys
        )
        for fusion_type in ("add", "avg", "concat"):
            out = jax.block_until_ready(fc_fusion(inputs, fusion_type))
            ref = _reference(inputs, fusion_type)
            assert out.shape == ref.shape and out.dtype == ref.dtype, (
                f"shape/dtype mismatch for fusion_type={fusion_type}, shape={shape}")
            if not jnp.allclose(out, ref, atol=1e-5, rtol=1e-5):
                raise AssertionError(
                    f"value mismatch for fusion_type={fusion_type}, shape={shape}")

    print("KERNEL_OK")
</pallas_src>

<mosaic_0001>
module attributes {stable_mosaic.version = 11 : i64} {
  func.func @kernel(%arg0: i32, %arg1: memref<768x1024xf32, #tpu.memory_space<vmem>>, %arg2: memref<768x1024xf32, #tpu.memory_space<vmem>>, %arg3: memref<768x1024xf32, #tpu.memory_space<vmem>>, %arg4: memref<768x1024xf32, #tpu.memory_space<vmem>>) attributes {dimension_semantics = [#tpu.dimension_semantics<parallel>], iteration_bounds = array<i64: 1>, scalar_prefetch = 0 : i64, scratch_operands = 0 : i64, tpu.core_type = #tpu.core_type<tc>, window_params = [{transform_indices = @transform_0, window_bounds = array<i64: 768, 1024>}, {transform_indices = @transform_1, window_bounds = array<i64: 768, 1024>}, {transform_indices = @transform_2, window_bounds = array<i64: 768, 1024>}, {transform_indices = @transform_3, window_bounds = array<i64: 768, 1024>}]} {
    %c0 = arith.constant 0 : index
    %c0_0 = arith.constant 0 : index
    %0 = vector.load %arg1[%c0, %c0_0] : memref<768x1024xf32, #tpu.memory_space<vmem>>, vector<768x1024xf32>
    %c0_1 = arith.constant 0 : index
    %c0_2 = arith.constant 0 : index
    %1 = vector.load %arg2[%c0_1, %c0_2] : memref<768x1024xf32, #tpu.memory_space<vmem>>, vector<768x1024xf32>
    %2 = arith.addf %0, %1 : vector<768x1024xf32>
    %c0_3 = arith.constant 0 : index
    %c0_4 = arith.constant 0 : index
    %3 = vector.load %arg3[%c0_3, %c0_4] : memref<768x1024xf32, #tpu.memory_space<vmem>>, vector<768x1024xf32>
    %4 = arith.addf %2, %3 : vector<768x1024xf32>
    %c0_5 = arith.constant 0 : index
    %c0_6 = arith.constant 0 : index
    %5 = vector.load %arg4[%c0_5, %c0_6] : memref<768x1024xf32, #tpu.memory_space<vmem>>, vector<768x1024xf32>
    tpu.vector_store %arg4[%c0_5, %c0_6], %4 {strides = array<i32>} : memref<768x1024xf32, #tpu.memory_space<vmem>>, vector<768x1024xf32>,
    return
  }
  func.func @transform_0(%arg0: i32) -> (i32, i32) {
    %c0_i32 = arith.constant 0 : i32
    %c0_i32_0 = arith.constant 0 : i32
    return %arg0, %c0_i32 : i32, i32
  }
  func.func @transform_1(%arg0: i32) -> (i32, i32) {
    %c0_i32 = arith.constant 0 : i32
    %c0_i32_0 = arith.constant 0 : i32
    return %arg0, %c0_i32 : i32, i32
  }
  func.func @transform_2(%arg0: i32) -> (i32, i32) {
    %c0_i32 = arith.constant 0 : i32
    %c0_i32_0 = arith.constant 0 : i32
    return %arg0, %c0_i32 : i32, i32
  }
  func.func @transform_3(%arg0: i32) -> (i32, i32) {
    %c0_i32 = arith.constant 0 : i32
    %c0_i32_0 = arith.constant 0 : i32
    return %arg0, %c0_i32 : i32, i32
  }
}

</mosaic_0001>

<llo_original>
// kernel: tpu_custom_call.1
$region0: #{tpu_custom_call.1}
  #allocation0 [shape = 'u32[]', space=smem, size = 0x4, offset = 0x4, fixed_abs, tag = 'smem constant byte address 0x4 - core index']
  #allocation1 [shape = 'u32[72,128]{1,0:T(1,128)}', space=vmem, size = 0x9000, scoped, tag = 'internal scratch']
  %s0 = inlined_call_operand.hbm [shape: f32[768,1024], index: 0, kind: input, shape index: {}]
  %s1 = inlined_call_operand.hbm [shape: f32[768,1024], index: 1, kind: input, shape index: {}]
  %s2 = inlined_call_operand.hbm [shape: f32[768,1024], index: 2, kind: input, shape index: {}]
  %s3 = inlined_call_operand.hbm [shape: f32[768,1024], index: 3, kind: output, shape index: {}]
  %s4 = sld [smem:[#allocation0]]
  $region34: #{tpu_custom_call.1} parent=0
    _
  %s6 = ssub.s32 1, %s4
  %s7 = scalar_select 0, %s6, %s4
  $region1: #{tpu_custom_call.1} parent=0
    #allocation2 [shape = 'u8[3145728]{0}', space=vmem, size = 0x300000, scoped, tag = 'input window, operand 0, single buffered']
    #allocation3 [shape = 's32[1]{0}', space=sflag, size = 0x4, scoped, tag = 'scoped memory for tpu_custom_call.1']
    #allocation4 [shape = 's32[1]{0}', space=sflag, size = 0x4, scoped, tag = 'scoped memory for tpu_custom_call.1']
    #allocation5 [shape = 'u8[3145728]{0}', space=vmem, size = 0x300000, scoped, tag = 'input window, operand 1, single buffered']
    #allocation6 [shape = 's32[1]{0}', space=sflag, size = 0x4, scoped, tag = 'scoped memory for tpu_custom_call.1']
    #allocation7 [shape = 'u8[3145728]{0}', space=vmem, size = 0x300000, scoped, tag = 'input window, operand 2, single buffered']
    #allocation8 [shape = 'u8[3145728]{0}', space=vmem, size = 0x300000, scoped, tag = 'output window, operand 0, single buffered']
    %8 = vsyncpa [#allocation3], 0
    %9 = vsyncpa [#allocation6], 0
    %10 = vsyncpa [#allocation4], 0
    // Predicated region
    $region2: #{tpu_custom_call.1} parent=1 // pred_check
      _
    $region3: #{tpu_custom_call.1} parent=1 // pred_check_branch
      %12 = sbr.rel (0) target = $region5
    $region4: #{tpu_custom_call.1} parent=1 // pred_region
      %14 = vsyncadd [#allocation3], 0
      %s15 = sshll.u32 %s0, 4
      %s16 = int_to_ptr.hbm [resolvable:$true] %s15
      %s17 = sshll.u32 [#allocation2], 4
      %s18 = int_to_ptr.vmem [resolvable:$true] %s17
      %23 = dma.hbm_to_vmem [thread:$0]  %s16, 98304, %s18, [#allocation3], 1024, 1024, 64
    $region5: #{tpu_custom_call.1} parent=1 // pred_fallthru
      _
    // Predicated region
    $region6: #{tpu_custom_call.1} parent=1 // pred_check
      _
    $region7: #{tpu_custom_call.1} parent=1 // pred_check_branch
      %25 = sbr.rel (0) target = $region9
    $region8: #{tpu_custom_call.1} parent=1 // pred_region
      %27 = vsyncadd [#allocation6], 0
      %s28 = sshll.u32 %s1, 4
      %s29 = int_to_ptr.hbm [resolvable:$true] %s28
      %s30 = sshll.u32 [#allocation5], 4
      %s31 = int_to_ptr.vmem [resolvable:$true] %s30
      %36 = dma.hbm_to_vmem [thread:$0]  %s29, 98304, %s31, [#allocation6], 1024, 1024, 64
    $region9: #{tpu_custom_call.1} parent=1 // pred_fallthru
      _
    // Predicated region
    $region10: #{tpu_custom_call.1} parent=1 // pred_check
      _
    $region11: #{tpu_custom_call.1} parent=1 // pred_check_branch
      %38 = sbr.rel (0) target = $region13
    $region12: #{tpu_custom_call.1} parent=1 // pred_region
      %40 = vsyncadd [#allocation6], 0
      %s41 = sshll.u32 %s2, 4
      %s42 = int_to_ptr.hbm [resolvable:$true] %s41
      %s43 = sshll.u32 [#allocation7], 4
      %s44 = int_to_ptr.vmem [resolvable:$true] %s43
      %49 = dma.hbm_to_vmem [thread:$0]  %s42, 98304, %s44, [#allocation6], 1024, 1024, 64
    $region13: #{tpu_custom_call.1} parent=1 // pred_fallthru
      _
    // Predicated region
    $region14: #{tpu_custom_call.1} parent=1 // pred_check
      _
    $region15: #{tpu_custom_call.1} parent=1 // pred_check_branch
      %51 = sbr.rel (0) target = $region17
    $region16: #{tpu_custom_call.1} parent=1 // pred_region
      %53 = dma.done [#allocation3], 98304
    $region17: #{tpu_custom_call.1} parent=1 // pred_fallthru
      _
    // Predicated region
    $region18: #{tpu_custom_call.1} parent=1 // pred_check
      _
    $region19: #{tpu_custom_call.1} parent=1 // pred_check_branch
      %55 = sbr.rel (0) target = $region21
    $region20: #{tpu_custom_call.1} parent=1 // pred_region
      %57 = dma.done [#allocation6], 98304
    $region21: #{tpu_custom_call.1} parent=1 // pred_fallthru
      _
    // Predicated region
    $region22: #{tpu_custom_call.1} parent=1 // pred_check
      _
    $region23: #{tpu_custom_call.1} parent=1 // pred_check_branch
      %59 = sbr.rel (0) target = $region25
    $region24: #{tpu_custom_call.1} parent=1 // pred_region
      %61 = dma.done [#allocation6], 98304
    $region25: #{tpu_custom_call.1} parent=1 // pred_fallthru
      _
    %v62 = vld [vmem:[#allocation2] sm:$0xff]
    %v63 = vld [vmem:[#allocation2 + $0x8] sm:$0xff]
    %v64 = vld [vmem:[#allocation2 + $0x10] sm:$0xff]
    %v65 = vld [vmem:[#allocation2 + $0x18] sm:$0xff]
    %v66 = vld [vmem:[#allocation2 + $0x20] sm:$0xff]
    %v67 = vld [vmem:[#allocation2 + $0x28] sm:$0xff]
    %v68 = vld [vmem:[#allocation2 + $0x30] sm:$0xff]
    %v69 = vld [vmem:[#allocation2 + $0x38] sm:$0xff]
    %v70 = vld [vmem:[#allocation2 + $0x40] sm:$0xff]
    %v71 = vld [vmem:[#allocation2 + $0x48] sm:$0xff]
    %v72 = vld [vmem:[#allocation2 + $0x50] sm:$0xff]
    %v73 = vld [vmem:[#allocation2 + $0x58] sm:$0xff]
    %v74 = vld [vmem:[#allocation2 + $0x60] sm:$0xff]
    %v75 = vld [vmem:[#allocation2 + $0x68] sm:$0xff]
    %v76 = vld [vmem:[#allocation2 + $0x70] sm:$0xff]
    %v77 = vld [vmem:[#allocation2 + $0x78] sm:$0xff]
    %v78 = vld [vmem:[#allocation2 + $0x80] sm:$0xff]
    %v79 = vld [vmem:[#allocation2 + $0x88] sm:$0xff]
    %v80 = vld [vmem:[#allocation2 + $0x90] sm:$0xff]
    %v81 = vld [vmem:[#allocation2 + $0x98] sm:$0xff]
    %v82 = vld [vmem:[#allocation2 + $0xa0] sm:$0xff]
    %v83 = vld [vmem:[#allocation2 + $0xa8] sm:$0xff]
    %v84 = vld [vmem:[#allocation2 + $0xb0] sm:$0xff]
    %v85 = vld [vmem:[#allocation2 + $0xb8] sm:$0xff]
    %v86 = vld [vmem:[#allocation2 + $0xc0] sm:$0xff]
    %v87 = vld [vmem:[#allocation2 + $0xc8] sm:$0xff]
    %v88 = vld [vmem:[#allocation2 + $0xd0] sm:$0xff]
    %v89 = vld [vmem:[#allocation2 + $0xd8] sm:$0xff]
    %v90 = vld [vmem:[#allocation2 + $0xe0] sm:$0xff]
    %v91 = vld [vmem:[#allocation2 + $0xe8] sm:$0xff]
    %v92 = vld [vmem:[#allocation2 + $0xf0] sm:$0xff]
    %v93 = vld [vmem:[#allocation2 + $0xf8] sm:$0xff]
    %v94 = vld [vmem:[#allocation2 + $0x100] sm:$0xff]
    %v95 = vld [vmem:[#allocation2 + $0x108] sm:$0xff]
    %v96 = vld [vmem:[#allocation2 + $0x110] sm:$0xff]
    %v97 = vld [vmem:[#allocation2 + $0x118] sm:$0xff]
    %v98 = vld [vmem:[#allocation2 + $0x120] sm:$0xff]
    %v99 = vld [vmem:[#allocation2 + $0x128] sm:$0xff]
    %v100 = vld [vmem:[#allocation2 + $0x130] sm:$0xff]
    %v101 = vld [vmem:[#allocation2 + $0x138] sm:$0xff]
    %v102 = vld [vmem:[#allocation2 + $0x140] sm:$0xff]
    %v103 = vld [vmem:[#allocation2 + $0x148] sm:$0xff]
    %v104 = vld [vmem:[#allocation2 + $0x150] sm:$0xff]
    %v105 = vld [vmem:[#allocation2 + $0x158] sm:$0xff]
    %v106 = vld [vmem:[#allocation2 + $0x160] sm:$0xff]
    %v107 = vld [vmem:[#allocation2 + $0x168] sm:$0xff]
    %v108 = vld [vmem:[#allocation2 + $0x170] sm:$0xff]
    %v109 = vld [vmem:[#allocation2 + $0x178] sm:$0xff]
    %v110 = vld [vmem:[#allocation2 + $0x180] sm:$0xff]
    %v111 = vld [vmem:[#allocation2 + $0x188] sm:$0xff]
    %v112 = vld [vmem:[#allocation2 + $0x190] sm:$0xff]
    %v113 = vld [vmem:[#allocation2 + $0x198] sm:$0xff]
    %v114 = vld [vmem:[#allocation2 + $0x1a0] sm:$0xff]
    %v115 = vld [vmem:[#allocation2 + $0x1a8] sm:$0xff]
    %v116 = vld [vmem:[#allocation2 + $0x1b0] sm:$0xff]
    %v117 = vld [vmem:[#allocation2 + $0x1b8] sm:$0xff]
    %v118 = vld [vmem:[#allocation2 + $0x1c0] sm:$0xff]
    %v119 = vld [vmem:[#allocation2 + $0x1c8] sm:$0xff]
    %v120 = vld [vmem:[#allocation2 + $0x1d0] sm:$0xff]
    %v121 = vld [vmem:[#allocation2 + $0x1d8] sm:$0xff]
    %v122 = vld [vmem:[#allocation2 + $0x1e0] sm:$0xff]
    %v123 = vld [vmem:[#allocation2 + $0x1e8] sm:$0xff]
    %v124 = vld [vmem:[#allocation2 + $0x1f0] sm:$0xff]
    %v125 = vld [vmem:[#allocation2 + $0x1f8] sm:$0xff]
    %v126 = vld [vmem:[#allocation2 + $0x200] sm:$0xff]
    %v127 = vld [vmem:[#allocation2 + $0x208] sm:$0xff]
    %v128 = vld [vmem:[#allocation2 + $0x210] sm:$0xff]
    %v129 = vld [vmem:[#allocation2 + $0x218] sm:$0xff]
    %v130 = vld [vmem:[#allocation2 + $0x220] sm:$0xff]
    %v131 = vld [vmem:[#allocation2 + $0x228] sm:$0xff]
    %v132 = vld [vmem:[#allocation2 + $0x230] sm:$0xff]
    %v133 = vld [vmem:[#allocation2 + $0x238] sm:$0xff]
    %v134 = vld [vmem:[#allocation2 + $0x240] sm:$0xff]
    %v135 = vld [vmem:[#allocation2 + $0x248] sm:$0xff]
    %v136 = vld [vmem:[#allocation2 + $0x250] sm:$0xff]
    %v137 = vld [vmem:[#allocation2 + $0x258] sm:$0xff]
    %v138 = vld [vmem:[#allocation2 + $0x260] sm:$0xff]
    %v139 = vld [vmem:[#allocation2 + $0x268] sm:$0xff]
    %v140 = vld [vmem:[#allocation2 + $0x270] sm:$0xff]
    %v141 = vld [vmem:[#allocation2 + $0x278] sm:$0xff]
    %v142 = vld [vmem:[#allocation2 + $0x280] sm:$0xff]
    %v143 = vld [vmem:[#allocation2 + $0x288] sm:$0xff]
    %v144 = vld [vmem:[#allocation2 + $0x290] sm:$0xff]
    %v145 = vld [vmem:[#allocation2 + $0x298] sm:$0xff]
    %v146 = vld [vmem:[#allocation2 + $0x2a0] sm:$0xff]
    %v147 = vld [vmem:[#allocation2 + $0x2a8] sm:$0xff]
    %v148 = vld [vmem:[#allocation2 + $0x2b0] sm:$0xff]
    %v149 = vld [vmem:[#allocation2 + $0x2b8] sm:$0xff]
    %v150 = vld [vmem:[#allocation2 + $0x2c0] sm:$0xff]
    %v151 = vld [vmem:[#allocation2 + $0x2c8] sm:$0xff]
    %v152 = vld [vmem:[#allocation2 + $0x2d0] sm:$0xff]
    %v153 = vld [vmem:[#allocation2 + $0x2d8] sm:$0xff]
    %v154 = vld [vmem:[#allocation2 + $0x2e0] sm:$0xff]
    %v155 = vld [vmem:[#allocation2 + $0x2e8] sm:$0xff]
    %v156 = vld [vmem:[#allocation2 + $0x2f0] sm:$0xff]
    %v157 = vld [vmem:[#allocation2 + $0x2f8] sm:$0xff]
    %v158 = vld [vmem:[#allocation2 + $0x300] sm:$0xff]
    %v159 = vld [vmem:[#allocation2 + $0x308] sm:$0xff]
    %v160 = vld [vmem:[#allocation2 + $0x310] sm:$0xff]
    %v161 = vld [vmem:[#allocation2 + $0x318] sm:$0xff]
    %v162 = vld [vmem:[#allocation2 + $0x320] sm:$0xff]
    %v163 = vld [vmem:[#allocation2 + $0x328] sm:$0xff]
    %v164 = vld [vmem:[#allocation2 + $0x330] sm:$0xff]
    %v165 = vld [vmem:[#allocation2 + $0x338] sm:$0xff]
    %v166 = vld [vmem:[#allocation2 + $0x340] sm:$0xff]
    %v167 = vld [vmem:[#allocation2 + $0x348] sm:$0xff]
    %v168 = vld [vmem:[#allocation2 + $0x350] sm:$0xff]
    %v169 = vld [vmem:[#allocation2 + $0x358] sm:$0xff]
    %v170 = vld [vmem:[#allocation2 + $0x360] sm:$0xff]
    %v171 = vld [vmem:[#allocation2 + $0x368] sm:$0xff]
    %v172 = vld [vmem:[#allocation2 + $0x370] sm:$0xff]
    %v173 = vld [vmem:[#allocation2 + $0x378] sm:$0xff]
    %v174 = vld [vmem:[#allocation2 + $0x380] sm:$0xff]
    %v175 = vld [vmem:[#allocation2 + $0x388] sm:$0xff]
    %v176 = vld [vmem:[#allocation2 + $0x390] sm:$0xff]
    %v177 = vld [vmem:[#allocation2 + $0x398] sm:$0xff]
    %v178 = vld [vmem:[#allocation2 + $0x3a0] sm:$0xff]
    %v179 = vld [vmem:[#allocation2 + $0x3a8] sm:$0xff]
    %v180 = vld [vmem:[#allocation2 + $0x3b0] sm:$0xff]
    %v181 = vld [vmem:[#allocation2 + $0x3b8] sm:$0xff]
    %v182 = vld [vmem:[#allocation2 + $0x3c0] sm:$0xff]
    %v183 = vld [vmem:[#allocation2 + $0x3c8] sm:$0xff]
    %v184 = vld [vmem:[#allocation2 + $0x3d0] sm:$0xff]
    %v185 = vld [vmem:[#allocation2 + $0x3d8] sm:$0xff]
    %v186 = vld [vmem:[#allocation2 + $0x3e0] sm:$0xff]
    %v187 = vld [vmem:[#allocation2 + $0x3e8] sm:$0xff]
    %v188 = vld [vmem:[#allocation2 + $0x3f0] sm:$0xff]
    %v189 = vld [vmem:[#allocation2 + $0x3f8] sm:$0xff]
    %v190 = vld [vmem:[#allocation2 + $0x400] sm:$0xff]
    %v191 = vld [vmem:[#allocation2 + $0x408] sm:$0xff]
    %v192 = vld [vmem:[#allocation2 + $0x410] sm:$0xff]
    %v193 = vld [vmem:[#allocation2 + $0x418] sm:$0xff]
    %v194 = vld [vmem:[#allocation2 + $0x420] sm:$0xff]
    %v195 = vld [vmem:[#allocation2 + $0x428] sm:$0xff]
    %v196 = vld [vmem:[#allocation2 + $0x430] sm:$0xff]
    %v197 = vld [vmem:[#allocation2 + $0x438] sm:$0xff]
    %v198 = vld [vmem:[#allocation2 + $0x440] sm:$0xff]
    %v199 = vld [vmem:[#allocation2 + $0x448] sm:$0xff]
    %v200 = vld [vmem:[#allocation2 + $0x450] sm:$0xff]
    %v201 = vld [vmem:[#allocation2 + $0x458] sm:$0xff]
    %v202 = vld [vmem:[#allocation2 + $0x460] sm:$0xff]
    %v203 = vld [vmem:[#allocation2 + $0x468] sm:$0xff]
    %v204 = vld [vmem:[#allocation2 + $0x470] sm:$0xff]
    %v205 = vld [vmem:[#allocation2 + $0x478] sm:$0xff]
    %v206 = vld [vmem:[#allocation2 + $0x480] sm:$0xff]
    %v207 = vld [vmem:[#allocation2 + $0x488] sm:$0xff]
    %v208 = vld [vmem:[#allocation2 + $0x490] sm:$0xff]
    %v209 = vld [vmem:[#allocation2 + $0x498] sm:$0xff]
    %v210 = vld [vmem:[#allocation2 + $0x4a0] sm:$0xff]
    %v211 = vld [vmem:[#allocation2 + $0x4a8] sm:$0xff]
    %v212 = vld [vmem:[#allocation2 + $0x4b0] sm:$0xff]
    %v213 = vld [vmem:[#allocation2 + $0x4b8] sm:$0xff]
    %v214 = vld [vmem:[#allocation2 + $0x4c0] sm:$0xff]
    %v215 = vld [vmem:[#allocation2 + $0x4c8] sm:$0xff]
    %v216 = vld [vmem:[#allocation2 + $0x4d0] sm:$0xff]
    %v217 = vld [vmem:[#allocation2 + $0x4d8] sm:$0xff]
    %v218 = vld [vmem:[#allocation2 + $0x4e0] sm:$0xff]
    %v219 = vld [vmem:[#allocation2 + $0x4e8] sm:$0xff]
    %v220 = vld [vmem:[#allocation2 + $0x4f0] sm:$0xff]
    %v221 = vld [vmem:[#allocation2 + $0x4f8] sm:$0xff]
    %v222 = vld [vmem:[#allocation2 + $0x500] sm:$0xff]
    %v223 = vld [vmem:[#allocation2 + $0x508] sm:$0xff]
    %v224 = vld [vmem:[#allocation2 + $0x510] sm:$0xff]
    %v225 = vld [vmem:[#allocation2 + $0x518] sm:$0xff]
    %v226 = vld [vmem:[#allocation2 + $0x520] sm:$0xff]
    %v227 = vld [vmem:[#allocation2 + $0x528] sm:$0xff]
    %v228 = vld [vmem:[#allocation2 + $0x530] sm:$0xff]
    %v229 = vld [vmem:[#allocation2 + $0x538] sm:$0xff]
    %v230 = vld [vmem:[#allocation2 + $0x540] sm:$0xff]
    %v231 = vld [vmem:[#allocation2 + $0x548] sm:$0xff]
    %v232 = vld [vmem:[#allocation2 + $0x550] sm:$0xff]
    %v233 = vld [vmem:[#allocation2 + $0x558] sm:$0xff]
    %v234 = vld [vmem:[#allocation2 + $0x560] sm:$0xff]
    %v235 = vld [vmem:[#allocation2 + $0x568] sm:$0xff]
    %v236 = vld [vmem:[#allocation2 + $0x570] sm:$0xff]
    %v237 = vld [vmem:[#allocation2 + $0x578] sm:$0xff]
    %v238 = vld [vmem:[#allocation2 + $0x580] sm:$0xff]
    %v239 = vld [vmem:[#allocation2 + $0x588] sm:$0xff]
    %v240 = vld [vmem:[#allocation2 + $0x590] sm:$0xff]
    %v241 = vld [vmem:[#allocation2 + $0x598] sm:$0xff]
    %v242 = vld [vmem:[#allocation2 + $0x5a0] sm:$0xff]
    %v243 = vld [vmem:[#allocation2 + $0x5a8] sm:$0xff]
    %v244 = vld [vmem:[#allocation2 + $0x5b0] sm:$0xff]
    %v245 = vld [vmem:[#allocation2 + $0x5b8] sm:$0xff]
    %v246 = vld [vmem:[#allocation2 + $0x5c0] sm:$0xff]
    %v247 = vld [vmem:[#allocation2 + $0x5c8] sm:$0xff]
    %v248 = vld [vmem:[#allocation2 + $0x5d0] sm:$0xff]
    %v249 = vld [vmem:[#allocation2 + $0x5d8] sm:$0xff]
    %v250 = vld [vmem:[#allocation2 + $0x5e0] sm:$0xff]
    %v251 = vld [vmem:[#allocation2 + $0x5e8] sm:$0xff]
    %v252 = vld [vmem:[#allocation2 + $0x5f0] sm:$0xff]
    %v253 = vld [vmem:[#allocation2 + $0x5f8] sm:$0xff]
    %v254 = vld [vmem:[#allocation2 + $0x600] sm:$0xff]
    %v255 = vld [vmem:[#allocation2 + $0x608] sm:$0xff]
    %v256 = vld [vmem:[#allocation2 + $0x610] sm:$0xff]
    %v257 = vld [vmem:[#allocation2 + $0x618] sm:$0xff]
    %v258 = vld [vmem:[#allocation2 + $0x620] sm:$0xff]
    %v259 = vld [vmem:[#allocation2 + $0x628] sm:$0xff]
    %v260 = vld [vmem:[#allocation2 + $0x630] sm:$0xff]
    %v261 = vld [vmem:[#allocation2 + $0x638] sm:$0xff]
    %v262 = vld [vmem:[#allocation2 + $0x640] sm:$0xff]
    %v263 = vld [vmem:[#allocation2 + $0x648] sm:$0xff]
    %v264 = vld [vmem:[#allocation2 + $0x650] sm:$0xff]
    %v265 = vld [vmem:[#allocation2 + $0x658] sm:$0xff]
    %v266 = vld [vmem:[#allocation2 + $0x660] sm:$0xff]
    %v267 = vld [vmem:[#allocation2 + $0x668] sm:$0xff]
    %v268 = vld [vmem:[#allocation2 + $0x670] sm:$0xff]
    %v269 = vld [vmem:[#allocation2 + $0x678] sm:$0xff]
    %v270 = vld [vmem:[#allocation2 + $0x680] sm:$0xff]
    %v271 = vld [vmem:[#allocation2 + $0x688] sm:$0xff]
    %v272 = vld [vmem:[#allocation2 + $0x690] sm:$0xff]
    %v273 = vld [vmem:[#allocation2 + $0x698] sm:$0xff]
    %v274 = vld [vmem:[#allocation2 + $0x6a0] sm:$0xff]
    %v275 = vld [vmem:[#allocation2 + $0x6a8] sm:$0xff]
    %v276 = vld [vmem:[#allocation2 + $0x6b0] sm:$0xff]
    %v277 = vld [vmem:[#allocation2 + $0x6b8] sm:$0xff]
    %v278 = vld [vmem:[#allocation2 + $0x6c0] sm:$0xff]
    %v279 = vld [vmem:[#allocation2 + $0x6c8] sm:$0xff]
    %v280 = vld [vmem:[#allocation2 + $0x6d0] sm:$0xff]
    %v281 = vld [vmem:[#allocation2 + $0x6d8] sm:$0xff]
    %v282 = vld [vmem:[#allocation2 + $0x6e0] sm:$0xff]
    %v283 = vld [vmem:[#allocation2 + $0x6e8] sm:$0xff]
    %v284 = vld [vmem:[#allocation2 + $0x6f0] sm:$0xff]
    %v285 = vld [vmem:[#allocation2 + $0x6f8] sm:$0xff]
    %v286 = vld [vmem:[#allocation2 + $0x700] sm:$0xff]
    %v287 = vld [vmem:[#allocation2 + $0x708] sm:$0xff]
    %v288 = vld [vmem:[#allocation2 + $0x710] sm:$0xff]
    %v289 = vld [vmem:[#allocation2 + $0x718] sm:$0xff]
    %v290 = vld [vmem:[#allocation2 + $0x720] sm:$0xff]
    %v291 = vld [vmem:[#allocation2 + $0x728] sm:$0xff]
    %v292 = vld [vmem:[#allocation2 + $0x730] sm:$0xff]
    %v293 = vld [vmem:[#allocation2 + $0x738] sm:$0xff]
    %v294 = vld [vmem:[#allocation2 + $0x740] sm:$0xff]
    %v295 = vld [vmem:[#allocation2 + $0x748] sm:$0xff]
    %v296 = vld [vmem:[#allocation2 + $0x750] sm:$0xff]
    %v297 = vld [vmem:[#allocation2 + $0x758] sm:$0xff]
    %v298 = vld [vmem:[#allocation2 + $0x760] sm:$0xff]
    %v299 = vld [vmem:[#allocation2 + $0x768] sm:$0xff]
    %v300 = vld [vmem:[#allocation2 + $0x770] sm:$0xff]
    %v301 = vld [vmem:[#allocation2 + $0x778] sm:$0xff]
    %v302 = vld [vmem:[#allocation2 + $0x780] sm:$0xff]
    %v303 = vld [vmem:[#allocation2 + $0x788] sm:$0xff]
    %v304 = vld [vmem:[#allocation2 + $0x790] sm:$0xff]
    %v305 = vld [vmem:[#allocation2 + $0x798] sm:$0xff]
    %v306 = vld [vmem:[#allocation2 + $0x7a0] sm:$0xff]
    %v307 = vld [vmem:[#allocation2 + $0x7a8] sm:$0xff]
    %v308 = vld [vmem:[#allocation2 + $0x7b0] sm:$0xff]
    %v309 = vld [vmem:[#allocation2 + $0x7b8] sm:$0xff]
    %v310 = vld [vmem:[#allocation2 + $0x7c0] sm:$0xff]
    %v311 = vld [vmem:[#allocation2 + $0x7c8] sm:$0xff]
    %v312 = vld [vmem:[#allocation2 + $0x7d0] sm:$0xff]
    %v313 = vld [vmem:[#allocation2 + $0x7d8] sm:$0xff]
    %v314 = vld [vmem:[#allocation2 + $0x7e0] sm:$0xff]
    %v315 = vld [vmem:[#allocation2 + $0x7e8] sm:$0xff]
    %v316 = vld [vmem:[#allocation2 + $0x7f0] sm:$0xff]
    %v317 = vld [vmem:[#allocation2 + $0x7f8] sm:$0xff]
    %v318 = vld [vmem:[#allocation2 + $0x800] sm:$0xff]
    %v319 = vld [vmem:[#allocation2 + $0x808] sm:$0xff]
    %v320 = vld [vmem:[#allocation2 + $0x810] sm:$0xff]
    %v321 = vld [vmem:[#allocation2 + $0x818] sm:$0xff]
    %v322 = vld [vmem:[#allocation2 + $0x820] sm:$0xff]
    %v323 = vld [vmem:[#allocation2 + $0x828] sm:$0xff]
    %v324 = vld [vmem:[#allocation2 + $0x830] sm:$0xff]
    %v325 = vld [vmem:[#allocation2 + $0x838] sm:$0xff]
    %v326 = vld [vmem:[#allocation2 + $0x840] sm:$0xff]
    %v327 = vld [vmem:[#allocation2 + $0x848] sm:$0xff]
    %v328 = vld [vmem:[#allocation2 + $0x850] sm:$0xff]
    %v329 = vld [vmem:[#allocation2 + $0x858] sm:$0xff]
    %v330 = vld [vmem:[#allocation2 + $0x860] sm:$0xff]
    %v331 = vld [vmem:[#allocation2 + $0x868] sm:$0xff]
    %v332 = vld [vmem:[#allocation2 + $0x870] sm:$0xff]
    %v333 = vld [vmem:[#allocation2 + $0x878] sm:$0xff]
    %v334 = vld [vmem:[#allocation2 + $0x880] sm:$0xff]
    %v335 = vld [vmem:[#allocation2 + $0x888] sm:$0xff]
    %v336 = vld [vmem:[#allocation2 + $0x890] sm:$0xff]
    %v337 = vld [vmem:[#allocation2 + $0x898] sm:$0xff]
    %v338 = vld [vmem:[#allocation2 + $0x8a0] sm:$0xff]
    %v339 = vld [vmem:[#allocation2 + $0x8a8] sm:$0xff]
    %v340 = vld [vmem:[#allocation2 + $0x8b0] sm:$0xff]
    %v341 = vld [vmem:[#allocation2 + $0x8b8] sm:$0xff]
    %v342 = vld [vmem:[#allocation2 + $0x8c0] sm:$0xff]
    %v343 = vld [vmem:[#allocation2 + $0x8c8] sm:$0xff]
    %v344 = vld [vmem:[#allocation2 + $0x8d0] sm:$0xff]
    %v345 = vld [vmem:[#allocation2 + $0x8d8] sm:$0xff]
    %v346 = vld [vmem:[#allocation2 + $0x8e0] sm:$0xff]
    %v347 = vld [vmem:[#allocation2 + $0x8e8] sm:$0xff]
    %v348 = vld [vmem:[#allocation2 + $0x8f0] sm:$0xff]
    %v349 = vld [vmem:[#allocation2 + $0x8f8] sm:$0xff]
    %v350 = vld [vmem:[#allocation2 + $0x900] sm:$0xff]
    %v351 = vld [vmem:[#allocation2 + $0x908] sm:$0xff]
    %v352 = vld [vmem:[#allocation2 + $0x910] sm:$0xff]
    %v353 = vld [vmem:[#allocation2 + $0x918] sm:$0xff]
    %v354 = vld [vmem:[#allocation2 + $0x920] sm:$0xff]
    %v355 = vld [vmem:[#allocation2 + $0x928] sm:$0xff]
    %v356 = vld [vmem:[#allocation2 + $0x930] sm:$0xff]
    %v357 = vld [vmem:[#allocation2 + $0x938] sm:$0xff]
    %v358 = vld [vmem:[#allocation2 + $0x940] sm:$0xff]
    %v359 = vld [vmem:[#allocation2 + $0x948] sm:$0xff]
    %v360 = vld [vmem:[#allocation2 + $0x950] sm:$0xff]
    %v361 = vld [vmem:[#allocation2 + $0x958] sm:$0xff]
    %v362 = vld [vmem:[#allocation2 + $0x960] sm:$0xff]
    %v363 = vld [vmem:[#allocation2 + $0x968] sm:$0xff]
    %v364 = vld [vmem:[#allocation2 + $0x970] sm:$0xff]
    %v365 = vld [vmem:[#allocation2 + $0x978] sm:$0xff]
    %v366 = vld [vmem:[#allocation2 + $0x980] sm:$0xff]
    %v367 = vld [vmem:[#allocation2 + $0x988] sm:$0xff]
    %v368 = vld [vmem:[#allocation2 + $0x990] sm:$0xff]
    %v369 = vld [vmem:[#allocation2 + $0x998] sm:$0xff]
    %v370 = vld [vmem:[#allocation2 + $0x9a0] sm:$0xff]
    %v371 = vld [vmem:[#allocation2 + $0x9a8] sm:$0xff]
    %v372 = vld [vmem:[#allocation2 + $0x9b0] sm:$0xff]
    %v373 = vld [vmem:[#allocation2 + $0x9b8] sm:$0xff]
    %v374 = vld [vmem:[#allocation2 + $0x9c0] sm:$0xff]
    %v375 = vld [vmem:[#allocation2 + $0x9c8] sm:$0xff]
    %v376 = vld [vmem:[#allocation2 + $0x9d0] sm:$0xff]
    %v377 = vld [vmem:[#allocation2 + $0x9d8] sm:$0xff]
    %v378 = vld [vmem:[#allocation2 + $0x9e0] sm:$0xff]
    %v379 = vld [vmem:[#allocation2 + $0x9e8] sm:$0xff]
    %v380 = vld [vmem:[#allocation2 + $0x9f0] sm:$0xff]
    %v381 = vld [vmem:[#allocation2 + $0x9f8] sm:$0xff]
    %v382 = vld [vmem:[#allocation2 + $0xa00] sm:$0xff]
    %v383 = vld [vmem:[#allocation2 + $0xa08] sm:$0xff]
    %v384 = vld [vmem:[#allocation2 + $0xa10] sm:$0xff]
    %v385 = vld [vmem:[#allocation2 + $0xa18] sm:$0xff]
    %v386 = vld [vmem:[#allocation2 + $0xa20] sm:$0xff]
    %v387 = vld [vmem:[#allocation2 + $0xa28] sm:$0xff]
    %v388 = vld [vmem:[#allocation2 + $0xa30] sm:$0xff]
    %v389 = vld [vmem:[#allocation2 + $0xa38] sm:$0xff]
    %v390 = vld [vmem:[#allocation2 + $0xa40] sm:$0xff]
    %v391 = vld [vmem:[#allocation2 + $0xa48] sm:$0xff]
    %v392 = vld [vmem:[#allocation2 + $0xa50] sm:$0xff]
    %v393 = vld [vmem:[#allocation2 + $0xa58] sm:$0xff]
    %v394 = vld [vmem:[#allocation2 + $0xa60] sm:$0xff]
    %v395 = vld [vmem:[#allocation2 + $0xa68] sm:$0xff]
    %v396 = vld [vmem:[#allocation2 + $0xa70] sm:$0xff]
    %v397 = vld [vmem:[#allocation2 + $0xa78] sm:$0xff]
    %v398 = vld [vmem:[#allocation2 + $0xa80] sm:$0xff]
    %v399 = vld [vmem:[#allocation2 + $0xa88] sm:$0xff]
    %v400 = vld [vmem:[#allocation2 + $0xa90] sm:$0xff]
    %v401 = vld [vmem:[#allocation2 + $0xa98] sm:$0xff]
    %v402 = vld [vmem:[#allocation2 + $0xaa0] sm:$0xff]
    %v403 = vld [vmem:[#allocation2 + $0xaa8] sm:$0xff]
    %v404 = vld [vmem:[#allocation2 + $0xab0] sm:$0xff]
    %v405 = vld [vmem:[#allocation2 + $0xab8] sm:$0xff]
    %v406 = vld [vmem:[#allocation2 + $0xac0] sm:$0xff]
    %v407 = vld [vmem:[#allocation2 + $0xac8] sm:$0xff]
    %v408 = vld [vmem:[#allocation2 + $0xad0] sm:$0xff]
    %v409 = vld [vmem:[#allocation2 + $0xad8] sm:$0xff]
    %v410 = vld [vmem:[#allocation2 + $0xae0] sm:$0xff]
    %v411 = vld [vmem:[#allocation2 + $0xae8] sm:$0xff]
    %v412 = vld [vmem:[#allocation2 + $0xaf0] sm:$0xff]
    %v413 = vld [vmem:[#allocation2 + $0xaf8] sm:$0xff]
    %v414 = vld [vmem:[#allocation2 + $0xb00] sm:$0xff]
    %v415 = vld [vmem:[#allocation2 + $0xb08] sm:$0xff]
    %v416 = vld [vmem:[#allocation2 + $0xb10] sm:$0xff]
    %v417 = vld [vmem:[#allocation2 + $0xb18] sm:$0xff]
    %v418 = vld [vmem:[#allocation2 + $0xb20] sm:$0xff]
    %v419 = vld [vmem:[#allocation2 + $0xb28] sm:$0xff]
    %v420 = vld [vmem:[#allocation2 + $0xb30] sm:$0xff]
    %v421 = vld [vmem:[#allocation2 + $0xb38] sm:$0xff]
    %v422 = vld [vmem:[#allocation2 + $0xb40] sm:$0xff]
    %v423 = vld [vmem:[#allocation2 + $0xb48] sm:$0xff]
    %v424 = vld [vmem:[#allocation2 + $0xb50] sm:$0xff]
    %v425 = vld [vmem:[#allocation2 + $0xb58] sm:$0xff]
    %v426 = vld [vmem:[#allocation2 + $0xb60] sm:$0xff]
    %v427 = vld [vmem:[#allocation2 + $0xb68] sm:$0xff]
    %v428 = vld [vmem:[#allocation2 + $0xb70] sm:$0xff]
    %v429 = vld [vmem:[#allocation2 + $0xb78] sm:$0xff]
    %v430 = vld [vmem:[#allocation2 + $0xb80] sm:$0xff]
    %v431 = vld [vmem:[#allocation2 + $0xb88] sm:$0xff]
    %v432 = vld [vmem:[#allocation2 + $0xb90] sm:$0xff]
    %v433 = vld [vmem:[#allocation2 + $0xb98] sm:$0xff]
    %v434 = vld [vmem:[#allocation2 + $0xba0] sm:$0xff]
    %v435 = vld [vmem:[#allocation2 + $0xba8] sm:$0xff]
    %v436 = vld [vmem:[#allocation2 + $0xbb0] sm:$0xff]
    %v437 = vld [vmem:[#allocation2 + $0xbb8] sm:$0xff]
    %v438 = vld [vmem:[#allocation2 + $0xbc0] sm:$0xff]
    %v439 = vld [vmem:[#allocation2 + $0xbc8] sm:$0xff]
    %v440 = vld [vmem:[#allocation2 + $0xbd0] sm:$0xff]
    %v441 = vld [vmem:[#allocation2 + $0xbd8] sm:$0xff]
    %v442 = vld [vmem:[#allocation2 + $0xbe0] sm:$0xff]
    %v443 = vld [vmem:[#allocation2 + $0xbe8] sm:$0xff]
    %v444 = vld [vmem:[#allocation2 + $0xbf0] sm:$0xff]
    %v445 = vld [vmem:[#allocation2 + $0xbf8] sm:$0xff]
    %v446 = vld [vmem:[#allocation2 + $0xc00] sm:$0xff]
    %v447 = vld [vmem:[#allocation2 + $0xc08] sm:$0xff]
    %v448 = vld [vmem:[#allocation2 + $0xc10] sm:$0xff]
    %v449 = vld [vmem:[#allocation2 + $0xc18] sm:$0xff]
    %v450 = vld [vmem:[#allocation2 + $0xc20] sm:$0xff]
    %v451 = vld [vmem:[#allocation2 + $0xc28] sm:$0xff]
    %v452 = vld [vmem:[#allocation2 + $0xc30] sm:$0xff]
    %v453 = vld [vmem:[#allocation2 + $0xc38] sm:$0xff]
    %v454 = vld [vmem:[#allocation2 + $0xc40] sm:$0xff]
    %v455 = vld [vmem:[#allocation2 + $0xc48] sm:$0xff]
    %v456 = vld [vmem:[#allocation2 + $0xc50] sm:$0xff]
    %v457 = vld [vmem:[#allocation2 + $0xc58] sm:$0xff]
    %v458 = vld [vmem:[#allocation2 + $0xc60] sm:$0xff]
    %v459 = vld [vmem:[#allocation2 + $0xc68] sm:$0xff]
    %v460 = vld [vmem:[#allocation2 + $0xc70] sm:$0xff]
    %v461 = vld [vmem:[#allocation2 + $0xc78] sm:$0xff]
    %v462 = vld [vmem:[#allocation2 + $0xc80] sm:$0xff]
    %v463 = vld [vmem:[#allocation2 + $0xc88] sm:$0xff]
    %v464 = vld [vmem:[#allocation2 + $0xc90] sm:$0xff]
    %v465 = vld [vmem:[#allocation2 + $0xc98] sm:$0xff]
    %v466 = vld [vmem:[#allocation2 + $0xca0] sm:$0xff]
    %v467 = vld [vmem:[#allocation2 + $0xca8] sm:$0xff]
    %v468 = vld [vmem:[#allocation2 + $0xcb0] sm:$0xff]
    %v469 = vld [vmem:[#allocation2 + $0xcb8] sm:$0xff]
    %v470 = vld [vmem:[#allocation2 + $0xcc0] sm:$0xff]
    %v471 = vld [vmem:[#allocation2 + $0xcc8] sm:$0xff]
    %v472 = vld [vmem:[#allocation2 + $0xcd0] sm:$0xff]
    %v473 = vld [vmem:[#allocation2 + $0xcd8] sm:$0xff]
    %v474 = vld [vmem:[#allocation2 + $0xce0] sm:$0xff]
    %v475 = vld [vmem:[#allocation2 + $0xce8] sm:$0xff]
    %v476 = vld [vmem:[#allocation2 + $0xcf0] sm:$0xff]
    %v477 = vld [vmem:[#allocation2 + $0xcf8] sm:$0xff]
    %v478 = vld [vmem:[#allocation2 + $0xd00] sm:$0xff]
    %v479 = vld [vmem:[#allocation2 + $0xd08] sm:$0xff]
    %v480 = vld [vmem:[#allocation2 + $0xd10] sm:$0xff]
    %v481 = vld [vmem:[#allocation2 + $0xd18] sm:$0xff]
    %v482 = vld [vmem:[#allocation2 + $0xd20] sm:$0xff]
    %v483 = vld [vmem:[#allocation2 + $0xd28] sm:$0xff]
    %v484 = vld [vmem:[#allocation2 + $0xd30] sm:$0xff]
    %v485 = vld [vmem:[#allocation2 + $0xd38] sm:$0xff]
    %v486 = vld [vmem:[#allocation2 + $0xd40] sm:$0xff]
    %v487 = vld [vmem:[#allocation2 + $0xd48] sm:$0xff]
    %v488 = vld [vmem:[#allocation2 + $0xd50] sm:$0xff]
    %v489 = vld [vmem:[#allocation2 + $0xd58] sm:$0xff]
    %v490 = vld [vmem:[#allocation2 + $0xd60] sm:$0xff]
    %v491 = vld [vmem:[#allocation2 + $0xd68] sm:$0xff]
    %v492 = vld [vmem:[#allocation2 + $0xd70] sm:$0xff]
    %v493 = vld [vmem:[#allocation2 + $0xd78] sm:$0xff]
    %v494 = vld [vmem:[#allocation2 + $0xd80] sm:$0xff]
    %v495 = vld [vmem:[#allocation2 + $0xd88] sm:$0xff]
    %v496 = vld [vmem:[#allocation2 + $0xd90] sm:$0xff]
    %v497 = vld [vmem:[#allocation2 + $0xd98] sm:$0xff]
    %v498 = vld [vmem:[#allocation2 + $0xda0] sm:$0xff]
    %v499 = vld [vmem:[#allocation2 + $0xda8] sm:$0xff]
    %v500 = vld [vmem:[#allocation2 + $0xdb0] sm:$0xff]
    %v501 = vld [vmem:[#allocation2 + $0xdb8] sm:$0xff]
    %v502 = vld [vmem:[#allocation2 + $0xdc0] sm:$0xff]
    %v503 = vld [vmem:[#allocation2 + $0xdc8] sm:$0xff]
    %v504 = vld [vmem:[#allocation2 + $0xdd0] sm:$0xff]
    %v505 = vld [vmem:[#allocation2 + $0xdd8] sm:$0xff]
    %v506 = vld [vmem:[#allocation2 + $0xde0] sm:$0xff]
    %v507 = vld [vmem:[#allocation2 + $0xde8] sm:$0xff]
    %v508 = vld [vmem:[#allocation2 + $0xdf0] sm:$0xff]
    %v509 = vld [vmem:[#allocation2 + $0xdf8] sm:$0xff]
    %v510 = vld [vmem:[#allocation2 + $0xe00] sm:$0xff]
    %v511 = vld [vmem:[#allocation2 + $0xe08] sm:$0xff]
    %v512 = vld [vmem:[#allocation2 + $0xe10] sm:$0xff]
    %v513 = vld [vmem:[#allocation2 + $0xe18] sm:$0xff]
    %v514 = vld [vmem:[#allocation2 + $0xe20] sm:$0xff]
    %v515 = vld [vmem:[#allocation2 + $0xe28] sm:$0xff]
    %v516 = vld [vmem:[#allocation2 + $0xe30] sm:$0xff]
    %v517 = vld [vmem:[#allocation2 + $0xe38] sm:$0xff]
    %v518 = vld [vmem:[#allocation2 + $0xe40] sm:$0xff]
    %v519 = vld [vmem:[#allocation2 + $0xe48] sm:$0xff]
    %v520 = vld [vmem:[#allocation2 + $0xe50] sm:$0xff]
    %v521 = vld [vmem:[#allocation2 + $0xe58] sm:$0xff]
    %v522 = vld [vmem:[#allocation2 + $0xe60] sm:$0xff]
    %v523 = vld [vmem:[#allocation2 + $0xe68] sm:$0xff]
    %v524 = vld [vmem:[#allocation2 + $0xe70] sm:$0xff]
    %v525 = vld [vmem:[#allocation2 + $0xe78] sm:$0xff]
    %v526 = vld [vmem:[#allocation2 + $0xe80] sm:$0xff]
    %v527 = vld [vmem:[#allocation2 + $0xe88] sm:$0xff]
    %v528 = vld [vmem:[#allocation2 + $0xe90] sm:$0xff]
    %v529 = vld [vmem:[#allocation2 + $0xe98] sm:$0xff]
    %v530 = vld [vmem:[#allocation2 + $0xea0] sm:$0xff]
    %v531 = vld [vmem:[#allocation2 + $0xea8] sm:$0xff]
    %v532 = vld [vmem:[#allocation2 + $0xeb0] sm:$0xff]
    %v533 = vld [vmem:[#allocation2 + $0xeb8] sm:$0xff]
    %v534 = vld [vmem:[#allocation2 + $0xec0] sm:$0xff]
    %v535 = vld [vmem:[#allocation2 + $0xec8] sm:$0xff]
    %v536 = vld [vmem:[#allocation2 + $0xed0] sm:$0xff]
    %v537 = vld [vmem:[#allocation2 + $0xed8] sm:$0xff]
    %v538 = vld [vmem:[#allocation2 + $0xee0] sm:$0xff]
    %v539 = vld [vmem:[#allocation2 + $0xee8] sm:$0xff]
    %v540 = vld [vmem:[#allocation2 + $0xef0] sm:$0xff]
    %v541 = vld [vmem:[#allocation2 + $0xef8] sm:$0xff]
    %v542 = vld [vmem:[#allocation2 + $0xf00] sm:$0xff]
    %v543 = vld [vmem:[#allocation2 + $0xf08] sm:$0xff]
    %v544 = vld [vmem:[#allocation2 + $0xf10] sm:$0xff]
    %v545 = vld [vmem:[#allocation2 + $0xf18] sm:$0xff]
    %v546 = vld [vmem:[#allocation2 + $0xf20] sm:$0xff]
    %v547 = vld [vmem:[#allocation2 + $0xf28] sm:$0xff]
    %v548 = vld [vmem:[#allocation2 + $0xf30] sm:$0xff]
    %v549 = vld [vmem:[#allocation2 + $0xf38] sm:$0xff]
    %v550 = vld [vmem:[#allocation2 + $0xf40] sm:$0xff]
    %v551 = vld [vmem:[#allocation2 + $0xf48] sm:$0xff]
    %v552 = vld [vmem:[#allocation2 + $0xf50] sm:$0xff]
    %v553 = vld [vmem:[#allocation2 + $0xf58] sm:$0xff]
    %v554 = vld [vmem:[#allocation2 + $0xf60] sm:$0xff]
    %v555 = vld [vmem:[#allocation2 + $0xf68] sm:$0xff]
    %v556 = vld [vmem:[#allocation2 + $0xf70] sm:$0xff]
    %v557 = vld [vmem:[#allocation2 + $0xf78] sm:$0xff]
    %v558 = vld [vmem:[#allocation2 + $0xf80] sm:$0xff]
    %v559 = vld [vmem:[#allocation2 + $0xf88] sm:$0xff]
    %v560 = vld [vmem:[#allocation2 + $0xf90] sm:$0xff]
    %v561 = vld [vmem:[#allocation2 + $0xf98] sm:$0xff]
    %v562 = vld [vmem:[#allocation2 + $0xfa0] sm:$0xff]
    %v563 = vld [vmem:[#allocation2 + $0xfa8] sm:$0xff]
    %v564 = vld [vmem:[#allocation2 + $0xfb0] sm:$0xff]
    %v565 = vld [vmem:[#allocation2 + $0xfb8] sm:$0xff]
    %v566 = vld [vmem:[#allocation2 + $0xfc0] sm:$0xff]
    %v567 = vld [vmem:[#allocation2 + $0xfc8] sm:$0xff]
    %v568 = vld [vmem:[#allocation2 + $0xfd0] sm:$0xff]
    %v569 = vld [vmem:[#allocation2 + $0xfd8] sm:$0xff]
    %v570 = vld [vmem:[#allocation2 + $0xfe0] sm:$0xff]
    %v571 = vld [vmem:[#allocation2 + $0xfe8] sm:$0xff]
    %v572 = vld [vmem:[#allocation2 + $0xff0] sm:$0xff]
    %v573 = vld [vmem:[#allocation2 + $0xff8] sm:$0xff]
    %v574 = vld [vmem:[#allocation2 + $0x1000] sm:$0xff]
    %v575 = vld [vmem:[#allocation2 + $0x1008] sm:$0xff]
    %v576 = vld [vmem:[#allocation2 + $0x1010] sm:$0xff]
    %v577 = vld [vmem:[#allocation2 + $0x1018] sm:$0xff]
    %v578 = vld [vmem:[#allocation2 + $0x1020] sm:$0xff]
    %v579 = vld [vmem:[#allocation2 + $0x1028] sm:$0xff]
    %v580 = vld [vmem:[#allocation2 + $0x1030] sm:$0xff]
    %v581 = vld [vmem:[#allocation2 + $0x1038] sm:$0xff]
    %v582 = vld [vmem:[#allocation2 + $0x1040] sm:$0xff]
    %v583 = vld [vmem:[#allocation2 + $0x1048] sm:$0xff]
    %v584 = vld [vmem:[#allocation2 + $0x1050] sm:$0xff]
    %v585 = vld [vmem:[#allocation2 + $0x1058] sm:$0xff]
    %v586 = vld [vmem:[#allocation2 + $0x1060] sm:$0xff]
    %v587 = vld [vmem:[#allocation2 + $0x1068] sm:$0xff]
    %v588 = vld [vmem:[#allocation2 + $0x1070] sm:$0xff]
    %v589 = vld [vmem:[#allocation2 + $0x1078] sm:$0xff]
    %v590 = vld [vmem:[#allocation2 + $0x1080] sm:$0xff]
    %v591 = vld [vmem:[#allocation2 + $0x1088] sm:$0xff]
    %v592 = vld [vmem:[#allocation2 + $0x1090] sm:$0xff]
    %v593 = vld [vmem:[#allocation2 + $0x1098] sm:$0xff]
    %v594 = vld [vmem:[#allocation2 + $0x10a0] sm:$0xff]
    %v595 = vld [vmem:[#allocation2 + $0x10a8] sm:$0xff]
    %v596 = vld [vmem:[#allocation2 + $0x10b0] sm:$0xff]
    %v597 = vld [vmem:[#allocation2 + $0x10b8] sm:$0xff]
    %v598 = vld [vmem:[#allocation2 + $0x10c0] sm:$0xff]
    %v599 = vld [vmem:[#allocation2 + $0x10c8] sm:$0xff]
    %v600 = vld [vmem:[#allocation2 + $0x10d0] sm:$0xff]
    %v601 = vld [vmem:[#allocation2 + $0x10d8] sm:$0xff]
    %v602 = vld [vmem:[#allocation2 + $0x10e0] sm:$0xff]
    %v603 = vld [vmem:[#allocation2 + $0x10e8] sm:$0xff]
    %v604 = vld [vmem:[#allocation2 + $0x10f0] sm:$0xff]
    %v605 = vld [vmem:[#allocation2 + $0x10f8] sm:$0xff]
    %v606 = vld [vmem:[#allocation2 + $0x1100] sm:$0xff]
    %v607 = vld [vmem:[#allocation2 + $0x1108] sm:$0xff]
    %v608 = vld [vmem:[#allocation2 + $0x1110] sm:$0xff]
    %v609 = vld [vmem:[#allocation2 + $0x1118] sm:$0xff]
    %v610 = vld [vmem:[#allocation2 + $0x1120] sm:$0xff]
    %v611 = vld [vmem:[#allocation2 + $0x1128] sm:$0xff]
    %v612 = vld [vmem:[#allocation2 + $0x1130] sm:$0xff]
    %v613 = vld [vmem:[#allocation2 + $0x1138] sm:$0xff]
    %v614 = vld [vmem:[#allocation2 + $0x1140] sm:$0xff]
    %v615 = vld [vmem:[#allocation2 + $0x1148] sm:$0xff]
    %v616 = vld [vmem:[#allocation2 + $0x1150] sm:$0xff]
    %v617 = vld [vmem:[#allocation2 + $0x1158] sm:$0xff]
    %v618 = vld [vmem:[#allocation2 + $0x1160] sm:$0xff]
    %v619 = vld [vmem:[#allocation2 + $0x1168] sm:$0xff]
    %v620 = vld [vmem:[#allocation2 + $0x1170] sm:$0xff]
    %v621 = vld [vmem:[#allocation2 + $0x1178] sm:$0xff]
    %v622 = vld [vmem:[#allocation2 + $0x1180] sm:$0xff]
    %v623 = vld [vmem:[#allocation2 + $0x1188] sm:$0xff]
    %v624 = vld [vmem:[#allocation2 + $0x1190] sm:$0xff]
    %v625 = vld [vmem:[#allocation2 + $0x1198] sm:$0xff]
    %v626 = vld [vmem:[#allocation2 + $0x11a0] sm:$0xff]
    %v627 = vld [vmem:[#allocation2 + $0x11a8] sm:$0xff]
    %v628 = vld [vmem:[#allocation2 + $0x11b0] sm:$0xff]
    %v629 = vld [vmem:[#allocation2 + $0x11b8] sm:$0xff]
    %v630 = vld [vmem:[#allocation2 + $0x11c0] sm:$0xff]
    %v631 = vld [vmem:[#allocation2 + $0x11c8] sm:$0xff]
    %v632 = vld [vmem:[#allocation2 + $0x11d0] sm:$0xff]
    %v633 = vld [vmem:[#allocation2 + $0x11d8] sm:$0xff]
    %v634 = vld [vmem:[#allocation2 + $0x11e0] sm:$0xff]
    %v635 = vld [vmem:[#allocation2 + $0x11e8] sm:$0xff]
    %v636 = vld [vmem:[#allocation2 + $0x11f0] sm:$0xff]
    %v637 = vld [vmem:[#allocation2 + $0x11f8] sm:$0xff]
    %v638 = vld [vmem:[#allocation2 + $0x1200] sm:$0xff]
    %v639 = vld [vmem:[#allocation2 + $0x1208] sm:$0xff]
    %v640 = vld [vmem:[#allocation2 + $0x1210] sm:$0xff]
    %v641 = vld [vmem:[#allocation2 + $0x1218] sm:$0xff]
    %v642 = vld [vmem:[#allocation2 + $0x1220] sm:$0xff]
    %v643 = vld [vmem:[#allocation2 + $0x1228] sm:$0xff]
    %v644 = vld [vmem:[#allocation2 + $0x1230] sm:$0xff]
    %v645 = vld [vmem:[#allocation2 + $0x1238] sm:$0xff]
    %v646 = vld [vmem:[#allocation2 + $0x1240] sm:$0xff]
    %v647 = vld [vmem:[#allocation2 + $0x1248] sm:$0xff]
    %v648 = vld [vmem:[#allocation2 + $0x1250] sm:$0xff]
    %v649 = vld [vmem:[#allocation2 + $0x1258] sm:$0xff]
    %v650 = vld [vmem:[#allocation2 + $0x1260] sm:$0xff]
    %v651 = vld [vmem:[#allocation2 + $0x1268] sm:$0xff]
    %v652 = vld [vmem:[#allocation2 + $0x1270] sm:$0xff]
    %v653 = vld [vmem:[#allocation2 + $0x1278] sm:$0xff]
    %v654 = vld [vmem:[#allocation2 + $0x1280] sm:$0xff]
    %v655 = vld [vmem:[#allocation2 + $0x1288] sm:$0xff]
    %v656 = vld [vmem:[#allocation2 + $0x1290] sm:$0xff]
    %v657 = vld [vmem:[#allocation2 + $0x1298] sm:$0xff]
    %v658 = vld [vmem:[#allocation2 + $0x12a0] sm:$0xff]
    %v659 = vld [vmem:[#allocation2 + $0x12a8] sm:$0xff]
    %v660 = vld [vmem:[#allocation2 + $0x12b0] sm:$0xff]
    %v661 = vld [vmem:[#allocation2 + $0x12b8] sm:$0xff]
    %v662 = vld [vmem:[#allocation2 + $0x12c0] sm:$0xff]
    %v663 = vld [vmem:[#allocation2 + $0x12c8] sm:$0xff]
    %v664 = vld [vmem:[#allocation2 + $0x12d0] sm:$0xff]
    %v665 = vld [vmem:[#allocation2 + $0x12d8] sm:$0xff]
    %v666 = vld [vmem:[#allocation2 + $0x12e0] sm:$0xff]
    %v667 = vld [vmem:[#allocation2 + $0x12e8] sm:$0xff]
    %v668 = vld [vmem:[#allocation2 + $0x12f0] sm:$0xff]
    %v669 = vld [vmem:[#allocation2 + $0x12f8] sm:$0xff]
    %v670 = vld [vmem:[#allocation2 + $0x1300] sm:$0xff]
    %v671 = vld [vmem:[#allocation2 + $0x1308] sm:$0xff]
    %v672 = vld [vmem:[#allocation2 + $0x1310] sm:$0xff]
    %v673 = vld [vmem:[#allocation2 + $0x1318] sm:$0xff]
    %v674 = vld [vmem:[#allocation2 + $0x1320] sm:$0xff]
    %v675 = vld [vmem:[#allocation2 + $0x1328] sm:$0xff]
    %v676 = vld [vmem:[#allocation2 + $0x1330] sm:$0xff]
    %v677 = vld [vmem:[#allocation2 + $0x1338] sm:$0xff]
    %v678 = vld [vmem:[#allocation2 + $0x1340] sm:$0xff]
    %v679 = vld [vmem:[#allocation2 + $0x1348] sm:$0xff]
    %v680 = vld [vmem:[#allocation2 + $0x1350] sm:$0xff]
    %v681 = vld [vmem:[#allocation2 + $0x1358] sm:$0xff]
    %v682 = vld [vmem:[#allocation2 + $0x1360] sm:$0xff]
    %v683 = vld [vmem:[#allocation2 + $0x1368] sm:$0xff]
    %v684 = vld [vmem:[#allocation2 + $0x1370] sm:$0xff]
    %v685 = vld [vmem:[#allocation2 + $0x1378] sm:$0xff]
    %v686 = vld [vmem:[#allocation2 + $0x1380] sm:$0xff]
    %v687 = vld [vmem:[#allocation2 + $0x1388] sm:$0xff]
    %v688 = vld [vmem:[#allocation2 + $0x1390] sm:$0xff]
    %v689 = vld [vmem:[#allocation2 + $0x1398] sm:$0xff]
    %v690 = vld [vmem:[#allocation2 + $0x13a0] sm:$0xff]
    %v691 = vld [vmem:[#allocation2 + $0x13a8] sm:$0xff]
    %v692 = vld [vmem:[#allocation2 + $0x13b0] sm:$0xff]
    %v693 = vld [vmem:[#allocation2 + $0x13b8] sm:$0xff]
    %v694 = vld [vmem:[#allocation2 + $0x13c0] sm:$0xff]
    %v695 = vld [vmem:[#allocation2 + $0x13c8] sm:$0xff]
    %v696 = vld [vmem:[#allocation2 + $0x13d0] sm:$0xff]
    %v697 = vld [vmem:[#allocation2 + $0x13d8] sm:$0xff]
    %v698 = vld [vmem:[#allocation2 + $0x13e0] sm:$0xff]
    %v699 = vld [vmem:[#allocation2 + $0x13e8] sm:$0xff]
    %v700 = vld [vmem:[#allocation2 + $0x13f0] sm:$0xff]
    %v701 = vld [vmem:[#allocation2 + $0x13f8] sm:$0xff]
    %v702 = vld [vmem:[#allocation2 + $0x1400] sm:$0xff]
    %v703 = vld [vmem:[#allocation2 + $0x1408] sm:$0xff]
    %v704 = vld [vmem:[#allocation2 + $0x1410] sm:$0xff]
    %v705 = vld [vmem:[#allocation2 + $0x1418] sm:$0xff]
    %v706 = vld [vmem:[#allocation2 + $0x1420] sm:$0xff]
    %v707 = vld [vmem:[#allocation2 + $0x1428] sm:$0xff]
    %v708 = vld [vmem:[#allocation2 + $0x1430] sm:$0xff]
    %v709 = vld [vmem:[#allocation2 + $0x1438] sm:$0xff]
    %v710 = vld [vmem:[#allocation2 + $0x1440] sm:$0xff]
    %v711 = vld [vmem:[#allocation2 + $0x1448] sm:$0xff]
    %v712 = vld [vmem:[#allocation2 + $0x1450] sm:$0xff]
    %v713 = vld [vmem:[#allocation2 + $0x1458] sm:$0xff]
    %v714 = vld [vmem:[#allocation2 + $0x1460] sm:$0xff]
    %v715 = vld [vmem:[#allocation2 + $0x1468] sm:$0xff]
    %v716 = vld [vmem:[#allocation2 + $0x1470] sm:$0xff]
    %v717 = vld [vmem:[#allocation2 + $0x1478] sm:$0xff]
    %v718 = vld [vmem:[#allocation2 + $0x1480] sm:$0xff]
    %v719 = vld [vmem:[#allocation2 + $0x1488] sm:$0xff]
    %v720 = vld [vmem:[#allocation2 + $0x1490] sm:$0xff]
    %v721 = vld [vmem:[#allocation2 + $0x1498] sm:$0xff]
    %v722 = vld [vmem:[#allocation2 + $0x14a0] sm:$0xff]
    %v723 = vld [vmem:[#allocation2 + $0x14a8] sm:$0xff]
    %v724 = vld [vmem:[#allocation2 + $0x14b0] sm:$0xff]
    %v725 = vld [vmem:[#allocation2 + $0x14b8] sm:$0xff]
    %v726 = vld [vmem:[#allocation2 + $0x14c0] sm:$0xff]
    %v727 = vld [vmem:[#allocation2 + $0x14c8] sm:$0xff]
    %v728 = vld [vmem:[#allocation2 + $0x14d0] sm:$0xff]
    %v729 = vld [vmem:[#allocation2 + $0x14d8] sm:$0xff]
    %v730 = vld [vmem:[#allocation2 + $0x14e0] sm:$0xff]
    %v731 = vld [vmem:[#allocation2 + $0x14e8] sm:$0xff]
    %v732 = vld [vmem:[#allocation2 + $0x14f0] sm:$0xff]
    %v733 = vld [vmem:[#allocation2 + $0x14f8] sm:$0xff]
    %v734 = vld [vmem:[#allocation2 + $0x1500] sm:$0xff]
    %v735 = vld [vmem:[#allocation2 + $0x1508] sm:$0xff]
    %v736 = vld [vmem:[#allocation2 + $0x1510] sm:$0xff]
    %v737 = vld [vmem:[#allocation2 + $0x1518] sm:$0xff]
    %v738 = vld [vmem:[#allocation2 + $0x1520] sm:$0xff]
    %v739 = vld [vmem:[#allocation2 + $0x1528] sm:$0xff]
    %v740 = vld [vmem:[#allocation2 + $0x1530] sm:$0xff]
    %v741 = vld [vmem:[#allocation2 + $0x1538] sm:$0xff]
    %v742 = vld [vmem:[#allocation2 + $0x1540] sm:$0xff]
    %v743 = vld [vmem:[#allocation2 + $0x1548] sm:$0xff]
    %v744 = vld [vmem:[#allocation2 + $0x1550] sm:$0xff]
    %v745 = vld [vmem:[#allocation2 + $0x1558] sm:$0xff]
    %v746 = vld [vmem:[#allocation2 + $0x1560] sm:$0xff]
    %v747 = vld [vmem:[#allocation2 + $0x1568] sm:$0xff]
    %v748 = vld [vmem:[#allocation2 + $0x1570] sm:$0xff]
    %v749 = vld [vmem:[#allocation2 + $0x1578] sm:$0xff]
    %v750 = vld [vmem:[#allocation2 + $0x1580] sm:$0xff]
    %v751 = vld [vmem:[#allocation2 + $0x1588] sm:$0xff]
    %v752 = vld [vmem:[#allocation2 + $0x1590] sm:$0xff]
    %v753 = vld [vmem:[#allocation2 + $0x1598] sm:$0xff]
    %v754 = vld [vmem:[#allocation2 + $0x15a0] sm:$0xff]
    %v755 = vld [vmem:[#allocation2 + $0x15a8] sm:$0xff]
    %v756 = vld [vmem:[#allocation2 + $0x15b0] sm:$0xff]
    %v757 = vld [vmem:[#allocation2 + $0x15b8] sm:$0xff]
    %v758 = vld [vmem:[#allocation2 + $0x15c0] sm:$0xff]
    %v759 = vld [vmem:[#allocation2 + $0x15c8] sm:$0xff]
    %v760 = vld [vmem:[#allocation2 + $0x15d0] sm:$0xff]
    %v761 = vld [vmem:[#allocation2 + $0x15d8] sm:$0xff]
    %v762 = vld [vmem:[#allocation2 + $0x15e0] sm:$0xff]
    %v763 = vld [vmem:[#allocation2 + $0x15e8] sm:$0xff]
    %v764 = vld [vmem:[#allocation2 + $0x15f0] sm:$0xff]
    %v765 = vld [vmem:[#allocation2 + $0x15f8] sm:$0xff]
    %v766 = vld [vmem:[#allocation2 + $0x1600] sm:$0xff]
    %v767 = vld [vmem:[#allocation2 + $0x1608] sm:$0xff]
    %v768 = vld [vmem:[#allocation2 + $0x1610] sm:$0xff]
    %v769 = vld [vmem:[#allocation2 + $0x1618] sm:$0xff]
    %v770 = vld [vmem:[#allocation2 + $0x1620] sm:$0xff]
    %v771 = vld [vmem:[#allocation2 + $0x1628] sm:$0xff]
    %v772 = vld [vmem:[#allocation2 + $0x1630] sm:$0xff]
    %v773 = vld [vmem:[#allocation2 + $0x1638] sm:$0xff]
    %v774 = vld [vmem:[#allocation2 + $0x1640] sm:$0xff]
    %v775 = vld [vmem:[#allocation2 + $0x1648] sm:$0xff]
    %v776 = vld [vmem:[#allocation2 + $0x1650] sm:$0xff]
    %v777 = vld [vmem:[#allocation2 + $0x1658] sm:$0xff]
    %v778 = vld [vmem:[#allocation2 + $0x1660] sm:$0xff]
    %v779 = vld [vmem:[#allocation2 + $0x1668] sm:$0xff]
    %v780 = vld [vmem:[#allocation2 + $0x1670] sm:$0xff]
    %v781 = vld [vmem:[#allocation2 + $0x1678] sm:$0xff]
    %v782 = vld [vmem:[#allocation2 + $0x1680] sm:$0xff]
    %v783 = vld [vmem:[#allocation2 + $0x1688] sm:$0xff]
    %v784 = vld [vmem:[#allocation2 + $0x1690] sm:$0xff]
    %v785 = vld [vmem:[#allocation2 + $0x1698] sm:$0xff]
    %v786 = vld [vmem:[#allocation2 + $0x16a0] sm:$0xff]
    %v787 = vld [vmem:[#allocation2 + $0x16a8] sm:$0xff]
    %v788 = vld [vmem:[#allocation2 + $0x16b0] sm:$0xff]
    %v789 = vld [vmem:[#allocation2 + $0x16b8] sm:$0xff]
    %v790 = vld [vmem:[#allocation2 + $0x16c0] sm:$0xff]
    %v791 = vld [vmem:[#allocation2 + $0x16c8] sm:$0xff]
    %v792 = vld [vmem:[#allocation2 + $0x16d0] sm:$0xff]
    %v793 = vld [vmem:[#allocation2 + $0x16d8] sm:$0xff]
    %v794 = vld [vmem:[#allocation2 + $0x16e0] sm:$0xff]
    %v795 = vld [vmem:[#allocation2 + $0x16e8] sm:$0xff]
    %v796 = vld [vmem:[#allocation2 + $0x16f0] sm:$0xff]
    %v797 = vld [vmem:[#allocation2 + $0x16f8] sm:$0xff]
    %v798 = vld [vmem:[#allocation2 + $0x1700] sm:$0xff]
    %v799 = vld [vmem:[#allocation2 + $0x1708] sm:$0xff]
    %v800 = vld [vmem:[#allocation2 + $0x1710] sm:$0xff]
    %v801 = vld [vmem:[#allocation2 + $0x1718] sm:$0xff]
    %v802 = vld [vmem:[#allocation2 + $0x1720] sm:$0xff]
    %v803 = vld [vmem:[#allocation2 + $0x1728] sm:$0xff]
    %v804 = vld [vmem:[#allocation2 + $0x1730] sm:$0xff]
    %v805 = vld [vmem:[#allocation2 + $0x1738] sm:$0xff]
    %v806 = vld [vmem:[#allocation2 + $0x1740] sm:$0xff]
    %v807 = vld [vmem:[#allocation2 + $0x1748] sm:$0xff]
    %v808 = vld [vmem:[#allocation2 + $0x1750] sm:$0xff]
    %v809 = vld [vmem:[#allocation2 + $0x1758] sm:$0xff]
    %v810 = vld [vmem:[#allocation2 + $0x1760] sm:$0xff]
    %v811 = vld [vmem:[#allocation2 + $0x1768] sm:$0xff]
    %v812 = vld [vmem:[#allocation2 + $0x1770] sm:$0xff]
    %v813 = vld [vmem:[#allocation2 + $0x1778] sm:$0xff]
    %v814 = vld [vmem:[#allocation2 + $0x1780] sm:$0xff]
    %v815 = vld [vmem:[#allocation2 + $0x1788] sm:$0xff]
    %v816 = vld [vmem:[#allocation2 + $0x1790] sm:$0xff]
    %v817 = vld [vmem:[#allocation2 + $0x1798] sm:$0xff]
    %v818 = vld [vmem:[#allocation2 + $0x17a0] sm:$0xff]
    %v819 = vld [vmem:[#allocation2 + $0x17a8] sm:$0xff]
    %v820 = vld [vmem:[#allocation2 + $0x17b0] sm:$0xff]
    %v821 = vld [vmem:[#allocation2 + $0x17b8] sm:$0xff]
    %v822 = vld [vmem:[#allocation2 + $0x17c0] sm:$0xff]
    %v823 = vld [vmem:[#allocation2 + $0x17c8] sm:$0xff]
    %v824 = vld [vmem:[#allocation2 + $0x17d0] sm:$0xff]
    %v825 = vld [vmem:[#allocation2 + $0x17d8] sm:$0xff]
    %v826 = vld [vmem:[#allocation2 + $0x17e0] sm:$0xff]
    %v827 = vld [vmem:[#allocation2 + $0x17e8] sm:$0xff]
    %v828 = vld [vmem:[#allocation2 + $0x17f0] sm:$0xff]
    %v829 = vld [vmem:[#allocation2 + $0x17f8] sm:$0xff]
    %v830 = vld [vmem:[#allocation5] sm:$0xff]
    %v831 = vld [vmem:[#allocation5 + $0x8] sm:$0xff]
    %v832 = vld [vmem:[#allocation5 + $0x10] sm:$0xff]
    %v833 = vld [vmem:[#allocation5 + $0x18] sm:$0xff]
    %v834 = vld [vmem:[#allocation5 + $0x20] sm:$0xff]
    %v835 = vld [vmem:[#allocation5 + $0x28] sm:$0xff]
    %v836 = vld [vmem:[#allocation5 + $0x30] sm:$0xff]
    %v837 = vld [vmem:[#allocation5 + $0x38] sm:$0xff]
    %v838 = vld [vmem:[#allocation5 + $0x40] sm:$0xff]
    %v839 = vld [vmem:[#allocation5 + $0x48] sm:$0xff]
    %v840 = vld [vmem:[#allocation5 + $0x50] sm:$0xff]
    %v841 = vld [vmem:[#allocation5 + $0x58] sm:$0xff]
    %v842 = vld [vmem:[#allocation5 + $0x60] sm:$0xff]
    %v843 = vld [vmem:[#allocation5 + $0x68] sm:$0xff]
    %v844 = vld [vmem:[#allocation5 + $0x70] sm:$0xff]
    %v845 = vld [vmem:[#allocation5 + $0x78] sm:$0xff]
    %v846 = vld [vmem:[#allocation5 + $0x80] sm:$0xff]
    %v847 = vld [vmem:[#allocation5 + $0x88] sm:$0xff]
    %v848 = vld [vmem:[#allocation5 + $0x90] sm:$0xff]
    %v849 = vld [vmem:[#allocation5 + $0x98] sm:$0xff]
    %v850 = vld [vmem:[#allocation5 + $0xa0] sm:$0xff]
    %v851 = vld [vmem:[#allocation5 + $0xa8] sm:$0xff]
    %v852 = vld [vmem:[#allocation5 + $0xb0] sm:$0xff]
    %v853 = vld [vmem:[#allocation5 + $0xb8] sm:$0xff]
    %v854 = vld [vmem:[#allocation5 + $0xc0] sm:$0xff]
    %v855 = vld [vmem:[#allocation5 + $0xc8] sm:$0xff]
    %v856 = vld [vmem:[#allocation5 + $0xd0] sm:$0xff]
    %v857 = vld [vmem:[#allocation5 + $0xd8] sm:$0xff]
    %v858 = vld [vmem:[#allocation5 + $0xe0] sm:$0xff]
    %v859 = vld [vmem:[#allocation5 + $0xe8] sm:$0xff]
    %v860 = vld [vmem:[#allocation5 + $0xf0] sm:$0xff]
    %v861 = vld [vmem:[#allocation5 + $0xf8] sm:$0xff]
    %v862 = vld [vmem:[#allocation5 + $0x100] sm:$0xff]
    %v863 = vld [vmem:[#allocation5 + $0x108] sm:$0xff]
    %v864 = vld [vmem:[#allocation5 + $0x110] sm:$0xff]
    %v865 = vld [vmem:[#allocation5 + $0x118] sm:$0xff]
    %v866 = vld [vmem:[#allocation5 + $0x120] sm:$0xff]
    %v867 = vld [vmem:[#allocation5 + $0x128] sm:$0xff]
    %v868 = vld [vmem:[#allocation5 + $0x130] sm:$0xff]
    %v869 = vld [vmem:[#allocation5 + $0x138] sm:$0xff]
    %v870 = vld [vmem:[#allocation5 + $0x140] sm:$0xff]
    %v871 = vld [vmem:[#allocation5 + $0x148] sm:$0xff]
    %v872 = vld [vmem:[#allocation5 + $0x150] sm:$0xff]
    %v873 = vld [vmem:[#allocation5 + $0x158] sm:$0xff]
    %v874 = vld [vmem:[#allocation5 + $0x160] sm:$0xff]
    %v875 = vld [vmem:[#allocation5 + $0x168] sm:$0xff]
    %v876 = vld [vmem:[#allocation5 + $0x170] sm:$0xff]
    %v877 = vld [vmem:[#allocation5 + $0x178] sm:$0xff]
    %v878 = vld [vmem:[#allocation5 + $0x180] sm:$0xff]
    %v879 = vld [vmem:[#allocation5 + $0x188] sm:$0xff]
    %v880 = vld [vmem:[#allocation5 + $0x190] sm:$0xff]
    %v881 = vld [vmem:[#allocation5 + $0x198] sm:$0xff]
    %v882 = vld [vmem:[#allocation5 + $0x1a0] sm:$0xff]
    %v883 = vld [vmem:[#allocation5 + $0x1a8] sm:$0xff]
    %v884 = vld [vmem:[#allocation5 + $0x1b0] sm:$0xff]
    %v885 = vld [vmem:[#allocation5 + $0x1b8] sm:$0xff]
    %v886 = vld [vmem:[#allocation5 + $0x1c0] sm:$0xff]
    %v887 = vld [vmem:[#allocation5 + $0x1c8] sm:$0xff]
    %v888 = vld [vmem:[#allocation5 + $0x1d0] sm:$0xff]
    %v889 = vld [vmem:[#allocation5 + $0x1d8] sm:$0xff]
    %v890 = vld [vmem:[#allocation5 + $0x1e0] sm:$0xff]
    %v891 = vld [vmem:[#allocation5 + $0x1e8] sm:$0xff]
    %v892 = vld [vmem:[#allocation5 + $0x1f0] sm:$0xff]
    %v893 = vld [vmem:[#allocation5 + $0x1f8] sm:$0xff]
    %v894 = vld [vmem:[#allocation5 + $0x200] sm:$0xff]
    %v895 = vld [vmem:[#allocation5 + $0x208] sm:$0xff]
    %v896 = vld [vmem:[#allocation5 + $0x210] sm:$0xff]
    %v897 = vld [vmem:[#allocation5 + $0x218] sm:$0xff]
    %v898 = vld [vmem:[#allocation5 + $0x220] sm:$0xff]
    %v899 = vld [vmem:[#allocation5 + $0x228] sm:$0xff]
    %v900 = vld [vmem:[#allocation5 + $0x230] sm:$0xff]
    %v901 = vld [vmem:[#allocation5 + $0x238] sm:$0xff]
    %v902 = vld [vmem:[#allocation5 + $0x240] sm:$0xff]
    %v903 = vld [vmem:[#allocation5 + $0x248] sm:$0xff]
    %v904 = vld [vmem:[#allocation5 + $0x250] sm:$0xff]
    %v905 = vld [vmem:[#allocation5 + $0x258] sm:$0xff]
    %v906 = vld [vmem:[#allocation5 + $0x260] sm:$0xff]
    %v907 = vld [vmem:[#allocation5 + $0x268] sm:$0xff]
    %v908 = vld [vmem:[#allocation5 + $0x270] sm:$0xff]
    %v909 = vld [vmem:[#allocation5 + $0x278] sm:$0xff]
    %v910 = vld [vmem:[#allocation5 + $0x280] sm:$0xff]
    %v911 = vld [vmem:[#allocation5 + $0x288] sm:$0xff]
    %v912 = vld [vmem:[#allocation5 + $0x290] sm:$0xff]
    %v913 = vld [vmem:[#allocation5 + $0x298] sm:$0xff]
    %v914 = vld [vmem:[#allocation5 + $0x2a0] sm:$0xff]
    %v915 = vld [vmem:[#allocation5 + $0x2a8] sm:$0xff]
    %v916 = vld [vmem:[#allocation5 + $0x2b0] sm:$0xff]
    %v917 = vld [vmem:[#allocation5 + $0x2b8] sm:$0xff]
    %v918 = vld [vmem:[#allocation5 + $0x2c0] sm:$0xff]
    %v919 = vld [vmem:[#allocation5 + $0x2c8] sm:$0xff]
    %v920 = vld [vmem:[#allocation5 + $0x2d0] sm:$0xff]
    %v921 = vld [vmem:[#allocation5 + $0x2d8] sm:$0xff]
    %v922 = vld [vmem:[#allocation5 + $0x2e0] sm:$0xff]
    %v923 = vld [vmem:[#allocation5 + $0x2e8] sm:$0xff]
    %v924 = vld [vmem:[#allocation5 + $0x2f0] sm:$0xff]
    %v925 = vld [vmem:[#allocation5 + $0x2f8] sm:$0xff]
    %v926 = vld [vmem:[#allocation5 + $0x300] sm:$0xff]
    %v927 = vld [vmem:[#allocation5 + $0x308] sm:$0xff]
    %v928 = vld [vmem:[#allocation5 + $0x310] sm:$0xff]
    %v929 = vld [vmem:[#allocation5 + $0x318] sm:$0xff]
    %v930 = vld [vmem:[#allocation5 + $0x320] sm:$0xff]
    %v931 = vld [vmem:[#allocation5 + $0x328] sm:$0xff]
    %v932 = vld [vmem:[#allocation5 + $0x330] sm:$0xff]
    %v933 = vld [vmem:[#allocation5 + $0x338] sm:$0xff]
    %v934 = vld [vmem:[#allocation5 + $0x340] sm:$0xff]
    %v935 = vld [vmem:[#allocation5 + $0x348] sm:$0xff]
    %v936 = vld [vmem:[#allocation5 + $0x350] sm:$0xff]
    %v937 = vld [vmem:[#allocation5 + $0x358] sm:$0xff]
    %v938 = vld [vmem:[#allocation5 + $0x360] sm:$0xff]
    %v939 = vld [vmem:[#allocation5 + $0x368] sm:$0xff]
    %v940 = vld [vmem:[#allocation5 + $0x370] sm:$0xff]
    %v941 = vld [vmem:[#allocation5 + $0x378] sm:$0xff]
    %v942 = vld [vmem:[#allocation5 + $0x380] sm:$0xff]
    %v943 = vld [vmem:[#allocation5 + $0x388] sm:$0xff]
    %v944 = vld [vmem:[#allocation5 + $0x390] sm:$0xff]
    %v945 = vld [vmem:[#allocation5 + $0x398] sm:$0xff]
    %v946 = vld [vmem:[#allocation5 + $0x3a0] sm:$0xff]
    %v947 = vld [vmem:[#allocation5 + $0x3a8] sm:$0xff]
    %v948 = vld [vmem:[#allocation5 + $0x3b0] sm:$0xff]
    %v949 = vld [vmem:[#allocation5 + $0x3b8] sm:$0xff]
    %v950 = vld [vmem:[#allocation5 + $0x3c0] sm:$0xff]
    %v951 = vld [vmem:[#allocation5 + $0x3c8] sm:$0xff]
    %v952 = vld [vmem:[#allocation5 + $0x3d0] sm:$0xff]
    %v953 = vld [vmem:[#allocation5 + $0x3d8] sm:$0xff]
    %v954 = vld [vmem:[#allocation5 + $0x3e0] sm:$0xff]
    %v955 = vld [vmem:[#allocation5 + $0x3e8] sm:$0xff]
    %v956 = vld [vmem:[#allocation5 + $0x3f0] sm:$0xff]
    %v957 = vld [vmem:[#allocation5 + $0x3f8] sm:$0xff]
    %v958 = vld [vmem:[#allocation5 + $0x400] sm:$0xff]
    %v959 = vld [vmem:[#allocation5 + $0x408] sm:$0xff]
    %v960 = vld [vmem:[#allocation5 + $0x410] sm:$0xff]
    %v961 = vld [vmem:[#allocation5 + $0x418] sm:$0xff]
    %v962 = vld [vmem:[#allocation5 + $0x420] sm:$0xff]
    %v963 = vld [vmem:[#allocation5 + $0x428] sm:$0xff]
    %v964 = vld [vmem:[#allocation5 + $0x430] sm:$0xff]
    %v965 = vld [vmem:[#allocation5 + $0x438] sm:$0xff]
    %v966 = vld [vmem:[#allocation5 + $0x440] sm:$0xff]
    %v967 = vld [vmem:[#allocation5 + $0x448] sm:$0xff]
    %v968 = vld [vmem:[#allocation5 + $0x450] sm:$0xff]
    %v969 = vld [vmem:[#allocation5 + $0x458] sm:$0xff]
    %v970 = vld [vmem:[#allocation5 + $0x460] sm:$0xff]
    %v971 = vld [vmem:[#allocation5 + $0x468] sm:$0xff]
    %v972 = vld [vmem:[#allocation5 + $0x470] sm:$0xff]
    %v973 = vld [vmem:[#allocation5 + $0x478] sm:$0xff]
    %v974 = vld [vmem:[#allocation5 + $0x480] sm:$0xff]
    %v975 = vld [vmem:[#allocation5 + $0x488] sm:$0xff]
    %v976 = vld [vmem:[#allocation5 + $0x490] sm:$0xff]
    %v977 = vld [vmem:[#allocation5 + $0x498] sm:$0xff]
    %v978 = vld [vmem:[#allocation5 + $0x4a0] sm:$0xff]
    %v979 = vld [vmem:[#allocation5 + $0x4a8] sm:$0xff]
    %v980 = vld [vmem:[#allocation5 + $0x4b0] sm:$0xff]
    %v981 = vld [vmem:[#allocation5 + $0x4b8] sm:$0xff]
    %v982 = vld [vmem:[#allocation5 + $0x4c0] sm:$0xff]
    %v983 = vld [vmem:[#allocation5 + $0x4c8] sm:$0xff]
    %v984 = vld [vmem:[#allocation5 + $0x4d0] sm:$0xff]
    %v985 = vld [vmem:[#allocation5 + $0x4d8] sm:$0xff]
    %v986 = vld [vmem:[#allocation5 + $0x4e0] sm:$0xff]
    %v987 = vld [vmem:[#allocation5 + $0x4e8] sm:$0xff]
    %v988 = vld [vmem:[#allocation5 + $0x4f0] sm:$0xff]
    %v989 = vld [vmem:[#allocation5 + $0x4f8] sm:$0xff]
    %v990 = vld [vmem:[#allocation5 + $0x500] sm:$0xff]
    %v991 = vld [vmem:[#allocation5 + $0x508] sm:$0xff]
    %v992 = vld [vmem:[#allocation5 + $0x510] sm:$0xff]
    %v993 = vld [vmem:[#allocation5 + $0x518] sm:$0xff]
    %v994 = vld [vmem:[#allocation5 + $0x520] sm:$0xff]
    %v995 = vld [vmem:[#allocation5 + $0x528] sm:$0xff]
    %v996 = vld [vmem:[#allocation5 + $0x530] sm:$0xff]
    %v997 = vld [vmem:[#allocation5 + $0x538] sm:$0xff]
    %v998 = vld [vmem:[#allocation5 + $0x540] sm:$0xff]
    %v999 = vld [vmem:[#allocation5 + $0x548] sm:$0xff]
    %v1000 = vld [vmem:[#allocation5 + $0x550] sm:$0xff]
    %v1001 = vld [vmem:[#allocation5 + $0x558] sm:$0xff]
    %v1002 = vld [vmem:[#allocation5 + $0x560] sm:$0xff]
    %v1003 = vld [vmem:[#allocation5 + $0x568] sm:$0xff]
    %v1004 = vld [vmem:[#allocation5 + $0x570] sm:$0xff]
    %v1005 = vld [vmem:[#allocation5 + $0x578] sm:$0xff]
    %v1006 = vld [vmem:[#allocation5 + $0x580] sm:$0xff]
    %v1007 = vld [vmem:[#allocation5 + $0x588] sm:$0xff]
    %v1008 = vld [vmem:[#allocation5 + $0x590] sm:$0xff]
    %v1009 = vld [vmem:[#allocation5 + $0x598] sm:$0xff]
    %v1010 = vld [vmem:[#allocation5 + $0x5a0] sm:$0xff]
    %v1011 = vld [vmem:[#allocation5 + $0x5a8] sm:$0xff]
    %v1012 = vld [vmem:[#allocation5 + $0x5b0] sm:$0xff]
    %v1013 = vld [vmem:[#allocation5 + $0x5b8] sm:$0xff]
    %v1014 = vld [vmem:[#allocation5 + $0x5c0] sm:$0xff]
    %v1015 = vld [vmem:[#allocation5 + $0x5c8] sm:$0xff]
    %v1016 = vld [vmem:[#allocation5 + $0x5d0] sm:$0xff]
    %v1017 = vld [vmem:[#allocation5 + $0x5d8] sm:$0xff]
    %v1018 = vld [vmem:[#allocation5 + $0x5e0] sm:$0xff]
    %v1019 = vld [vmem:[#allocation5 + $0x5e8] sm:$0xff]
    %v1020 = vld [vmem:[#allocation5 + $0x5f0] sm:$0xff]
    %v1021 = vld [vmem:[#allocation5 + $0x5f8] sm:$0xff]
    %v1022 = vld [vmem:[#allocation5 + $0x600] sm:$0xff]
    %v1023 = vld [vmem:[#allocation5 + $0x608] sm:$0xff]
    %v1024 = vld [vmem:[#allocation5 + $0x610] sm:$0xff]
    %v1025 = vld [vmem:[#allocation5 + $0x618] sm:$0xff]
    %v1026 = vld [vmem:[#allocation5 + $0x620] sm:$0xff]
    %v1027 = vld [vmem:[#allocation5 + $0x628] sm:$0xff]
    %v1028 = vld [vmem:[#allocation5 + $0x630] sm:$0xff]
    %v1029 = vld [vmem:[#allocation5 + $0x638] sm:$0xff]
    %v1030 = vld [vmem:[#allocation5 + $0x640] sm:$0xff]
    %v1031 = vld [vmem:[#allocation5 + $0x648] sm:$0xff]
    %v1032 = vld [vmem:[#allocation5 + $0x650] sm:$0xff]
    %v1033 = vld [vmem:[#allocation5 + $0x658] sm:$0xff]
    %v1034 = vld [vmem:[#allocation5 + $0x660] sm:$0xff]
    %v1035 = vld [vmem:[#allocation5 + $0x668] sm:$0xff]
    %v1036 = vld [vmem:[#allocation5 + $0x670] sm:$0xff]
    %v1037 = vld [vmem:[#allocation5 + $0x678] sm:$0xff]
    %v1038 = vld [vmem:[#allocation5 + $0x680] sm:$0xff]
    %v1039 = vld [vmem:[#allocation5 + $0x688] sm:$0xff]
    %v1040 = vld [vmem:[#allocation5 + $0x690] sm:$0xff]
    %v1041 = vld [vmem:[#allocation5 + $0x698] sm:$0xff]
    %v1042 = vld [vmem:[#allocation5 + $0x6a0] sm:$0xff]
    %v1043 = vld [vmem:[#allocation5 + $0x6a8] sm:$0xff]
    %v1044 = vld [vmem:[#allocation5 + $0x6b0] sm:$0xff]
    %v1045 = vld [vmem:[#allocation5 + $0x6b8] sm:$0xff]
    %v1046 = vld [vmem:[#allocation5 + $0x6c0] sm:$0xff]
    %v1047 = vld [vmem:[#allocation5 + $0x6c8] sm:$0xff]
    %v1048 = vld [vmem:[#allocation5 + $0x6d0] sm:$0xff]
    %v1049 = vld [vmem:[#allocation5 + $0x6d8] sm:$0xff]
    %v1050 = vld [vmem:[#allocation5 + $0x6e0] sm:$0xff]
    %v1051 = vld [vmem:[#allocation5 + $0x6e8] sm:$0xff]
    %v1052 = vld [vmem:[#allocation5 + $0x6f0] sm:$0xff]
    %v1053 = vld [vmem:[#allocation5 + $0x6f8] sm:$0xff]
    %v1054 = vld [vmem:[#allocation5 + $0x700] sm:$0xff]
    %v1055 = vld [vmem:[#allocation5 + $0x708] sm:$0xff]
    %v1056 = vld [vmem:[#allocation5 + $0x710] sm:$0xff]
    %v1057 = vld [vmem:[#allocation5 + $0x718] sm:$0xff]
    %v1058 = vld [vmem:[#allocation5 + $0x720] sm:$0xff]
    %v1059 = vld [vmem:[#allocation5 + $0x728] sm:$0xff]
    %v1060 = vld [vmem:[#allocation5 + $0x730] sm:$0xff]
    %v1061 = vld [vmem:[#allocation5 + $0x738] sm:$0xff]
    %v1062 = vld [vmem:[#allocation5 + $0x740] sm:$0xff]
    %v1063 = vld [vmem:[#allocation5 + $0x748] sm:$0xff]
    %v1064 = vld [vmem:[#allocation5 + $0x750] sm:$0xff]
    %v1065 = vld [vmem:[#allocation5 + $0x758] sm:$0xff]
    %v1066 = vld [vmem:[#allocation5 + $0x760] sm:$0xff]
    %v1067 = vld [vmem:[#allocation5 + $0x768] sm:$0xff]
    %v1068 = vld [vmem:[#allocation5 + $0x770] sm:$0xff]
    %v1069 = vld [vmem:[#allocation5 + $0x778] sm:$0xff]
    %v1070 = vld [vmem:[#allocation5 + $0x780] sm:$0xff]
    %v1071 = vld [vmem:[#allocation5 + $0x788] sm:$0xff]
    %v1072 = vld [vmem:[#allocation5 + $0x790] sm:$0xff]
    %v1073 = vld [vmem:[#allocation5 + $0x798] sm:$0xff]
    %v1074 = vld [vmem:[#allocation5 + $0x7a0] sm:$0xff]
    %v1075 = vld [vmem:[#allocation5 + $0x7a8] sm:$0xff]
    %v1076 = vld [vmem:[#allocation5 + $0x7b0] sm:$0xff]
    %v1077 = vld [vmem:[#allocation5 + $0x7b8] sm:$0xff]
    %v1078 = vld [vmem:[#allocation5 + $0x7c0] sm:$0xff]
    %v1079 = vld [vmem:[#allocation5 + $0x7c8] sm:$0xff]
    %v1080 = vld [vmem:[#allocation5 + $0x7d0] sm:$0xff]
    %v1081 = vld [vmem:[#allocation5 + $0x7d8] sm:$0xff]
    %v1082 = vld [vmem:[#allocation5 + $0x7e0] sm:$0xff]
    %v1083 = vld [vmem:[#allocation5 + $0x7e8] sm:$0xff]
    %v1084 = vld [vmem:[#allocation5 + $0x7f0] sm:$0xff]
    %v1085 = vld [vmem:[#allocation5 + $0x7f8] sm:$0xff]
    %v1086 = vld [vmem:[#allocation5 + $0x800] sm:$0xff]
    %v1087 = vld [vmem:[#allocation5 + $0x808] sm:$0xff]
    %v1088 = vld [vmem:[#allocation5 + $0x810] sm:$0xff]
    %v1089 = vld [vmem:[#allocation5 + $0x818] sm:$0xff]
    %v1090 = vld [vmem:[#allocation5 + $0x820] sm:$0xff]
    %v1091 = vld [vmem:[#allocation5 + $0x828] sm:$0xff]
    %v1092 = vld [vmem:[#allocation5 + $0x830] sm:$0xff]
    %v1093 = vld [vmem:[#allocation5 + $0x838] sm:$0xff]
    %v1094 = vld [vmem:[#allocation5 + $0x840] sm:$0xff]
    %v1095 = vld [vmem:[#allocation5 + $0x848] sm:$0xff]
    %v1096 = vld [vmem:[#allocation5 + $0x850] sm:$0xff]
    %v1097 = vld [vmem:[#allocation5 + $0x858] sm:$0xff]
    %v1098 = vld [vmem:[#allocation5 + $0x860] sm:$0xff]
    %v1099 = vld [vmem:[#allocation5 + $0x868] sm:$0xff]
    %v1100 = vld [vmem:[#allocation5 + $0x870] sm:$0xff]
    %v1101 = vld [vmem:[#allocation5 + $0x878] sm:$0xff]
    %v1102 = vld [vmem:[#allocation5 + $0x880] sm:$0xff]
    %v1103 = vld [vmem:[#allocation5 + $0x888] sm:$0xff]
    %v1104 = vld [vmem:[#allocation5 + $0x890] sm:$0xff]
    %v1105 = vld [vmem:[#allocation5 + $0x898] sm:$0xff]
    %v1106 = vld [vmem:[#allocation5 + $0x8a0] sm:$0xff]
    %v1107 = vld [vmem:[#allocation5 + $0x8a8] sm:$0xff]
    %v1108 = vld [vmem:[#allocation5 + $0x8b0] sm:$0xff]
    %v1109 = vld [vmem:[#allocation5 + $0x8b8] sm:$0xff]
    %v1110 = vld [vmem:[#allocation5 + $0x8c0] sm:$0xff]
    %v1111 = vld [vmem:[#allocation5 + $0x8c8] sm:$0xff]
    %v1112 = vld [vmem:[#allocation5 + $0x8d0] sm:$0xff]
    %v1113 = vld [vmem:[#allocation5 + $0x8d8] sm:$0xff]
    %v1114 = vld [vmem:[#allocation5 + $0x8e0] sm:$0xff]
    %v1115 = vld [vmem:[#allocation5 + $0x8e8] sm:$0xff]
    %v1116 = vld [vmem:[#allocation5 + $0x8f0] sm:$0xff]
    %v1117 = vld [vmem:[#allocation5 + $0x8f8] sm:$0xff]
    %v1118 = vld [vmem:[#allocation5 + $0x900] sm:$0xff]
    %v1119 = vld [vmem:[#allocation5 + $0x908] sm:$0xff]
    %v1120 = vld [vmem:[#allocation5 + $0x910] sm:$0xff]
    %v1121 = vld [vmem:[#allocation5 + $0x918] sm:$0xff]
    %v1122 = vld [vmem:[#allocation5 + $0x920] sm:$0xff]
    %v1123 = vld [vmem:[#allocation5 + $0x928] sm:$0xff]
    %v1124 = vld [vmem:[#allocation5 + $0x930] sm:$0xff]
    %v1125 = vld [vmem:[#allocation5 + $0x938] sm:$0xff]
    %v1126 = vld [vmem:[#allocation5 + $0x940] sm:$0xff]
    %v1127 = vld [vmem:[#allocation5 + $0x948] sm:$0xff]
    %v1128 = vld [vmem:[#allocation5 + $0x950] sm:$0xff]
    %v1129 = vld [vmem:[#allocation5 + $0x958] sm:$0xff]
    %v1130 = vld [vmem:[#allocation5 + $0x960] sm:$0xff]
    %v1131 = vld [vmem:[#allocation5 + $0x968] sm:$0xff]
    %v1132 = vld [vmem:[#allocation5 + $0x970] sm:$0xff]
    %v1133 = vld [vmem:[#allocation5 + $0x978] sm:$0xff]
    %v1134 = vld [vmem:[#allocation5 + $0x980] sm:$0xff]
    %v1135 = vld [vmem:[#allocation5 + $0x988] sm:$0xff]
    %v1136 = vld [vmem:[#allocation5 + $0x990] sm:$0xff]
    %v1137 = vld [vmem:[#allocation5 + $0x998] sm:$0xff]
    %v1138 = vld [vmem:[#allocation5 + $0x9a0] sm:$0xff]
    %v1139 = vld [vmem:[#allocation5 + $0x9a8] sm:$0xff]
    %v1140 = vld [vmem:[#allocation5 + $0x9b0] sm:$0xff]
    %v1141 = vld [vmem:[#allocation5 + $0x9b8] sm:$0xff]
    %v1142 = vld [vmem:[#allocation5 + $0x9c0] sm:$0xff]
    %v1143 = vld [vmem:[#allocation5 + $0x9c8] sm:$0xff]
    %v1144 = vld [vmem:[#allocation5 + $0x9d0] sm:$0xff]
    %v1145 = vld [vmem:[#allocation5 + $0x9d8] sm:$0xff]
    %v1146 = vld [vmem:[#allocation5 + $0x9e0] sm:$0xff]
    %v1147 = vld [vmem:[#allocation5 + $0x9e8] sm:$0xff]
    %v1148 = vld [vmem:[#allocation5 + $0x9f0] sm:$0xff]
    %v1149 = vld [vmem:[#allocation5 + $0x9f8] sm:$0xff]
    %v1150 = vld [vmem:[#allocation5 + $0xa00] sm:$0xff]
    %v1151 = vld [vmem:[#allocation5 + $0xa08] sm:$0xff]
    %v1152 = vld [vmem:[#allocation5 + $0xa10] sm:$0xff]
    %v1153 = vld [vmem:[#allocation5 + $0xa18] sm:$0xff]
    %v1154 = vld [vmem:[#allocation5 + $0xa20] sm:$0xff]
    %v1155 = vld [vmem:[#allocation5 + $0xa28] sm:$0xff]
    %v1156 = vld [vmem:[#allocation5 + $0xa30] sm:$0xff]
    %v1157 = vld [vmem:[#allocation5 + $0xa38] sm:$0xff]
    %v1158 = vld [vmem:[#allocation5 + $0xa40] sm:$0xff]
    %v1159 = vld [vmem:[#allocation5 + $0xa48] sm:$0xff]
    %v1160 = vld [vmem:[#allocation5 + $0xa50] sm:$0xff]
    %v1161 = vld [vmem:[#allocation5 + $0xa58] sm:$0xff]
    %v1162 = vld [vmem:[#allocation5 + $0xa60] sm:$0xff]
    %v1163 = vld [vmem:[#allocation5 + $0xa68] sm:$0xff]
    %v1164 = vld [vmem:[#allocation5 + $0xa70] sm:$0xff]
    %v1165 = vld [vmem:[#allocation5 + $0xa78] sm:$0xff]
    %v1166 = vld [vmem:[#allocation5 + $0xa80] sm:$0xff]
    %v1167 = vld [vmem:[#allocation5 + $0xa88] sm:$0xff]
    %v1168 = vld [vmem:[#allocation5 + $0xa90] sm:$0xff]
    %v1169 = vld [vmem:[#allocation5 + $0xa98] sm:$0xff]
    %v1170 = vld [vmem:[#allocation5 + $0xaa0] sm:$0xff]
    %v1171 = vld [vmem:[#allocation5 + $0xaa8] sm:$0xff]
    %v1172 = vld [vmem:[#allocation5 + $0xab0] sm:$0xff]
    %v1173 = vld [vmem:[#allocation5 + $0xab8] sm:$0xff]
    %v1174 = vld [vmem:[#allocation5 + $0xac0] sm:$0xff]
    %v1175 = vld [vmem:[#allocation5 + $0xac8] sm:$0xff]
    %v1176 = vld [vmem:[#allocation5 + $0xad0] sm:$0xff]
    %v1177 = vld [vmem:[#allocation5 + $0xad8] sm:$0xff]
    %v1178 = vld [vmem:[#allocation5 + $0xae0] sm:$0xff]
    %v1179 = vld [vmem:[#allocation5 + $0xae8] sm:$0xff]
    %v1180 = vld [vmem:[#allocation5 + $0xaf0] sm:$0xff]
    %v1181 = vld [vmem:[#allocation5 + $0xaf8] sm:$0xff]
    %v1182 = vld [vmem:[#allocation5 + $0xb00] sm:$0xff]
    %v1183 = vld [vmem:[#allocation5 + $0xb08] sm:$0xff]
    %v1184 = vld [vmem:[#allocation5 + $0xb10] sm:$0xff]
    %v1185 = vld [vmem:[#allocation5 + $0xb18] sm:$0xff]
    %v1186 = vld [vmem:[#allocation5 + $0xb20] sm:$0xff]
    %v1187 = vld [vmem:[#allocation5 + $0xb28] sm:$0xff]
    %v1188 = vld [vmem:[#allocation5 + $0xb30] sm:$0xff]
    %v1189 = vld [vmem:[#allocation5 + $0xb38] sm:$0xff]
    %v1190 = vld [vmem:[#allocation5 + $0xb40] sm:$0xff]
    %v1191 = vld [vmem:[#allocation5 + $0xb48] sm:$0xff]
    %v1192 = vld [vmem:[#allocation5 + $0xb50] sm:$0xff]
    %v1193 = vld [vmem:[#allocation5 + $0xb58] sm:$0xff]
    %v1194 = vld [vmem:[#allocation5 + $0xb60] sm:$0xff]
    %v1195 = vld [vmem:[#allocation5 + $0xb68] sm:$0xff]
    %v1196 = vld [vmem:[#allocation5 + $0xb70] sm:$0xff]
    %v1197 = vld [vmem:[#allocation5 + $0xb78] sm:$0xff]
    %v1198 = vld [vmem:[#allocation5 + $0xb80] sm:$0xff]
    %v1199 = vld [vmem:[#allocation5 + $0xb88] sm:$0xff]
    %v1200 = vld [vmem:[#allocation5 + $0xb90] sm:$0xff]
    %v1201 = vld [vmem:[#allocation5 + $0xb98] sm:$0xff]
    %v1202 = vld [vmem:[#allocation5 + $0xba0] sm:$0xff]
    %v1203 = vld [vmem:[#allocation5 + $0xba8] sm:$0xff]
    %v1204 = vld [vmem:[#allocation5 + $0xbb0] sm:$0xff]
    %v1205 = vld [vmem:[#allocation5 + $0xbb8] sm:$0xff]
    %v1206 = vld [vmem:[#allocation5 + $0xbc0] sm:$0xff]
    %v1207 = vld [vmem:[#allocation5 + $0xbc8] sm:$0xff]
    %v1208 = vld [vmem:[#allocation5 + $0xbd0] sm:$0xff]
    %v1209 = vld [vmem:[#allocation5 + $0xbd8] sm:$0xff]
    %v1210 = vld [vmem:[#allocation5 + $0xbe0] sm:$0xff]
    %v1211 = vld [vmem:[#allocation5 + $0xbe8] sm:$0xff]
    %v1212 = vld [vmem:[#allocation5 + $0xbf0] sm:$0xff]
    %v1213 = vld [vmem:[#allocation5 + $0xbf8] sm:$0xff]
    %v1214 = vld [vmem:[#allocation5 + $0xc00] sm:$0xff]
    %v1215 = vld [vmem:[#allocation5 + $0xc08] sm:$0xff]
    %v1216 = vld [vmem:[#allocation5 + $0xc10] sm:$0xff]
    %v1217 = vld [vmem:[#allocation5 + $0xc18] sm:$0xff]
    %v1218 = vld [vmem:[#allocation5 + $0xc20] sm:$0xff]
    %v1219 = vld [vmem:[#allocation5 + $0xc28] sm:$0xff]
    %v1220 = vld [vmem:[#allocation5 + $0xc30] sm:$0xff]
    %v1221 = vld [vmem:[#allocation5 + $0xc38] sm:$0xff]
    %v1222 = vld [vmem:[#allocation5 + $0xc40] sm:$0xff]
    %v1223 = vld [vmem:[#allocation5 + $0xc48] sm:$0xff]
    %v1224 = vld [vmem:[#allocation5 + $0xc50] sm:$0xff]
    %v1225 = vld [vmem:[#allocation5 + $0xc58] sm:$0xff]
    %v1226 = vld [vmem:[#allocation5 + $0xc60] sm:$0xff]
    %v1227 = vld [vmem:[#allocation5 + $0xc68] sm:$0xff]
    %v1228 = vld [vmem:[#allocation5 + $0xc70] sm:$0xff]
    %v1229 = vld [vmem:[#allocation5 + $0xc78] sm:$0xff]
    %v1230 = vld [vmem:[#allocation5 + $0xc80] sm:$0xff]
    %v1231 = vld [vmem:[#allocation5 + $0xc88] sm:$0xff]
    %v1232 = vld [vmem:[#allocation5 + $0xc90] sm:$0xff]
    %v1233 = vld [vmem:[#allocation5 + $0xc98] sm:$0xff]
    %v1234 = vld [vmem:[#allocation5 + $0xca0] sm:$0xff]
    %v1235 = vld [vmem:[#allocation5 + $0xca8] sm:$0xff]
    %v1236 = vld [vmem:[#allocation5 + $0xcb0] sm:$0xff]
    %v1237 = vld [vmem:[#allocation5 + $0xcb8] sm:$0xff]
    %v1238 = vld [vmem:[#allocation5 + $0xcc0] sm:$0xff]
    %v1239 = vld [vmem:[#allocation5 + $0xcc8] sm:$0xff]
    %v1240 = vld [vmem:[#allocation5 + $0xcd0] sm:$0xff]
    %v1241 = vld [vmem:[#allocation5 + $0xcd8] sm:$0xff]
    %v1242 = vld [vmem:[#allocation5 + $0xce0] sm:$0xff]
    %v1243 = vld [vmem:[#allocation5 + $0xce8] sm:$0xff]
    %v1244 = vld [vmem:[#allocation5 + $0xcf0] sm:$0xff]
    %v1245 = vld [vmem:[#allocation5 + $0xcf8] sm:$0xff]
    %v1246 = vld [vmem:[#allocation5 + $0xd00] sm:$0xff]
    %v1247 = vld [vmem:[#allocation5 + $0xd08] sm:$0xff]
    %v1248 = vld [vmem:[#allocation5 + $0xd10] sm:$0xff]
    %v1249 = vld [vmem:[#allocation5 + $0xd18] sm:$0xff]
    %v1250 = vld [vmem:[#allocation5 + $0xd20] sm:$0xff]
    %v1251 = vld [vmem:[#allocation5 + $0xd28] sm:$0xff]
    %v1252 = vld [vmem:[#allocation5 + $0xd30] sm:$0xff]
    %v1253 = vld [vmem:[#allocation5 + $0xd38] sm:$0xff]
    %v1254 = vld [vmem:[#allocation5 + $0xd40] sm:$0xff]
    %v1255 = vld [vmem:[#allocation5 + $0xd48] sm:$0xff]
    %v1256 = vld [vmem:[#allocation5 + $0xd50] sm:$0xff]
    %v1257 = vld [vmem:[#allocation5 + $0xd58] sm:$0xff]
    %v1258 = vld [vmem:[#allocation5 + $0xd60] sm:$0xff]
    %v1259 = vld [vmem:[#allocation5 + $0xd68] sm:$0xff]
    %v1260 = vld [vmem:[#allocation5 + $0xd70] sm:$0xff]
    %v1261 = vld [vmem:[#allocation5 + $0xd78] sm:$0xff]
    %v1262 = vld [vmem:[#allocation5 + $0xd80] sm:$0xff]
    %v1263 = vld [vmem:[#allocation5 + $0xd88] sm:$0xff]
    %v1264 = vld [vmem:[#allocation5 + $0xd90] sm:$0xff]
    %v1265 = vld [vmem:[#allocation5 + $0xd98] sm:$0xff]
    %v1266 = vld [vmem:[#allocation5 + $0xda0] sm:$0xff]
    %v1267 = vld [vmem:[#allocation5 + $0xda8] sm:$0xff]
    %v1268 = vld [vmem:[#allocation5 + $0xdb0] sm:$0xff]
    %v1269 = vld [vmem:[#allocation5 + $0xdb8] sm:$0xff]
    %v1270 = vld [vmem:[#allocation5 + $0xdc0] sm:$0xff]
    %v1271 = vld [vmem:[#allocation5 + $0xdc8] sm:$0xff]
    %v1272 = vld [vmem:[#allocation5 + $0xdd0] sm:$0xff]
    %v1273 = vld [vmem:[#allocation5 + $0xdd8] sm:$0xff]
    %v1274 = vld [vmem:[#allocation5 + $0xde0] sm:$0xff]
    %v1275 = vld [vmem:[#allocation5 + $0xde8] sm:$0xff]
    %v1276 = vld [vmem:[#allocation5 + $0xdf0] sm:$0xff]
    %v1277 = vld [vmem:[#allocation5 + $0xdf8] sm:$0xff]
    %v1278 = vld [vmem:[#allocation5 + $0xe00] sm:$0xff]
    %v1279 = vld [vmem:[#allocation5 + $0xe08] sm:$0xff]
    %v1280 = vld [vmem:[#allocation5 + $0xe10] sm:$0xff]
    %v1281 = vld [vmem:[#allocation5 + $0xe18] sm:$0xff]
    %v1282 = vld [vmem:[#allocation5 + $0xe20] sm:$0xff]
    %v1283 = vld [vmem:[#allocation5 + $0xe28] sm:$0xff]
    %v1284 = vld [vmem:[#allocation5 + $0xe30] sm:$0xff]
    %v1285 = vld [vmem:[#allocation5 + $0xe38] sm:$0xff]
    %v1286 = vld [vmem:[#allocation5 + $0xe40] sm:$0xff]
    %v1287 = vld [vmem:[#allocation5 + $0xe48] sm:$0xff]
    %v1288 = vld [vmem:[#allocation5 + $0xe50] sm:$0xff]
    %v1289 = vld [vmem:[#allocation5 + $0xe58] sm:$0xff]
    %v1290 = vld [vmem:[#allocation5 + $0xe60] sm:$0xff]
    %v1291 = vld [vmem:[#allocation5 + $0xe68] sm:$0xff]
    %v1292 = vld [vmem:[#allocation5 + $0xe70] sm:$0xff]
    %v1293 = vld [vmem:[#allocation5 + $0xe78] sm:$0xff]
    %v1294 = vld [vmem:[#allocation5 + $0xe80] sm:$0xff]
    %v1295 = vld [vmem:[#allocation5 + $0xe88] sm:$0xff]
    %v1296 = vld [vmem:[#allocation5 + $0xe90] sm:$0xff]
    %v1297 = vld [vmem:[#allocation5 + $0xe98] sm:$0xff]
    %v1298 = vld [vmem:[#allocation5 + $0xea0] sm:$0xff]
    %v1299 = vld [vmem:[#allocation5 + $0xea8] sm:$0xff]
    %v1300 = vld [vmem:[#allocation5 + $0xeb0] sm:$0xff]
    %v1301 = vld [vmem:[#allocation5 + $0xeb8] sm:$0xff]
    %v1302 = vld [vmem:[#allocation5 + $0xec0] sm:$0xff]
    %v1303 = vld [vmem:[#allocation5 + $0xec8] sm:$0xff]
    %v1304 = vld [vmem:[#allocation5 + $0xed0] sm:$0xff]
    %v1305 = vld [vmem:[#allocation5 + $0xed8] sm:$0xff]
    %v1306 = vld [vmem:[#allocation5 + $0xee0] sm:$0xff]
    %v1307 = vld [vmem:[#allocation5 + $0xee8] sm:$0xff]
    %v1308 = vld [vmem:[#allocation5 + $0xef0] sm:$0xff]
    %v1309 = vld [vmem:[#allocation5 + $0xef8] sm:$0xff]
    %v1310 = vld [vmem:[#allocation5 + $0xf00] sm:$0xff]
    %v1311 = vld [vmem:[#allocation5 + $0xf08] sm:$0xff]
    %v1312 = vld [vmem:[#allocation5 + $0xf10] sm:$0xff]
    %v1313 = vld [vmem:[#allocation5 + $0xf18] sm:$0xff]
    %v1314 = vld [vmem:[#allocation5 + $0xf20] sm:$0xff]
    %v1315 = vld [vmem:[#allocation5 + $0xf28] sm:$0xff]
    %v1316 = vld [vmem:[#allocation5 + $0xf30] sm:$0xff]
    %v1317 = vld [vmem:[#allocation5 + $0xf38] sm:$0xff]
    %v1318 = vld [vmem:[#allocation5 + $0xf40] sm:$0xff]
    %v1319 = vld [vmem:[#allocation5 + $0xf48] sm:$0xff]
    %v1320 = vld [vmem:[#allocation5 + $0xf50] sm:$0xff]
    %v1321 = vld [vmem:[#allocation5 + $0xf58] sm:$0xff]
    %v1322 = vld [vmem:[#allocation5 + $0xf60] sm:$0xff]
    %v1323 = vld [vmem:[#allocation5 + $0xf68] sm:$0xff]
    %v1324 = vld [vmem:[#allocation5 + $0xf70] sm:$0xff]
    %v1325 = vld [vmem:[#allocation5 + $0xf78] sm:$0xff]
    %v1326 = vld [vmem:[#allocation5 + $0xf80] sm:$0xff]
    %v1327 = vld [vmem:[#allocation5 + $0xf88] sm:$0xff]
    %v1328 = vld [vmem:[#allocation5 + $0xf90] sm:$0xff]
    %v1329 = vld [vmem:[#allocation5 + $0xf98] sm:$0xff]
    %v1330 = vld [vmem:[#allocation5 + $0xfa0] sm:$0xff]
    %v1331 = vld [vmem:[#allocation5 + $0xfa8] sm:$0xff]
    %v1332 = vld [vmem:[#allocation5 + $0xfb0] sm:$0xff]
    %v1333 = vld [vmem:[#allocation5 + $0xfb8] sm:$0xff]
    %v1334 = vld [vmem:[#allocation5 + $0xfc0] sm:$0xff]
    %v1335 = vld [vmem:[#allocation5 + $0xfc8] sm:$0xff]
    %v1336 = vld [vmem:[#allocation5 + $0xfd0] sm:$0xff]
    %v1337 = vld [vmem:[#allocation5 + $0xfd8] sm:$0xff]
    %v1338 = vld [vmem:[#allocation5 + $0xfe0] sm:$0xff]
    %v1339 = vld [vmem:[#allocation5 + $0xfe8] sm:$0xff]
    %v1340 = vld [vmem:[#allocation5 + $0xff0] sm:$0xff]
    %v1341 = vld [vmem:[#allocation5 + $0xff8] sm:$0xff]
    %v1342 = vld [vmem:[#allocation5 + $0x1000] sm:$0xff]
    %v1343 = vld [vmem:[#allocation5 + $0x1008] sm:$0xff]
    %v1344 = vld [vmem:[#allocation5 + $0x1010] sm:$0xff]
    %v1345 = vld [vmem:[#allocation5 + $0x1018] sm:$0xff]
    %v1346 = vld [vmem:[#allocation5 + $0x1020] sm:$0xff]
    %v1347 = vld [vmem:[#allocation5 + $0x1028] sm:$0xff]
    %v1348 = vld [vmem:[#allocation5 + $0x1030] sm:$0xff]
    %v1349 = vld [vmem:[#allocation5 + $0x1038] sm:$0xff]
    %v1350 = vld [vmem:[#allocation5 + $0x1040] sm:$0xff]
    %v1351 = vld [vmem:[#allocation5 + $0x1048] sm:$0xff]
    %v1352 = vld [vmem:[#allocation5 + $0x1050] sm:$0xff]
    %v1353 = vld [vmem:[#allocation5 + $0x1058] sm:$0xff]
    %v1354 = vld [vmem:[#allocation5 + $0x1060] sm:$0xff]
    %v1355 = vld [vmem:[#allocation5 + $0x1068] sm:$0xff]
    %v1356 = vld [vmem:[#allocation5 + $0x1070] sm:$0xff]
    %v1357 = vld [vmem:[#allocation5 + $0x1078] sm:$0xff]
    %v1358 = vld [vmem:[#allocation5 + $0x1080] sm:$0xff]
    %v1359 = vld [vmem:[#allocation5 + $0x1088] sm:$0xff]
    %v1360 = vld [vmem:[#allocation5 + $0x1090] sm:$0xff]
    %v1361 = vld [vmem:[#allocation5 + $0x1098] sm:$0xff]
    %v1362 = vld [vmem:[#allocation5 + $0x10a0] sm:$0xff]
    %v1363 = vld [vmem:[#allocation5 + $0x10a8] sm:$0xff]
    %v1364 = vld [vmem:[#allocation5 + $0x10b0] sm:$0xff]
    %v1365 = vld [vmem:[#allocation5 + $0x10b8] sm:$0xff]
    %v1366 = vld [vmem:[#allocation5 + $0x10c0] sm:$0xff]
    %v1367 = vld [vmem:[#allocation5 + $0x10c8] sm:$0xff]
    %v1368 = vld [vmem:[#allocation5 + $0x10d0] sm:$0xff]
    %v1369 = vld [vmem:[#allocation5 + $0x10d8] sm:$0xff]
    %v1370 = vld [vmem:[#allocation5 + $0x10e0] sm:$0xff]
    %v1371 = vld [vmem:[#allocation5 + $0x10e8] sm:$0xff]
    %v1372 = vld [vmem:[#allocation5 + $0x10f0] sm:$0xff]
    %v1373 = vld [vmem:[#allocation5 + $0x10f8] sm:$0xff]
    %v1374 = vld [vmem:[#allocation5 + $0x1100] sm:$0xff]
    %v1375 = vld [vmem:[#allocation5 + $0x1108] sm:$0xff]
    %v1376 = vld [vmem:[#allocation5 + $0x1110] sm:$0xff]
    %v1377 = vld [vmem:[#allocation5 + $0x1118] sm:$0xff]
    %v1378 = vld [vmem:[#allocation5 + $0x1120] sm:$0xff]
    %v1379 = vld [vmem:[#allocation5 + $0x1128] sm:$0xff]
    %v1380 = vld [vmem:[#allocation5 + $0x1130] sm:$0xff]
    %v1381 = vld [vmem:[#allocation5 + $0x1138] sm:$0xff]
    %v1382 = vld [vmem:[#allocation5 + $0x1140] sm:$0xff]
    %v1383 = vld [vmem:[#allocation5 + $0x1148] sm:$0xff]
    %v1384 = vld [vmem:[#allocation5 + $0x1150] sm:$0xff]
    %v1385 = vld [vmem:[#allocation5 + $0x1158] sm:$0xff]
    %v1386 = vld [vmem:[#allocation5 + $0x1160] sm:$0xff]
    %v1387 = vld [vmem:[#allocation5 + $0x1168] sm:$0xff]
    %v1388 = vld [vmem:[#allocation5 + $0x1170] sm:$0xff]
    %v1389 = vld [vmem:[#allocation5 + $0x1178] sm:$0xff]
    %v1390 = vld [vmem:[#allocation5 + $0x1180] sm:$0xff]
    %v1391 = vld [vmem:[#allocation5 + $0x1188] sm:$0xff]
    %v1392 = vld [vmem:[#allocation5 + $0x1190] sm:$0xff]
    %v1393 = vld [vmem:[#allocation5 + $0x1198] sm:$0xff]
    %v1394 = vld [vmem:[#allocation5 + $0x11a0] sm:$0xff]
    %v1395 = vld [vmem:[#allocation5 + $0x11a8] sm:$0xff]
    %v1396 = vld [vmem:[#allocation5 + $0x11b0] sm:$0xff]
    %v1397 = vld [vmem:[#allocation5 + $0x11b8] sm:$0xff]
    %v1398 = vld [vmem:[#allocation5 + $0x11c0] sm:$0xff]
    %v1399 = vld [vmem:[#allocation5 + $0x11c8] sm:$0xff]
    %v1400 = vld [vmem:[#allocation5 + $0x11d0] sm:$0xff]
    %v1401 = vld [vmem:[#allocation5 + $0x11d8] sm:$0xff]
    %v1402 = vld [vmem:[#allocation5 + $0x11e0] sm:$0xff]
    %v1403 = vld [vmem:[#allocation5 + $0x11e8] sm:$0xff]
    %v1404 = vld [vmem:[#allocation5 + $0x11f0] sm:$0xff]
    %v1405 = vld [vmem:[#allocation5 + $0x11f8] sm:$0xff]
    %v1406 = vld [vmem:[#allocation5 + $0x1200] sm:$0xff]
    %v1407 = vld [vmem:[#allocation5 + $0x1208] sm:$0xff]
    %v1408 = vld [vmem:[#allocation5 + $0x1210] sm:$0xff]
    %v1409 = vld [vmem:[#allocation5 + $0x1218] sm:$0xff]
    %v1410 = vld [vmem:[#allocation5 + $0x1220] sm:$0xff]
    %v1411 = vld [vmem:[#allocation5 + $0x1228] sm:$0xff]
    %v1412 = vld [vmem:[#allocation5 + $0x1230] sm:$0xff]
    %v1413 = vld [vmem:[#allocation5 + $0x1238] sm:$0xff]
    %v1414 = vld [vmem:[#allocation5 + $0x1240] sm:$0xff]
    %v1415 = vld [vmem:[#allocation5 + $0x1248] sm:$0xff]
    %v1416 = vld [vmem:[#allocation5 + $0x1250] sm:$0xff]
    %v1417 = vld [vmem:[#allocation5 + $0x1258] sm:$0xff]
    %v1418 = vld [vmem:[#allocation5 + $0x1260] sm:$0xff]
    %v1419 = vld [vmem:[#allocation5 + $0x1268] sm:$0xff]
    %v1420 = vld [vmem:[#allocation5 + $0x1270] sm:$0xff]
    %v1421 = vld [vmem:[#allocation5 + $0x1278] sm:$0xff]
    %v1422 = vld [vmem:[#allocation5 + $0x1280] sm:$0xff]
    %v1423 = vld [vmem:[#allocation5 + $0x1288] sm:$0xff]
    %v1424 = vld [vmem:[#allocation5 + $0x1290] sm:$0xff]
    %v1425 = vld [vmem:[#allocation5 + $0x1298] sm:$0xff]
    %v1426 = vld [vmem:[#allocation5 + $0x12a0] sm:$0xff]
    %v1427 = vld [vmem:[#allocation5 + $0x12a8] sm:$0xff]
    %v1428 = vld [vmem:[#allocation5 + $0x12b0] sm:$0xff]
    %v1429 = vld [vmem:[#allocation5 + $0x12b8] sm:$0xff]
    %v1430 = vld [vmem:[#allocation5 + $0x12c0] sm:$0xff]
    %v1431 = vld [vmem:[#allocation5 + $0x12c8] sm:$0xff]
    %v1432 = vld [vmem:[#allocation5 + $0x12d0] sm:$0xff]
    %v1433 = vld [vmem:[#allocation5 + $0x12d8] sm:$0xff]
    %v1434 = vld [vmem:[#allocation5 + $0x12e0] sm:$0xff]
    %v1435 = vld [vmem:[#allocation5 + $0x12e8] sm:$0xff]
    %v1436 = vld [vmem:[#allocation5 + $0x12f0] sm:$0xff]
    %v1437 = vld [vmem:[#allocation5 + $0x12f8] sm:$0xff]
    %v1438 = vld [vmem:[#allocation5 + $0x1300] sm:$0xff]
    %v1439 = vld [vmem:[#allocation5 + $0x1308] sm:$0xff]
    %v1440 = vld [vmem:[#allocation5 + $0x1310] sm:$0xff]
    %v1441 = vld [vmem:[#allocation5 + $0x1318] sm:$0xff]
    %v1442 = vld [vmem:[#allocation5 + $0x1320] sm:$0xff]
    %v1443 = vld [vmem:[#allocation5 + $0x1328] sm:$0xff]
    %v1444 = vld [vmem:[#allocation5 + $0x1330] sm:$0xff]
    %v1445 = vld [vmem:[#allocation5 + $0x1338] sm:$0xff]
    %v1446 = vld [vmem:[#allocation5 + $0x1340] sm:$0xff]
    %v1447 = vld [vmem:[#allocation5 + $0x1348] sm:$0xff]
    %v1448 = vld [vmem:[#allocation5 + $0x1350] sm:$0xff]
    %v1449 = vld [vmem:[#allocation5 + $0x1358] sm:$0xff]
    %v1450 = vld [vmem:[#allocation5 + $0x1360] sm:$0xff]
    %v1451 = vld [vmem:[#allocation5 + $0x1368] sm:$0xff]
    %v1452 = vld [vmem:[#allocation5 + $0x1370] sm:$0xff]
    %v1453 = vld [vmem:[#allocation5 + $0x1378] sm:$0xff]
    %v1454 = vld [vmem:[#allocation5 + $0x1380] sm:$0xff]
    %v1455 = vld [vmem:[#allocation5 + $0x1388] sm:$0xff]
    %v1456 = vld [vmem:[#allocation5 + $0x1390] sm:$0xff]
    %v1457 = vld [vmem:[#allocation5 + $0x1398] sm:$0xff]
    %v1458 = vld [vmem:[#allocation5 + $0x13a0] sm:$0xff]
    %v1459 = vld [vmem:[#allocation5 + $0x13a8] sm:$0xff]
    %v1460 = vld [vmem:[#allocation5 + $0x13b0] sm:$0xff]
    %v1461 = vld [vmem:[#allocation5 + $0x13b8] sm:$0xff]
    %v1462 = vld [vmem:[#allocation5 + $0x13c0] sm:$0xff]
    %v1463 = vld [vmem:[#allocation5 + $0x13c8] sm:$0xff]
    %v1464 = vld [vmem:[#allocation5 + $0x13d0] sm:$0xff]
    %v1465 = vld [vmem:[#allocation5 + $0x13d8] sm:$0xff]
    %v1466 = vld [vmem:[#allocation5 + $0x13e0] sm:$0xff]
    %v1467 = vld [vmem:[#allocation5 + $0x13e8] sm:$0xff]
    %v1468 = vld [vmem:[#allocation5 + $0x13f0] sm:$0xff]
    %v1469 = vld [vmem:[#allocation5 + $0x13f8] sm:$0xff]
    %v1470 = vld [vmem:[#allocation5 + $0x1400] sm:$0xff]
    %v1471 = vld [vmem:[#allocation5 + $0x1408] sm:$0xff]
    %v1472 = vld [vmem:[#allocation5 + $0x1410] sm:$0xff]
    %v1473 = vld [vmem:[#allocation5 + $0x1418] sm:$0xff]
    %v1474 = vld [vmem:[#allocation5 + $0x1420] sm:$0xff]
    %v1475 = vld [vmem:[#allocation5 + $0x1428] sm:$0xff]
    %v1476 = vld [vmem:[#allocation5 + $0x1430] sm:$0xff]
    %v1477 = vld [vmem:[#allocation5 + $0x1438] sm:$0xff]
    %v1478 = vld [vmem:[#allocation5 + $0x1440] sm:$0xff]
    %v1479 = vld [vmem:[#allocation5 + $0x1448] sm:$0xff]
    %v1480 = vld [vmem:[#allocation5 + $0x1450] sm:$0xff]
    %v1481 = vld [vmem:[#allocation5 + $0x1458] sm:$0xff]
    %v1482 = vld [vmem:[#allocation5 + $0x1460] sm:$0xff]
    %v1483 = vld [vmem:[#allocation5 + $0x1468] sm:$0xff]
    %v1484 = vld [vmem:[#allocation5 + $0x1470] sm:$0xff]
    %v1485 = vld [vmem:[#allocation5 + $0x1478] sm:$0xff]
    %v1486 = vld [vmem:[#allocation5 + $0x1480] sm:$0xff]
    %v1487 = vld [vmem:[#allocation5 + $0x1488] sm:$0xff]
    %v1488 = vld [vmem:[#allocation5 + $0x1490] sm:$0xff]
    %v1489 = vld [vmem:[#allocation5 + $0x1498] sm:$0xff]
    %v1490 = vld [vmem:[#allocation5 + $0x14a0] sm:$0xff]
    %v1491 = vld [vmem:[#allocation5 + $0x14a8] sm:$0xff]
    %v1492 = vld [vmem:[#allocation5 + $0x14b0] sm:$0xff]
    %v1493 = vld [vmem:[#allocation5 + $0x14b8] sm:$0xff]
    %v1494 = vld [vmem:[#allocation5 + $0x14c0] sm:$0xff]
    %v1495 = vld [vmem:[#allocation5 + $0x14c8] sm:$0xff]
    %v1496 = vld [vmem:[#allocation5 + $0x14d0] sm:$0xff]
    %v1497 = vld [vmem:[#allocation5 + $0x14d8] sm:$0xff]
    %v1498 = vld [vmem:[#allocation5 + $0x14e0] sm:$0xff]
    %v1499 = vld [vmem:[#allocation5 + $0x14e8] sm:$0xff]
    %v1500 = vld [vmem:[#allocation5 + $0x14f0] sm:$0xff]
    %v1501 = vld [vmem:[#allocation5 + $0x14f8] sm:$0xff]
    %v1502 = vld [vmem:[#allocation5 + $0x1500] sm:$0xff]
    %v1503 = vld [vmem:[#allocation5 + $0x1508] sm:$0xff]
    %v1504 = vld [vmem:[#allocation5 + $0x1510] sm:$0xff]
    %v1505 = vld [vmem:[#allocation5 + $0x1518] sm:$0xff]
    %v1506 = vld [vmem:[#allocation5 + $0x1520] sm:$0xff]
    %v1507 = vld [vmem:[#allocation5 + $0x1528] sm:$0xff]
    %v1508 = vld [vmem:[#allocation5 + $0x1530] sm:$0xff]
    %v1509 = vld [vmem:[#allocation5 + $0x1538] sm:$0xff]
    %v1510 = vld [vmem:[#allocation5 + $0x1540] sm:$0xff]
    %v1511 = vld [vmem:[#allocation5 + $0x1548] sm:$0xff]
    %v1512 = vld [vmem:[#allocation5 + $0x1550] sm:$0xff]
    %v1513 = vld [vmem:[#allocation5 + $0x1558] sm:$0xff]
    %v1514 = vld [vmem:[#allocation5 + $0x1560] sm:$0xff]
    %v1515 = vld [vmem:[#allocation5 + $0x1568] sm:$0xff]
    %v1516 = vld [vmem:[#allocation5 + $0x1570] sm:$0xff]
    %v1517 = vld [vmem:[#allocation5 + $0x1578] sm:$0xff]
    %v1518 = vld [vmem:[#allocation5 + $0x1580] sm:$0xff]
    %v1519 = vld [vmem:[#allocation5 + $0x1588] sm:$0xff]
    %v1520 = vld [vmem:[#allocation5 + $0x1590] sm:$0xff]
    %v1521 = vld [vmem:[#allocation5 + $0x1598] sm:$0xff]
    %v1522 = vld [vmem:[#allocation5 + $0x15a0] sm:$0xff]
    %v1523 = vld [vmem:[#allocation5 + $0x15a8] sm:$0xff]
    %v1524 = vld [vmem:[#allocation5 + $0x15b0] sm:$0xff]
    %v1525 = vld [vmem:[#allocation5 + $0x15b8] sm:$0xff]
    %v1526 = vld [vmem:[#allocation5 + $0x15c0] sm:$0xff]
    %v1527 = vld [vmem:[#allocation5 + $0x15c8] sm:$0xff]
    %v1528 = vld [vmem:[#allocation5 + $0x15d0] sm:$0xff]
    %v1529 = vld [vmem:[#allocation5 + $0x15d8] sm:$0xff]
    %v1530 = vld [vmem:[#allocation5 + $0x15e0] sm:$0xff]
    %v1531 = vld [vmem:[#allocation5 + $0x15e8] sm:$0xff]
    %v1532 = vld [vmem:[#allocation5 + $0x15f0] sm:$0xff]
    %v1533 = vld [vmem:[#allocation5 + $0x15f8] sm:$0xff]
    %v1534 = vld [vmem:[#allocation5 + $0x1600] sm:$0xff]
    %v1535 = vld [vmem:[#allocation5 + $0x1608] sm:$0xff]
    %v1536 = vld [vmem:[#allocation5 + $0x1610] sm:$0xff]
    %v1537 = vld [vmem:[#allocation5 + $0x1618] sm:$0xff]
    %v1538 = vld [vmem:[#allocation5 + $0x1620] sm:$0xff]
    %v1539 = vld [vmem:[#allocation5 + $0x1628] sm:$0xff]
    %v1540 = vld [vmem:[#allocation5 + $0x1630] sm:$0xff]
    %v1541 = vld [vmem:[#allocation5 + $0x1638] sm:$0xff]
    %v1542 = vld [vmem:[#allocation5 + $0x1640] sm:$0xff]
    %v1543 = vld [vmem:[#allocation5 + $0x1648] sm:$0xff]
    %v1544 = vld [vmem:[#allocation5 + $0x1650] sm:$0xff]
    %v1545 = vld [vmem:[#allocation5 + $0x1658] sm:$0xff]
    %v1546 = vld [vmem:[#allocation5 + $0x1660] sm:$0xff]
    %v1547 = vld [vmem:[#allocation5 + $0x1668] sm:$0xff]
    %v1548 = vld [vmem:[#allocation5 + $0x1670] sm:$0xff]
    %v1549 = vld [vmem:[#allocation5 + $0x1678] sm:$0xff]
    %v1550 = vld [vmem:[#allocation5 + $0x1680] sm:$0xff]
    %v1551 = vld [vmem:[#allocation5 + $0x1688] sm:$0xff]
    %v1552 = vld [vmem:[#allocation5 + $0x1690] sm:$0xff]
    %v1553 = vld [vmem:[#allocation5 + $0x1698] sm:$0xff]
    %v1554 = vld [vmem:[#allocation5 + $0x16a0] sm:$0xff]
    %v1555 = vld [vmem:[#allocation5 + $0x16a8] sm:$0xff]
    %v1556 = vld [vmem:[#allocation5 + $0x16b0] sm:$0xff]
    %v1557 = vld [vmem:[#allocation5 + $0x16b8] sm:$0xff]
    %v1558 = vld [vmem:[#allocation5 + $0x16c0] sm:$0xff]
    %v1559 = vld [vmem:[#allocation5 + $0x16c8] sm:$0xff]
    %v1560 = vld [vmem:[#allocation5 + $0x16d0] sm:$0xff]
    %v1561 = vld [vmem:[#allocation5 + $0x16d8] sm:$0xff]
    %v1562 = vld [vmem:[#allocation5 + $0x16e0] sm:$0xff]
    %v1563 = vld [vmem:[#allocation5 + $0x16e8] sm:$0xff]
    %v1564 = vld [vmem:[#allocation5 + $0x16f0] sm:$0xff]
    %v1565 = vld [vmem:[#allocation5 + $0x16f8] sm:$0xff]
    %v1566 = vld [vmem:[#allocation5 + $0x1700] sm:$0xff]
    %v1567 = vld [vmem:[#allocation5 + $0x1708] sm:$0xff]
    %v1568 = vld [vmem:[#allocation5 + $0x1710] sm:$0xff]
    %v1569 = vld [vmem:[#allocation5 + $0x1718] sm:$0xff]
    %v1570 = vld [vmem:[#allocation5 + $0x1720] sm:$0xff]
    %v1571 = vld [vmem:[#allocation5 + $0x1728] sm:$0xff]
    %v1572 = vld [vmem:[#allocation5 + $0x1730] sm:$0xff]
    %v1573 = vld [vmem:[#allocation5 + $0x1738] sm:$0xff]
    %v1574 = vld [vmem:[#allocation5 + $0x1740] sm:$0xff]
    %v1575 = vld [vmem:[#allocation5 + $0x1748] sm:$0xff]
    %v1576 = vld [vmem:[#allocation5 + $0x1750] sm:$0xff]
    %v1577 = vld [vmem:[#allocation5 + $0x1758] sm:$0xff]
    %v1578 = vld [vmem:[#allocation5 + $0x1760] sm:$0xff]
    %v1579 = vld [vmem:[#allocation5 + $0x1768] sm:$0xff]
    %v1580 = vld [vmem:[#allocation5 + $0x1770] sm:$0xff]
    %v1581 = vld [vmem:[#allocation5 + $0x1778] sm:$0xff]
    %v1582 = vld [vmem:[#allocation5 + $0x1780] sm:$0xff]
    %v1583 = vld [vmem:[#allocation5 + $0x1788] sm:$0xff]
    %v1584 = vld [vmem:[#allocation5 + $0x1790] sm:$0xff]
    %v1585 = vld [vmem:[#allocation5 + $0x1798] sm:$0xff]
    %v1586 = vld [vmem:[#allocation5 + $0x17a0] sm:$0xff]
    %v1587 = vld [vmem:[#allocation5 + $0x17a8] sm:$0xff]
    %v1588 = vld [vmem:[#allocation5 + $0x17b0] sm:$0xff]
    %v1589 = vld [vmem:[#allocation5 + $0x17b8] sm:$0xff]
    %v1590 = vld [vmem:[#allocation5 + $0x17c0] sm:$0xff]
    %v1591 = vld [vmem:[#allocation5 + $0x17c8] sm:$0xff]
    %v1592 = vld [vmem:[#allocation5 + $0x17d0] sm:$0xff]
    %v1593 = vld [vmem:[#allocation5 + $0x17d8] sm:$0xff]
    %v1594 = vld [vmem:[#allocation5 + $0x17e0] sm:$0xff]
    %v1595 = vld [vmem:[#allocation5 + $0x17e8] sm:$0xff]
    %v1596 = vld [vmem:[#allocation5 + $0x17f0] sm:$0xff]
    %v1597 = vld [vmem:[#allocation5 + $0x17f8] sm:$0xff]
    %v1598 = vadd.f32 %v62, %v830
    %v1599 = vadd.f32 %v63, %v831
    %v1600 = vadd.f32 %v64, %v832
    %v1601 = vadd.f32 %v65, %v833
    %v1602 = vadd.f32 %v66, %v834
    %v1603 = vadd.f32 %v67, %v835
    %v1604 = vadd.f32 %v68, %v836
    %v1605 = vadd.f32 %v69, %v837
    %v1606 = vadd.f32 %v70, %v838
    %v1607 = vadd.f32 %v71, %v839
    %v1608 = vadd.f32 %v72, %v840
    %v1609 = vadd.f32 %v73, %v841
    %v1610 = vadd.f32 %v74, %v842
    %v1611 = vadd.f32 %v75, %v843
    %v1612 = vadd.f32 %v76, %v844
    %v1613 = vadd.f32 %v77, %v845
    %v1614 = vadd.f32 %v78, %v846
    %v1615 = vadd.f32 %v79, %v847
    %v1616 = vadd.f32 %v80, %v848
    %v1617 = vadd.f32 %v81, %v849
    %v1618 = vadd.f32 %v82, %v850
    %v1619 = vadd.f32 %v83, %v851
    %v1620 = vadd.f32 %v84, %v852
    %v1621 = vadd.f32 %v85, %v853
    %v1622 = vadd.f32 %v86, %v854
    %v1623 = vadd.f32 %v87, %v855
    %v1624 = vadd.f32 %v88, %v856
    %v1625 = vadd.f32 %v89, %v857
    %v1626 = vadd.f32 %v90, %v858
    %v1627 = vadd.f32 %v91, %v859
    %v1628 = vadd.f32 %v92, %v860
    %v1629 = vadd.f32 %v93, %v861
    %v1630 = vadd.f32 %v94, %v862
    %v1631 = vadd.f32 %v95, %v863
    %v1632 = vadd.f32 %v96, %v864
    %v1633 = vadd.f32 %v97, %v865
    %v1634 = vadd.f32 %v98, %v866
    %v1635 = vadd.f32 %v99, %v867
    %v1636 = vadd.f32 %v100, %v868
    %v1637 = vadd.f32 %v101, %v869
    %v1638 = vadd.f32 %v102, %v870
    %v1639 = vadd.f32 %v103, %v871
    %v1640 = vadd.f32 %v104, %v872
    %v1641 = vadd.f32 %v105, %v873
    %v1642 = vadd.f32 %v106, %v874
    %v1643 = vadd.f32 %v107, %v875
    %v1644 = vadd.f32 %v108, %v876
    %v1645 = vadd.f32 %v109, %v877
    %v1646 = vadd.f32 %v110, %v878
    %v1647 = vadd.f32 %v111, %v879
    %v1648 = vadd.f32 %v112, %v880
    %v1649 = vadd.f32 %v113, %v881
    %v1650 = vadd.f32 %v114, %v882
    %v1651 = vadd.f32 %v115, %v883
    %v1652 = vadd.f32 %v116, %v884
    %v1653 = vadd.f32 %v117, %v885
    %v1654 = vadd.f32 %v118, %v886
    %v1655 = vadd.f32 %v119, %v887
    %v1656 = vadd.f32 %v120, %v888
    %v1657 = vadd.f32 %v121, %v889
    %v1658 = vadd.f32 %v122, %v890
    %v1659 = vadd.f32 %v123, %v891
    %v1660 = vadd.f32 %v124, %v892
    %v1661 = vadd.f32 %v125, %v893
    %v1662 = vadd.f32 %v126, %v894
    %v1663 = vadd.f32 %v127, %v895
    %v1664 = vadd.f32 %v128, %v896
    %v1665 = vadd.f32 %v129, %v897
    %v1666 = vadd.f32 %v130, %v898
    %v1667 = vadd.f32 %v131, %v899
    %v1668 = vadd.f32 %v132, %v900
    %v1669 = vadd.f32 %v133, %v901
    %v1670 = vadd.f32 %v134, %v902
    %v1671 = vadd.f32 %v135, %v903
    %v1672 = vadd.f32 %v136, %v904
    %v1673 = vadd.f32 %v137, %v905
    %v1674 = vadd.f32 %v138, %v906
    %v1675 = vadd.f32 %v139, %v907
    %v1676 = vadd.f32 %v140, %v908
    %v1677 = vadd.f32 %v141, %v909
    %v1678 = vadd.f32 %v142, %v910
    %v1679 = vadd.f32 %v143, %v911
    %v1680 = vadd.f32 %v144, %v912
    %v1681 = vadd.f32 %v145, %v913
    %v1682 = vadd.f32 %v146, %v914
    %v1683 = vadd.f32 %v147, %v915
    %v1684 = vadd.f32 %v148, %v916
    %v1685 = vadd.f32 %v149, %v917
    %v1686 = vadd.f32 %v150, %v918
    %v1687 = vadd.f32 %v151, %v919
    %v1688 = vadd.f32 %v152, %v920
    %v1689 = vadd.f32 %v153, %v921
    %v1690 = vadd.f32 %v154, %v922
    %v1691 = vadd.f32 %v155, %v923
    %v1692 = vadd.f32 %v156, %v924
    %v1693 = vadd.f32 %v157, %v925
    %v1694 = vadd.f32 %v158, %v926
    %v1695 = vadd.f32 %v159, %v927
    %v1696 = vadd.f32 %v160, %v928
    %v1697 = vadd.f32 %v161, %v929
    %v1698 = vadd.f32 %v162, %v930
    %v1699 = vadd.f32 %v163, %v931
    %v1700 = vadd.f32 %v164, %v932
    %v1701 = vadd.f32 %v165, %v933
    %v1702 = vadd.f32 %v166, %v934
    %v1703 = vadd.f32 %v167, %v935
    %v1704 = vadd.f32 %v168, %v936
    %v1705 = vadd.f32 %v169, %v937
    %v1706 = vadd.f32 %v170, %v938
    %v1707 = vadd.f32 %v171, %v939
    %v1708 = vadd.f32 %v172, %v940
    %v1709 = vadd.f32 %v173, %v941
    %v1710 = vadd.f32 %v174, %v942
    %v1711 = vadd.f32 %v175, %v943
    %v1712 = vadd.f32 %v176, %v944
    %v1713 = vadd.f32 %v177, %v945
    %v1714 = vadd.f32 %v178, %v946
    %v1715 = vadd.f32 %v179, %v947
    %v1716 = vadd.f32 %v180, %v948
    %v1717 = vadd.f32 %v181, %v949
    %v1718 = vadd.f32 %v182, %v950
    %v1719 = vadd.f32 %v183, %v951
    %v1720 = vadd.f32 %v184, %v952
    %v1721 = vadd.f32 %v185, %v953
    %v1722 = vadd.f32 %v186, %v954
    %v1723 = vadd.f32 %v187, %v955
    %v1724 = vadd.f32 %v188, %v956
    %v1725 = vadd.f32 %v189, %v957
    %v1726 = vadd.f32 %v190, %v958
    %v1727 = vadd.f32 %v191, %v959
    %v1728 = vadd.f32 %v192, %v960
    %v1729 = vadd.f32 %v193, %v961
    %v1730 = vadd.f32 %v194, %v962
    %v1731 = vadd.f32 %v195, %v963
    %v1732 = vadd.f32 %v196, %v964
    %v1733 = vadd.f32 %v197, %v965
    %v1734 = vadd.f32 %v198, %v966
    %v1735 = vadd.f32 %v199, %v967
    %v1736 = vadd.f32 %v200, %v968
    %v1737 = vadd.f32 %v201, %v969
    %v1738 = vadd.f32 %v202, %v970
    %v1739 = vadd.f32 %v203, %v971
    %v1740 = vadd.f32 %v204, %v972
    %v1741 = vadd.f32 %v205, %v973
    %v1742 = vadd.f32 %v206, %v974
    %v1743 = vadd.f32 %v207, %v975
    %v1744 = vadd.f32 %v208, %v976
    %v1745 = vadd.f32 %v209, %v977
    %v1746 = vadd.f32 %v210, %v978
    %v1747 = vadd.f32 %v211, %v979
    %v1748 = vadd.f32 %v212, %v980
    %v1749 = vadd.f32 %v213, %v981
    %v1750 = vadd.f32 %v214, %v982
    %v1751 = vadd.f32 %v215, %v983
    %v1752 = vadd.f32 %v216, %v984
    %v1753 = vadd.f32 %v217, %v985
    %v1754 = vadd.f32 %v218, %v986
    %v1755 = vadd.f32 %v219, %v987
    %v1756 = vadd.f32 %v220, %v988
    %v1757 = vadd.f32 %v221, %v989
    %v1758 = vadd.f32 %v222, %v990
    %v1759 = vadd.f32 %v223, %v991
    %v1760 = vadd.f32 %v224, %v992
    %v1761 = vadd.f32 %v225, %v993
    %v1762 = vadd.f32 %v226, %v994
    %v1763 = vadd.f32 %v227, %v995
    %v1764 = vadd.f32 %v228, %v996
    %v1765 = vadd.f32 %v229, %v997
    %v1766 = vadd.f32 %v230, %v998
    %v1767 = vadd.f32 %v231, %v999
    %v1768 = vadd.f32 %v232, %v1000
    %v1769 = vadd.f32 %v233, %v1001
    %v1770 = vadd.f32 %v234, %v1002
    %v1771 = vadd.f32 %v235, %v1003
    %v1772 = vadd.f32 %v236, %v1004
    %v1773 = vadd.f32 %v237, %v1005
    %v1774 = vadd.f32 %v238, %v1006
    %v1775 = vadd.f32 %v239, %v1007
    %v1776 = vadd.f32 %v240, %v1008
    %v1777 = vadd.f32 %v241, %v1009
    %v1778 = vadd.f32 %v242, %v1010
    %v1779 = vadd.f32 %v243, %v1011
    %v1780 = vadd.f32 %v244, %v1012
    %v1781 = vadd.f32 %v245, %v1013
    %v1782 = vadd.f32 %v246, %v1014
    %v1783 = vadd.f32 %v247, %v1015
    %v1784 = vadd.f32 %v248, %v1016
    %v1785 = vadd.f32 %v249, %v1017
    %v1786 = vadd.f32 %v250, %v1018
    %v1787 = vadd.f32 %v251, %v1019
    %v1788 = vadd.f32 %v252, %v1020
    %v1789 = vadd.f32 %v253, %v1021
    %v1790 = vadd.f32 %v254, %v1022
    %v1791 = vadd.f32 %v255, %v1023
    %v1792 = vadd.f32 %v256, %v1024
    %v1793 = vadd.f32 %v257, %v1025
    %v1794 = vadd.f32 %v258, %v1026
    %v1795 = vadd.f32 %v259, %v1027
    %v1796 = vadd.f32 %v260, %v1028
    %v1797 = vadd.f32 %v261, %v1029
    %v1798 = vadd.f32 %v262, %v1030
    %v1799 = vadd.f32 %v263, %v1031
    %v1800 = vadd.f32 %v264, %v1032
    %v1801 = vadd.f32 %v265, %v1033
    %v1802 = vadd.f32 %v266, %v1034
    %v1803 = vadd.f32 %v267, %v1035
    %v1804 = vadd.f32 %v268, %v1036
    %v1805 = vadd.f32 %v269, %v1037
    %v1806 = vadd.f32 %v270, %v1038
    %v1807 = vadd.f32 %v271, %v1039
    %v1808 = vadd.f32 %v272, %v1040
    %v1809 = vadd.f32 %v273, %v1041
    %v1810 = vadd.f32 %v274, %v1042
    %v1811 = vadd.f32 %v275, %v1043
    %v1812 = vadd.f32 %v276, %v1044
    %v1813 = vadd.f32 %v277, %v1045
    %v1814 = vadd.f32 %v278, %v1046
    %v1815 = vadd.f32 %v279, %v1047
    %v1816 = vadd.f32 %v280, %v1048
    %v1817 = vadd.f32 %v281, %v1049
    %v1818 = vadd.f32 %v282, %v1050
    %v1819 = vadd.f32 %v283, %v1051
    %v1820 = vadd.f32 %v284, %v1052
    %v1821 = vadd.f32 %v285, %v1053
    %v1822 = vadd.f32 %v286, %v1054
    %v1823 = vadd.f32 %v287, %v1055
    %v1824 = vadd.f32 %v288, %v1056
    %v1825 = vadd.f32 %v289, %v1057
    %v1826 = vadd.f32 %v290, %v1058
    %v1827 = vadd.f32 %v291, %v1059
    %v1828 = vadd.f32 %v292, %v1060
    %v1829 = vadd.f32 %v293, %v1061
    %v1830 = vadd.f32 %v294, %v1062
    %v1831 = vadd.f32 %v295, %v1063
    %v1832 = vadd.f32 %v296, %v1064
    %v1833 = vadd.f32 %v297, %v1065
    %v1834 = vadd.f32 %v298, %v1066
    %v1835 = vadd.f32 %v299, %v1067
    %v1836 = vadd.f32 %v300, %v1068
    %v1837 = vadd.f32 %v301, %v1069
    %v1838 = vadd.f32 %v302, %v1070
    %v1839 = vadd.f32 %v303, %v1071
    %v1840 = vadd.f32 %v304, %v1072
    %v1841 = vadd.f32 %v305, %v1073
    %v1842 = vadd.f32 %v306, %v1074
    %v1843 = vadd.f32 %v307, %v1075
    %v1844 = vadd.f32 %v308, %v1076
    %v1845 = vadd.f32 %v309, %v1077
    %v1846 = vadd.f32 %v310, %v1078
    %v1847 = vadd.f32 %v311, %v1079
    %v1848 = vadd.f32 %v312, %v1080
    %v1849 = vadd.f32 %v313, %v1081
    %v1850 = vadd.f32 %v314, %v1082
    %v1851 = vadd.f32 %v315, %v1083
    %v1852 = vadd.f32 %v316, %v1084
    %v1853 = vadd.f32 %v317, %v1085
    %v1854 = vadd.f32 %v318, %v1086
    %v1855 = vadd.f32 %v319, %v1087
    %v1856 = vadd.f32 %v320, %v1088
    %v1857 = vadd.f32 %v321, %v1089
    %v1858 = vadd.f32 %v322, %v1090
    %v1859 = vadd.f32 %v323, %v1091
    %v1860 = vadd.f32 %v324, %v1092
    %v1861 = vadd.f32 %v325, %v1093
    %v1862 = vadd.f32 %v326, %v1094
    %v1863 = vadd.f32 %v327, %v1095
    %v1864 = vadd.f32 %v328, %v1096
    %v1865 = vadd.f32 %v329, %v1097
    %v1866 = vadd.f32 %v330, %v1098
    %v1867 = vadd.f32 %v331, %v1099
    %v1868 = vadd.f32 %v332, %v1100
    %v1869 = vadd.f32 %v333, %v1101
    %v1870 = vadd.f32 %v334, %v1102
    %v1871 = vadd.f32 %v335, %v1103
    %v1872 = vadd.f32 %v336, %v1104
    %v1873 = vadd.f32 %v337, %v1105
    %v1874 = vadd.f32 %v338, %v1106
    %v1875 = vadd.f32 %v339, %v1107
    %v1876 = vadd.f32 %v340, %v1108
    %v1877 = vadd.f32 %v341, %v1109
    %v1878 = vadd.f32 %v342, %v1110
    %v1879 = vadd.f32 %v343, %v1111
    %v1880 = vadd.f32 %v344, %v1112
    %v1881 = vadd.f32 %v345, %v1113
    %v1882 = vadd.f32 %v346, %v1114
    %v1883 = vadd.f32 %v347, %v1115
    %v1884 = vadd.f32 %v348, %v1116
    %v1885 = vadd.f32 %v349, %v1117
    %v1886 = vadd.f32 %v350, %v1118
    %v1887 = vadd.f32 %v351, %v1119
    %v1888 = vadd.f32 %v352, %v1120
    %v1889 = vadd.f32 %v353, %v1121
    %v1890 = vadd.f32 %v354, %v1122
    %v1891 = vadd.f32 %v355, %v1123
    %v1892 = vadd.f32 %v356, %v1124
    %v1893 = vadd.f32 %v357, %v1125
    %v1894 = vadd.f32 %v358, %v1126
    %v1895 = vadd.f32 %v359, %v1127
    %v1896 = vadd.f32 %v360, %v1128
    %v1897 = vadd.f32 %v361, %v1129
    %v1898 = vadd.f32 %v362, %v1130
    %v1899 = vadd.f32 %v363, %v1131
    %v1900 = vadd.f32 %v364, %v1132
    %v1901 = vadd.f32 %v365, %v1133
    %v1902 = vadd.f32 %v366, %v1134
    %v1903 = vadd.f32 %v367, %v1135
    %v1904 = vadd.f32 %v368, %v1136
    %v1905 = vadd.f32 %v369, %v1137
    %v1906 = vadd.f32 %v370, %v1138
    %v1907 = vadd.f32 %v371, %v1139
    %v1908 = vadd.f32 %v372, %v1140
    %v1909 = vadd.f32 %v373, %v1141
    %v1910 = vadd.f32 %v374, %v1142
    %v1911 = vadd.f32 %v375, %v1143
    %v1912 = vadd.f32 %v376, %v1144
    %v1913 = vadd.f32 %v377, %v1145
    %v1914 = vadd.f32 %v378, %v1146
    %v1915 = vadd.f32 %v379, %v1147
    %v1916 = vadd.f32 %v380, %v1148
    %v1917 = vadd.f32 %v381, %v1149
    %v1918 = vadd.f32 %v382, %v1150
    %v1919 = vadd.f32 %v383, %v1151
    %v1920 = vadd.f32 %v384, %v1152
    %v1921 = vadd.f32 %v385, %v1153
    %v1922 = vadd.f32 %v386, %v1154
    %v1923 = vadd.f32 %v387, %v1155
    %v1924 = vadd.f32 %v388, %v1156
    %v1925 = vadd.f32 %v389, %v1157
    %v1926 = vadd.f32 %v390, %v1158
    %v1927 = vadd.f32 %v391, %v1159
    %v1928 = vadd.f32 %v392, %v1160
    %v1929 = vadd.f32 %v393, %v1161
    %v1930 = vadd.f32 %v394, %v1162
    %v1931 = vadd.f32 %v395, %v1163
    %v1932 = vadd.f32 %v396, %v1164
    %v1933 = vadd.f32 %v397, %v1165
    %v1934 = vadd.f32 %v398, %v1166
    %v1935 = vadd.f32 %v399, %v1167
    %v1936 = vadd.f32 %v400, %v1168
    %v1937 = vadd.f32 %v401, %v1169
    %v1938 = vadd.f32 %v402, %v1170
    %v1939 = vadd.f32 %v403, %v1171
    %v1940 = vadd.f32 %v404, %v1172
    %v1941 = vadd.f32 %v405, %v1173
    %v1942 = vadd.f32 %v406, %v1174
    %v1943 = vadd.f32 %v407, %v1175
    %v1944 = vadd.f32 %v408, %v1176
    %v1945 = vadd.f32 %v409, %v1177
    %v1946 = vadd.f32 %v410, %v1178
    %v1947 = vadd.f32 %v411, %v1179
    %v1948 = vadd.f32 %v412, %v1180
    %v1949 = vadd.f32 %v413, %v1181
    %v1950 = vadd.f32 %v414, %v1182
    %v1951 = vadd.f32 %v415, %v1183
    %v1952 = vadd.f32 %v416, %v1184
    %v1953 = vadd.f32 %v417, %v1185
    %v1954 = vadd.f32 %v418, %v1186
    %v1955 = vadd.f32 %v419, %v1187
    %v1956 = vadd.f32 %v420, %v1188
    %v1957 = vadd.f32 %v421, %v1189
    %v1958 = vadd.f32 %v422, %v1190
    %v1959 = vadd.f32 %v423, %v1191
    %v1960 = vadd.f32 %v424, %v1192
    %v1961 = vadd.f32 %v425, %v1193
    %v1962 = vadd.f32 %v426, %v1194
    %v1963 = vadd.f32 %v427, %v1195
    %v1964 = vadd.f32 %v428, %v1196
    %v1965 = vadd.f32 %v429, %v1197
    %v1966 = vadd.f32 %v430, %v1198
    %v1967 = vadd.f32 %v431, %v1199
    %v1968 = vadd.f32 %v432, %v1200
    %v1969 = vadd.f32 %v433, %v1201
    %v1970 = vadd.f32 %v434, %v1202
    %v1971 = vadd.f32 %v435, %v1203
    %v1972 = vadd.f32 %v436, %v1204
    %v1973 = vadd.f32 %v437, %v1205
    %v1974 = vadd.f32 %v438, %v1206
    %v1975 = vadd.f32 %v439, %v1207
    %v1976 = vadd.f32 %v440, %v1208
    %v1977 = vadd.f32 %v441, %v1209
    %v1978 = vadd.f32 %v442, %v1210
    %v1979 = vadd.f32 %v443, %v1211
    %v1980 = vadd.f32 %v444, %v1212
    %v1981 = vadd.f32 %v445, %v1213
    %v1982 = vadd.f32 %v446, %v1214
    %v1983 = vadd.f32 %v447, %v1215
    %v1984 = vadd.f32 %v448, %v1216
    %v1985 = vadd.f32 %v449, %v1217
    %v1986 = vadd.f32 %v450, %v1218
    %v1987 = vadd.f32 %v451, %v1219
    %v1988 = vadd.f32 %v452, %v1220
    %v1989 = vadd.f32 %v453, %v1221
    %v1990 = vadd.f32 %v454, %v1222
    %v1991 = vadd.f32 %v455, %v1223
    %v1992 = vadd.f32 %v456, %v1224
    %v1993 = vadd.f32 %v457, %v1225
    %v1994 = vadd.f32 %v458, %v1226
    %v1995 = vadd.f32 %v459, %v1227
    %v1996 = vadd.f32 %v460, %v1228
    %v1997 = vadd.f32 %v461, %v1229
    %v1998 = vadd.f32 %v462, %v1230
    %v1999 = vadd.f32 %v463, %v1231
    %v2000 = vadd.f32 %v464, %v1232
    %v2001 = vadd.f32 %v465, %v1233
    %v2002 = vadd.f32 %v466, %v1234
    %v2003 = vadd.f32 %v467, %v1235
    %v2004 = vadd.f32 %v468, %v1236
    %v2005 = vadd.f32 %v469, %v1237
    %v2006 = vadd.f32 %v470, %v1238
    %v2007 = vadd.f32 %v471, %v1239
    %v2008 = vadd.f32 %v472, %v1240
    %v2009 = vadd.f32 %v473, %v1241
    %v2010 = vadd.f32 %v474, %v1242
    %v2011 = vadd.f32 %v475, %v1243
    %v2012 = vadd.f32 %v476, %v1244
    %v2013 = vadd.f32 %v477, %v1245
    %v2014 = vadd.f32 %v478, %v1246
    %v2015 = vadd.f32 %v479, %v1247
    %v2016 = vadd.f32 %v480, %v1248
    %v2017 = vadd.f32 %v481, %v1249
    %v2018 = vadd.f32 %v482, %v1250
    %v2019 = vadd.f32 %v483, %v1251
    %v2020 = vadd.f32 %v484, %v1252
    %v2021 = vadd.f32 %v485, %v1253
    %v2022 = vadd.f32 %v486, %v1254
    %v2023 = vadd.f32 %v487, %v1255
    %v2024 = vadd.f32 %v488, %v1256
    %v2025 = vadd.f32 %v489, %v1257
    %v2026 = vadd.f32 %v490, %v1258
    %v2027 = vadd.f32 %v491, %v1259
    %v2028 = vadd.f32 %v492, %v1260
    %v2029 = vadd.f32 %v493, %v1261
    %v2030 = vadd.f32 %v494, %v1262
    %v2031 = vadd.f32 %v495, %v1263
    %v2032 = vadd.f32 %v496, %v1264
    %v2033 = vadd.f32 %v497, %v1265
    %v2034 = vadd.f32 %v498, %v1266
    %v2035 = vadd.f32 %v499, %v1267
    %v2036 = vadd.f32 %v500, %v1268
    %v2037 = vadd.f32 %v501, %v1269
    %v2038 = vadd.f32 %v502, %v1270
    %v2039 = vadd.f32 %v503, %v1271
    %v2040 = vadd.f32 %v504, %v1272
    %v2041 = vadd.f32 %v505, %v1273
    %v2042 = vadd.f32 %v506, %v1274
    %v2043 = vadd.f32 %v507, %v1275
    %v2044 = vadd.f32 %v508, %v1276
    %v2045 = vadd.f32 %v509, %v1277
    %v2046 = vadd.f32 %v510, %v1278
    %v2047 = vadd.f32 %v511, %v1279
    %v2048 = vadd.f32 %v512, %v1280
    %v2049 = vadd.f32 %v513, %v1281
    %v2050 = vadd.f32 %v514, %v1282
    %v2051 = vadd.f32 %v515, %v1283
    %v2052 = vadd.f32 %v516, %v1284
    %v2053 = vadd.f32 %v517, %v1285
    %v2054 = vadd.f32 %v518, %v1286
    %v2055 = vadd.f32 %v519, %v1287
    %v2056 = vadd.f32 %v520, %v1288
    %v2057 = vadd.f32 %v521, %v1289
    %v2058 = vadd.f32 %v522, %v1290
    %v2059 = vadd.f32 %v523, %v1291
    %v2060 = vadd.f32 %v524, %v1292
    %v2061 = vadd.f32 %v525, %v1293
    %v2062 = vadd.f32 %v526, %v1294
    %v2063 = vadd.f32 %v527, %v1295
    %v2064 = vadd.f32 %v528, %v1296
    %v2065 = vadd.f32 %v529, %v1297
    %v2066 = vadd.f32 %v530, %v1298
    %v2067 = vadd.f32 %v531, %v1299
    %v2068 = vadd.f32 %v532, %v1300
    %v2069 = vadd.f32 %v533, %v1301
    %v2070 = vadd.f32 %v534, %v1302
    %v2071 = vadd.f32 %v535, %v1303
    %v2072 = vadd.f32 %v536, %v1304
    %v2073 = vadd.f32 %v537, %v1305
    %v2074 = vadd.f32 %v538, %v1306
    %v2075 = vadd.f32 %v539, %v1307
    %v2076 = vadd.f32 %v540, %v1308
    %v2077 = vadd.f32 %v541, %v1309
    %v2078 = vadd.f32 %v542, %v1310
    %v2079 = vadd.f32 %v543, %v1311
    %v2080 = vadd.f32 %v544, %v1312
    %v2081 = vadd.f32 %v545, %v1313
    %v2082 = vadd.f32 %v546, %v1314
    %v2083 = vadd.f32 %v547, %v1315
    %v2084 = vadd.f32 %v548, %v1316
    %v2085 = vadd.f32 %v549, %v1317
    %v2086 = vadd.f32 %v550, %v1318
    %v2087 = vadd.f32 %v551, %v1319
    %v2088 = vadd.f32 %v552, %v1320
    %v2089 = vadd.f32 %v553, %v1321
    %v2090 = vadd.f32 %v554, %v1322
    %v2091 = vadd.f32 %v555, %v1323
    %v2092 = vadd.f32 %v556, %v1324
    %v2093 = vadd.f32 %v557, %v1325
    %v2094 = vadd.f32 %v558, %v1326
    %v2095 = vadd.f32 %v559, %v1327
    %v2096 = vadd.f32 %v560, %v1328
    %v2097 = vadd.f32 %v561, %v1329
    %v2098 = vadd.f32 %v562, %v1330
    %v2099 = vadd.f32 %v563, %v1331
    %v2100 = vadd.f32 %v564, %v1332
    %v2101 = vadd.f32 %v565, %v1333
    %v2102 = vadd.f32 %v566, %v1334
    %v2103 = vadd.f32 %v567, %v1335
    %v2104 = vadd.f32 %v568, %v1336
    %v2105 = vadd.f32 %v569, %v1337
    %v2106 = vadd.f32 %v570, %v1338
    %v2107 = vadd.f32 %v571, %v1339
    %v2108 = vadd.f32 %v572, %v1340
    %v2109 = vadd.f32 %v573, %v1341
    %v2110 = vadd.f32 %v574, %v1342
    %v2111 = vadd.f32 %v575, %v1343
    %v2112 = vadd.f32 %v576, %v1344
    %v2113 = vadd.f32 %v577, %v1345
    %v2114 = vadd.f32 %v578, %v1346
    %v2115 = vadd.f32 %v579, %v1347
    %v2116 = vadd.f32 %v580, %v1348
    %v2117 = vadd.f32 %v581, %v1349
    %v2118 = vadd.f32 %v582, %v1350
    %v2119 = vadd.f32 %v583, %v1351
    %v2120 = vadd.f32 %v584, %v1352
    %v2121 = vadd.f32 %v585, %v1353
    %v2122 = vadd.f32 %v586, %v1354
    %v2123 = vadd.f32 %v587, %v1355
    %v2124 = vadd.f32 %v588, %v1356
    %v2125 = vadd.f32 %v589, %v1357
    %v2126 = vadd.f32 %v590, %v1358
    %v2127 = vadd.f32 %v591, %v1359
    %v2128 = vadd.f32 %v592, %v1360
    %v2129 = vadd.f32 %v593, %v1361
    %v2130 = vadd.f32 %v594, %v1362
    %v2131 = vadd.f32 %v595, %v1363
    %v2132 = vadd.f32 %v596, %v1364
    %v2133 = vadd.f32 %v597, %v1365
    %v2134 = vadd.f32 %v598, %v1366
    %v2135 = vadd.f32 %v599, %v1367
    %v2136 = vadd.f32 %v600, %v1368
    %v2137 = vadd.f32 %v601, %v1369
    %v2138 = vadd.f32 %v602, %v1370
    %v2139 = vadd.f32 %v603, %v1371
    %v2140 = vadd.f32 %v604, %v1372
    %v2141 = vadd.f32 %v605, %v1373
    %v2142 = vadd.f32 %v606, %v1374
    %v2143 = vadd.f32 %v607, %v1375
    %v2144 = vadd.f32 %v608, %v1376
    %v2145 = vadd.f32 %v609, %v1377
    %v2146 = vadd.f32 %v610, %v1378
    %v2147 = vadd.f32 %v611, %v1379
    %v2148 = vadd.f32 %v612, %v1380
    %v2149 = vadd.f32 %v613, %v1381
    %v2150 = vadd.f32 %v614, %v1382
    %v2151 = vadd.f32 %v615, %v1383
    %v2152 = vadd.f32 %v616, %v1384
    %v2153 = vadd.f32 %v617, %v1385
    %v2154 = vadd.f32 %v618, %v1386
    %v2155 = vadd.f32 %v619, %v1387
    %v2156 = vadd.f32 %v620, %v1388
    %v2157 = vadd.f32 %v621, %v1389
    %v2158 = vadd.f32 %v622, %v1390
    %v2159 = vadd.f32 %v623, %v1391
    %v2160 = vadd.f32 %v624, %v1392
    %v2161 = vadd.f32 %v625, %v1393
    %v2162 = vadd.f32 %v626, %v1394
    %v2163 = vadd.f32 %v627, %v1395
    %v2164 = vadd.f32 %v628, %v1396
    %v2165 = vadd.f32 %v629, %v1397
    %v2166 = vadd.f32 %v630, %v1398
    %v2167 = vadd.f32 %v631, %v1399
    %v2168 = vadd.f32 %v632, %v1400
    %v2169 = vadd.f32 %v633, %v1401
    %v2170 = vadd.f32 %v634, %v1402
    %v2171 = vadd.f32 %v635, %v1403
    %v2172 = vadd.f32 %v636, %v1404
    %v2173 = vadd.f32 %v637, %v1405
    %v2174 = vadd.f32 %v638, %v1406
    %v2175 = vadd.f32 %v639, %v1407
    %v2176 = vadd.f32 %v640, %v1408
    %v2177 = vadd.f32 %v641, %v1409
    %v2178 = vadd.f32 %v642, %v1410
    %v2179 = vadd.f32 %v643, %v1411
    %v2180 = vadd.f32 %v644, %v1412
    %v2181 = vadd.f32 %v645, %v1413
    %v2182 = vadd.f32 %v646, %v1414
    %v2183 = vadd.f32 %v647, %v1415
    %v2184 = vadd.f32 %v648, %v1416
    %v2185 = vadd.f32 %v649, %v1417
    %v2186 = vadd.f32 %v650, %v1418
    %v2187 = vadd.f32 %v651, %v1419
    %v2188 = vadd.f32 %v652, %v1420
    %v2189 = vadd.f32 %v653, %v1421
    %v2190 = vadd.f32 %v654, %v1422
    %v2191 = vadd.f32 %v655, %v1423
    %v2192 = vadd.f32 %v656, %v1424
    %v2193 = vadd.f32 %v657, %v1425
    %v2194 = vadd.f32 %v658, %v1426
    %v2195 = vadd.f32 %v659, %v1427
    %v2196 = vadd.f32 %v660, %v1428
    %v2197 = vadd.f32 %v661, %v1429
    %v2198 = vadd.f32 %v662, %v1430
    %v2199 = vadd.f32 %v663, %v1431
    %v2200 = vadd.f32 %v664, %v1432
    %v2201 = vadd.f32 %v665, %v1433
    %v2202 = vadd.f32 %v666, %v1434
    %v2203 = vadd.f32 %v667, %v1435
    %v2204 = vadd.f32 %v668, %v1436
    %v2205 = vadd.f32 %v669, %v1437
    %v2206 = vadd.f32 %v670, %v1438
    %v2207 = vadd.f32 %v671, %v1439
    %v2208 = vadd.f32 %v672, %v1440
    %v2209 = vadd.f32 %v673, %v1441
    %v2210 = vadd.f32 %v674, %v1442
    %v2211 = vadd.f32 %v675, %v1443
    %v2212 = vadd.f32 %v676, %v1444
    %v2213 = vadd.f32 %v677, %v1445
    %v2214 = vadd.f32 %v678, %v1446
    %v2215 = vadd.f32 %v679, %v1447
    %v2216 = vadd.f32 %v680, %v1448
    %v2217 = vadd.f32 %v681, %v1449
    %v2218 = vadd.f32 %v682, %v1450
    %v2219 = vadd.f32 %v683, %v1451
    %v2220 = vadd.f32 %v684, %v1452
    %v2221 = vadd.f32 %v685, %v1453
    %v2222 = vadd.f32 %v686, %v1454
    %v2223 = vadd.f32 %v687, %v1455
    %v2224 = vadd.f32 %v688, %v1456
    %v2225 = vadd.f32 %v689, %v1457
    %v2226 = vadd.f32 %v690, %v1458
    %v2227 = vadd.f32 %v691, %v1459
    %v2228 = vadd.f32 %v692, %v1460
    %v2229 = vadd.f32 %v693, %v1461
    %v2230 = vadd.f32 %v694, %v1462
    %v2231 = vadd.f32 %v695, %v1463
    %v2232 = vadd.f32 %v696, %v1464
    %v2233 = vadd.f32 %v697, %v1465
    %v2234 = vadd.f32 %v698, %v1466
    %v2235 = vadd.f32 %v699, %v1467
    %v2236 = vadd.f32 %v700, %v1468
    %v2237 = vadd.f32 %v701, %v1469
    %v2238 = vadd.f32 %v702, %v1470
    %v2239 = vadd.f32 %v703, %v1471
    %v2240 = vadd.f32 %v704, %v1472
    %v2241 = vadd.f32 %v705, %v1473
    %v2242 = vadd.f32 %v706, %v1474
    %v2243 = vadd.f32 %v707, %v1475
    %v2244 = vadd.f32 %v708, %v1476
    %v2245 = vadd.f32 %v709, %v1477
    %v2246 = vadd.f32 %v710, %v1478
    %v2247 = vadd.f32 %v711, %v1479
    %v2248 = vadd.f32 %v712, %v1480
    %v2249 = vadd.f32 %v713, %v1481
    %v2250 = vadd.f32 %v714, %v1482
    %v2251 = vadd.f32 %v715, %v1483
    %v2252 = vadd.f32 %v716, %v1484
    %v2253 = vadd.f32 %v717, %v1485
    %v2254 = vadd.f32 %v718, %v1486
    %v2255 = vadd.f32 %v719, %v1487
    %v2256 = vadd.f32 %v720, %v1488
    %v2257 = vadd.f32 %v721, %v1489
    %v2258 = vadd.f32 %v722, %v1490
    %v2259 = vadd.f32 %v723, %v1491
    %v2260 = vadd.f32 %v724, %v1492
    %v2261 = vadd.f32 %v725, %v1493
    %v2262 = vadd.f32 %v726, %v1494
    %v2263 = vadd.f32 %v727, %v1495
    %v2264 = vadd.f32 %v728, %v1496
    %v2265 = vadd.f32 %v729, %v1497
    %v2266 = vadd.f32 %v730, %v1498
    %v2267 = vadd.f32 %v731, %v1499
    %v2268 = vadd.f32 %v732, %v1500
    %v2269 = vadd.f32 %v733, %v1501
    %v2270 = vadd.f32 %v734, %v1502
    %v2271 = vadd.f32 %v735, %v1503
    %v2272 = vadd.f32 %v736, %v1504
    %v2273 = vadd.f32 %v737, %v1505
    %v2274 = vadd.f32 %v738, %v1506
    %v2275 = vadd.f32 %v739, %v1507
    %v2276 = vadd.f32 %v740, %v1508
    %v2277 = vadd.f32 %v741, %v1509
    %v2278 = vadd.f32 %v742, %v1510
    %v2279 = vadd.f32 %v743, %v1511
    %v2280 = vadd.f32 %v744, %v1512
    %v2281 = vadd.f32 %v745, %v1513
    %v2282 = vadd.f32 %v746, %v1514
    %v2283 = vadd.f32 %v747, %v1515
    %v2284 = vadd.f32 %v748, %v1516
    %v2285 = vadd.f32 %v749, %v1517
    %v2286 = vadd.f32 %v750, %v1518
    %v2287 = vadd.f32 %v751, %v1519
    %v2288 = vadd.f32 %v752, %v1520
    %v2289 = vadd.f32 %v753, %v1521
    %v2290 = vadd.f32 %v754, %v1522
    %v2291 = vadd.f32 %v755, %v1523
    %v2292 = vadd.f32 %v756, %v1524
    %v2293 = vadd.f32 %v757, %v1525
    %v2294 = vadd.f32 %v758, %v1526
    %v2295 = vadd.f32 %v759, %v1527
    %v2296 = vadd.f32 %v760, %v1528
    %v2297 = vadd.f32 %v761, %v1529
    %v2298 = vadd.f32 %v762, %v1530
    %v2299 = vadd.f32 %v763, %v1531
    %v2300 = vadd.f32 %v764, %v1532
    %v2301 = vadd.f32 %v765, %v1533
    %v2302 = vadd.f32 %v766, %v1534
    %v2303 = vadd.f32 %v767, %v1535
    %v2304 = vadd.f32 %v768, %v1536
    %v2305 = vadd.f32 %v769, %v1537
    %v2306 = vadd.f32 %v770, %v1538
    %v2307 = vadd.f32 %v771, %v1539
    %v2308 = vadd.f32 %v772, %v1540
    %v2309 = vadd.f32 %v773, %v1541
    %v2310 = vadd.f32 %v774, %v1542
    %v2311 = vadd.f32 %v775, %v1543
    %v2312 = vadd.f32 %v776, %v1544
    %v2313 = vadd.f32 %v777, %v1545
    %v2314 = vadd.f32 %v778, %v1546
    %v2315 = vadd.f32 %v779, %v1547
    %v2316 = vadd.f32 %v780, %v1548
    %v2317 = vadd.f32 %v781, %v1549
    %v2318 = vadd.f32 %v782, %v1550
    %v2319 = vadd.f32 %v783, %v1551
    %v2320 = vadd.f32 %v784, %v1552
    %v2321 = vadd.f32 %v785, %v1553
    %v2322 = vadd.f32 %v786, %v1554
    %v2323 = vadd.f32 %v787, %v1555
    %v2324 = vadd.f32 %v788, %v1556
    %v2325 = vadd.f32 %v789, %v1557
    %v2326 = vadd.f32 %v790, %v1558
    %v2327 = vadd.f32 %v791, %v1559
    %v2328 = vadd.f32 %v792, %v1560
    %v2329 = vadd.f32 %v793, %v1561
    %v2330 = vadd.f32 %v794, %v1562
    %v2331 = vadd.f32 %v795, %v1563
    %v2332 = vadd.f32 %v796, %v1564
    %v2333 = vadd.f32 %v797, %v1565
    %v2334 = vadd.f32 %v798, %v1566
    %v2335 = vadd.f32 %v799, %v1567
    %v2336 = vadd.f32 %v800, %v1568
    %v2337 = vadd.f32 %v801, %v1569
    %v2338 = vadd.f32 %v802, %v1570
    %v2339 = vadd.f32 %v803, %v1571
    %v2340 = vadd.f32 %v804, %v1572
    %v2341 = vadd.f32 %v805, %v1573
    %v2342 = vadd.f32 %v806, %v1574
    %v2343 = vadd.f32 %v807, %v1575
    %v2344 = vadd.f32 %v808, %v1576
    %v2345 = vadd.f32 %v809, %v1577
    %v2346 = vadd.f32 %v810, %v1578
    %v2347 = vadd.f32 %v811, %v1579
    %v2348 = vadd.f32 %v812, %v1580
    %v2349 = vadd.f32 %v813, %v1581
    %v2350 = vadd.f32 %v814, %v1582
    %v2351 = vadd.f32 %v815, %v1583
    %v2352 = vadd.f32 %v816, %v1584
    %v2353 = vadd.f32 %v817, %v1585
    %v2354 = vadd.f32 %v818, %v1586
    %v2355 = vadd.f32 %v819, %v1587
    %v2356 = vadd.f32 %v820, %v1588
    %v2357 = vadd.f32 %v821, %v1589
    %v2358 = vadd.f32 %v822, %v1590
    %v2359 = vadd.f32 %v823, %v1591
    %v2360 = vadd.f32 %v824, %v1592
    %v2361 = vadd.f32 %v825, %v1593
    %v2362 = vadd.f32 %v826, %v1594
    %v2363 = vadd.f32 %v827, %v1595
    %v2364 = vadd.f32 %v828, %v1596
    %v2365 = vadd.f32 %v829, %v1597
    %v2366 = vld [vmem:[#allocation7] sm:$0xff]
    %v2367 = vld [vmem:[#allocation7 + $0x8] sm:$0xff]
    %v2368 = vld [vmem:[#allocation7 + $0x10] sm:$0xff]
    %v2369 = vld [vmem:[#allocation7 + $0x18] sm:$0xff]
    %v2370 = vld [vmem:[#allocation7 + $0x20] sm:$0xff]
    %v2371 = vld [vmem:[#allocation7 + $0x28] sm:$0xff]
    %v2372 = vld [vmem:[#allocation7 + $0x30] sm:$0xff]
    %v2373 = vld [vmem:[#allocation7 + $0x38] sm:$0xff]
    %v2374 = vld [vmem:[#allocation7 + $0x40] sm:$0xff]
    %v2375 = vld [vmem:[#allocation7 + $0x48] sm:$0xff]
    %v2376 = vld [vmem:[#allocation7 + $0x50] sm:$0xff]
    %v2377 = vld [vmem:[#allocation7 + $0x58] sm:$0xff]
    %v2378 = vld [vmem:[#allocation7 + $0x60] sm:$0xff]
    %v2379 = vld [vmem:[#allocation7 + $0x68] sm:$0xff]
    %v2380 = vld [vmem:[#allocation7 + $0x70] sm:$0xff]
    %v2381 = vld [vmem:[#allocation7 + $0x78] sm:$0xff]
    %v2382 = vld [vmem:[#allocation7 + $0x80] sm:$0xff]
    %v2383 = vld [vmem:[#allocation7 + $0x88] sm:$0xff]
    %v2384 = vld [vmem:[#allocation7 + $0x90] sm:$0xff]
    %v2385 = vld [vmem:[#allocation7 + $0x98] sm:$0xff]
    %v2386 = vld [vmem:[#allocation7 + $0xa0] sm:$0xff]
    %v2387 = vld [vmem:[#allocation7 + $0xa8] sm:$0xff]
    %v2388 = vld [vmem:[#allocation7 + $0xb0] sm:$0xff]
    %v2389 = vld [vmem:[#allocation7 + $0xb8] sm:$0xff]
    %v2390 = vld [vmem:[#allocation7 + $0xc0] sm:$0xff]
    %v2391 = vld [vmem:[#allocation7 + $0xc8] sm:$0xff]
    %v2392 = vld [vmem:[#allocation7 + $0xd0] sm:$0xff]
    %v2393 = vld [vmem:[#allocation7 + $0xd8] sm:$0xff]
    %v2394 = vld [vmem:[#allocation7 + $0xe0] sm:$0xff]
    %v2395 = vld [vmem:[#allocation7 + $0xe8] sm:$0xff]
    %v2396 = vld [vmem:[#allocation7 + $0xf0] sm:$0xff]
    %v2397 = vld [vmem:[#allocation7 + $0xf8] sm:$0xff]
    %v2398 = vld [vmem:[#allocation7 + $0x100] sm:$0xff]
    %v2399 = vld [vmem:[#allocation7 + $0x108] sm:$0xff]
    %v2400 = vld [vmem:[#allocation7 + $0x110] sm:$0xff]
    %v2401 = vld [vmem:[#allocation7 + $0x118] sm:$0xff]
    %v2402 = vld [vmem:[#allocation7 + $0x120] sm:$0xff]
    %v2403 = vld [vmem:[#allocation7 + $0x128] sm:$0xff]
    %v2404 = vld [vmem:[#allocation7 + $0x130] sm:$0xff]
    %v2405 = vld [vmem:[#allocation7 + $0x138] sm:$0xff]
    %v2406 = vld [vmem:[#allocation7 + $0x140] sm:$0xff]
    %v2407 = vld [vmem:[#allocation7 + $0x148] sm:$0xff]
    %v2408 = vld [vmem:[#allocation7 + $0x150] sm:$0xff]
    %v2409 = vld [vmem:[#allocation7 + $0x158] sm:$0xff]
    %v2410 = vld [vmem:[#allocation7 + $0x160] sm:$0xff]
    %v2411 = vld [vmem:[#allocation7 + $0x168] sm:$0xff]
    %v2412 = vld [vmem:[#allocation7 + $0x170] sm:$0xff]
    %v2413 = vld [vmem:[#allocation7 + $0x178] sm:$0xff]
    %v2414 = vld [vmem:[#allocation7 + $0x180] sm:$0xff]
    %v2415 = vld [vmem:[#allocation7 + $0x188] sm:$0xff]
    %v2416 = vld [vmem:[#allocation7 + $0x190] sm:$0xff]
    %v2417 = vld [vmem:[#allocation7 + $0x198] sm:$0xff]
    %v2418 = vld [vmem:[#allocation7 + $0x1a0] sm:$0xff]
    %v2419 = vld [vmem:[#allocation7 + $0x1a8] sm:$0xff]
    %v2420 = vld [vmem:[#allocation7 + $0x1b0] sm:$0xff]
    %v2421 = vld [vmem:[#allocation7 + $0x1b8] sm:$0xff]
    %v2422 = vld [vmem:[#allocation7 + $0x1c0] sm:$0xff]
    %v2423 = vld [vmem:[#allocation7 + $0x1c8] sm:$0xff]
    %v2424 = vld [vmem:[#allocation7 + $0x1d0] sm:$0xff]
    %v2425 = vld [vmem:[#allocation7 + $0x1d8] sm:$0xff]
    %v2426 = vld [vmem:[#allocation7 + $0x1e0] sm:$0xff]
    %v2427 = vld [vmem:[#allocation7 + $0x1e8] sm:$0xff]
    %v2428 = vld [vmem:[#allocation7 + $0x1f0] sm:$0xff]
    %v2429 = vld [vmem:[#allocation7 + $0x1f8] sm:$0xff]
    %v2430 = vld [vmem:[#allocation7 + $0x200] sm:$0xff]
    %v2431 = vld [vmem:[#allocation7 + $0x208] sm:$0xff]
    %v2432 = vld [vmem:[#allocation7 + $0x210] sm:$0xff]
    %v2433 = vld [vmem:[#allocation7 + $0x218] sm:$0xff]
    %v2434 = vld [vmem:[#allocation7 + $0x220] sm:$0xff]
    %v2435 = vld [vmem:[#allocation7 + $0x228] sm:$0xff]
    %v2436 = vld [vmem:[#allocation7 + $0x230] sm:$0xff]
    %v2437 = vld [vmem:[#allocation7 + $0x238] sm:$0xff]
    %v2438 = vld [vmem:[#allocation7 + $0x240] sm:$0xff]
    %v2439 = vld [vmem:[#allocation7 + $0x248] sm:$0xff]
    %v2440 = vld [vmem:[#allocation7 + $0x250] sm:$0xff]
    %v2441 = vld [vmem:[#allocation7 + $0x258] sm:$0xff]
    %v2442 = vld [vmem:[#allocation7 + $0x260] sm:$0xff]
    %v2443 = vld [vmem:[#allocation7 + $0x268] sm:$0xff]
    %v2444 = vld [vmem:[#allocation7 + $0x270] sm:$0xff]
    %v2445 = vld [vmem:[#allocation7 + $0x278] sm:$0xff]
    %v2446 = vld [vmem:[#allocation7 + $0x280] sm:$0xff]
    %v2447 = vld [vmem:[#allocation7 + $0x288] sm:$0xff]
    %v2448 = vld [vmem:[#allocation7 + $0x290] sm:$0xff]
    %v2449 = vld [vmem:[#allocation7 + $0x298] sm:$0xff]
    %v2450 = vld [vmem:[#allocation7 + $0x2a0] sm:$0xff]
    %v2451 = vld [vmem:[#allocation7 + $0x2a8] sm:$0xff]
    %v2452 = vld [vmem:[#allocation7 + $0x2b0] sm:$0xff]
    %v2453 = vld [vmem:[#allocation7 + $0x2b8] sm:$0xff]
    %v2454 = vld [vmem:[#allocation7 + $0x2c0] sm:$0xff]
    %v2455 = vld [vmem:[#allocation7 + $0x2c8] sm:$0xff]
    %v2456 = vld [vmem:[#allocation7 + $0x2d0] sm:$0xff]
    %v2457 = vld [vmem:[#allocation7 + $0x2d8] sm:$0xff]
    %v2458 = vld [vmem:[#allocation7 + $0x2e0] sm:$0xff]
    %v2459 = vld [vmem:[#allocation7 + $0x2e8] sm:$0xff]
    %v2460 = vld [vmem:[#allocation7 + $0x2f0] sm:$0xff]
    %v2461 = vld [vmem:[#allocation7 + $0x2f8] sm:$0xff]
    %v2462 = vld [vmem:[#allocation7 + $0x300] sm:$0xff]
    %v2463 = vld [vmem:[#allocation7 + $0x308] sm:$0xff]
    %v2464 = vld [vmem:[#allocation7 + $0x310] sm:$0xff]
    %v2465 = vld [vmem:[#allocation7 + $0x318] sm:$0xff]
    %v2466 = vld [vmem:[#allocation7 + $0x320] sm:$0xff]
    %v2467 = vld [vmem:[#allocation7 + $0x328] sm:$0xff]
    %v2468 = vld [vmem:[#allocation7 + $0x330] sm:$0xff]
    %v2469 = vld [vmem:[#allocation7 + $0x338] sm:$0xff]
    %v2470 = vld [vmem:[#allocation7 + $0x340] sm:$0xff]
    %v2471 = vld [vmem:[#allocation7 + $0x348] sm:$0xff]
    %v2472 = vld [vmem:[#allocation7 + $0x350] sm:$0xff]
    %v2473 = vld [vmem:[#allocation7 + $0x358] sm:$0xff]
    %v2474 = vld [vmem:[#allocation7 + $0x360] sm:$0xff]
    %v2475 = vld [vmem:[#allocation7 + $0x368] sm:$0xff]
    %v2476 = vld [vmem:[#allocation7 + $0x370] sm:$0xff]
    %v2477 = vld [vmem:[#allocation7 + $0x378] sm:$0xff]
    %v2478 = vld [vmem:[#allocation7 + $0x380] sm:$0xff]
    %v2479 = vld [vmem:[#allocation7 + $0x388] sm:$0xff]
    %v2480 = vld [vmem:[#allocation7 + $0x390] sm:$0xff]
    %v2481 = vld [vmem:[#allocation7 + $0x398] sm:$0xff]
    %v2482 = vld [vmem:[#allocation7 + $0x3a0] sm:$0xff]
    %v2483 = vld [vmem:[#allocation7 + $0x3a8] sm:$0xff]
    %v2484 = vld [vmem:[#allocation7 + $0x3b0] sm:$0xff]
    %v2485 = vld [vmem:[#allocation7 + $0x3b8] sm:$0xff]
    %v2486 = vld [vmem:[#allocation7 + $0x3c0] sm:$0xff]
    %v2487 = vld [vmem:[#allocation7 + $0x3c8] sm:$0xff]
    %v2488 = vld [vmem:[#allocation7 + $0x3d0] sm:$0xff]
    %v2489 = vld [vmem:[#allocation7 + $0x3d8] sm:$0xff]
    %v2490 = vld [vmem:[#allocation7 + $0x3e0] sm:$0xff]
    %v2491 = vld [vmem:[#allocation7 + $0x3e8] sm:$0xff]
    %v2492 = vld [vmem:[#allocation7 + $0x3f0] sm:$0xff]
    %v2493 = vld [vmem:[#allocation7 + $0x3f8] sm:$0xff]
    %v2494 = vld [vmem:[#allocation7 + $0x400] sm:$0xff]
    %v2495 = vld [vmem:[#allocation7 + $0x408] sm:$0xff]
    %v2496 = vld [vmem:[#allocation7 + $0x410] sm:$0xff]
    %v2497 = vld [vmem:[#allocation7 + $0x418] sm:$0xff]
    %v2498 = vld [vmem:[#allocation7 + $0x420] sm:$0xff]
    %v2499 = vld [vmem:[#allocation7 + $0x428] sm:$0xff]
    %v2500 = vld [vmem:[#allocation7 + $0x430] sm:$0xff]
    %v2501 = vld [vmem:[#allocation7 + $0x438] sm:$0xff]
    %v2502 = vld [vmem:[#allocation7 + $0x440] sm:$0xff]
    %v2503 = vld [vmem:[#allocation7 + $0x448] sm:$0xff]
    %v2504 = vld [vmem:[#allocation7 + $0x450] sm:$0xff]
    %v2505 = vld [vmem:[#allocation7 + $0x458] sm:$0xff]
    %v2506 = vld [vmem:[#allocation7 + $0x460] sm:$0xff]
    %v2507 = vld [vmem:[#allocation7 + $0x468] sm:$0xff]
    %v2508 = vld [vmem:[#allocation7 + $0x470] sm:$0xff]
    %v2509 = vld [vmem:[#allocation7 + $0x478] sm:$0xff]
    %v2510 = vld [vmem:[#allocation7 + $0x480] sm:$0xff]
    %v2511 = vld [vmem:[#allocation7 + $0x488] sm:$0xff]
    %v2512 = vld [vmem:[#allocation7 + $0x490] sm:$0xff]
    %v2513 = vld [vmem:[#allocation7 + $0x498] sm:$0xff]
    %v2514 = vld [vmem:[#allocation7 + $0x4a0] sm:$0xff]
    %v2515 = vld [vmem:[#allocation7 + $0x4a8] sm:$0xff]
    %v2516 = vld [vmem:[#allocation7 + $0x4b0] sm:$0xff]
    %v2517 = vld [vmem:[#allocation7 + $0x4b8] sm:$0xff]
    %v2518 = vld [vmem:[#allocation7 + $0x4c0] sm:$0xff]
    %v2519 = vld [vmem:[#allocation7 + $0x4c8] sm:$0xff]
    %v2520 = vld [vmem:[#allocation7 + $0x4d0] sm:$0xff]
    %v2521 = vld [vmem:[#allocation7 + $0x4d8] sm:$0xff]
    %v2522 = vld [vmem:[#allocation7 + $0x4e0] sm:$0xff]
    %v2523 = vld [vmem:[#allocation7 + $0x4e8] sm:$0xff]
    %v2524 = vld [vmem:[#allocation7 + $0x4f0] sm:$0xff]
    %v2525 = vld [vmem:[#allocation7 + $0x4f8] sm:$0xff]
    %v2526 = vld [vmem:[#allocation7 + $0x500] sm:$0xff]
    %v2527 = vld [vmem:[#allocation7 + $0x508] sm:$0xff]
    %v2528 = vld [vmem:[#allocation7 + $0x510] sm:$0xff]
    %v2529 = vld [vmem:[#allocation7 + $0x518] sm:$0xff]
    %v2530 = vld [vmem:[#allocation7 + $0x520] sm:$0xff]
    %v2531 = vld [vmem:[#allocation7 + $0x528] sm:$0xff]
    %v2532 = vld [vmem:[#allocation7 + $0x530] sm:$0xff]
    %v2533 = vld [vmem:[#allocation7 + $0x538] sm:$0xff]
    %v2534 = vld [vmem:[#allocation7 + $0x540] sm:$0xff]
    %v2535 = vld [vmem:[#allocation7 + $0x548] sm:$0xff]
    %v2536 = vld [vmem:[#allocation7 + $0x550] sm:$0xff]
    %v2537 = vld [vmem:[#allocation7 + $0x558] sm:$0xff]
    %v2538 = vld [vmem:[#allocation7 + $0x560] sm:$0xff]
    %v2539 = vld [vmem:[#allocation7 + $0x568] sm:$0xff]
    %v2540 = vld [vmem:[#allocation7 + $0x570] sm:$0xff]
    %v2541 = vld [vmem:[#allocation7 + $0x578] sm:$0xff]
    %v2542 = vld [vmem:[#allocation7 + $0x580] sm:$0xff]
    %v2543 = vld [vmem:[#allocation7 + $0x588] sm:$0xff]
    %v2544 = vld [vmem:[#allocation7 + $0x590] sm:$0xff]
    %v2545 = vld [vmem:[#allocation7 + $0x598] sm:$0xff]
    %v2546 = vld [vmem:[#allocation7 + $0x5a0] sm:$0xff]
    %v2547 = vld [vmem:[#allocation7 + $0x5a8] sm:$0xff]
    %v2548 = vld [vmem:[#allocation7 + $0x5b0] sm:$0xff]
    %v2549 = vld [vmem:[#allocation7 + $0x5b8] sm:$0xff]
    %v2550 = vld [vmem:[#allocation7 + $0x5c0] sm:$0xff]
    %v2551 = vld [vmem:[#allocation7 + $0x5c8] sm:$0xff]
    %v2552 = vld [vmem:[#allocation7 + $0x5d0] sm:$0xff]
    %v2553 = vld [vmem:[#allocation7 + $0x5d8] sm:$0xff]
    %v2554 = vld [vmem:[#allocation7 + $0x5e0] sm:$0xff]
    %v2555 = vld [vmem:[#allocation7 + $0x5e8] sm:$0xff]
    %v2556 = vld [vmem:[#allocation7 + $0x5f0] sm:$0xff]
    %v2557 = vld [vmem:[#allocation7 + $0x5f8] sm:$0xff]
    %v2558 = vld [vmem:[#allocation7 + $0x600] sm:$0xff]
    %v2559 = vld [vmem:[#allocation7 + $0x608] sm:$0xff]
    %v2560 = vld [vmem:[#allocation7 + $0x610] sm:$0xff]
    %v2561 = vld [vmem:[#allocation7 + $0x618] sm:$0xff]
    %v2562 = vld [vmem:[#allocation7 + $0x620] sm:$0xff]
    %v2563 = vld [vmem:[#allocation7 + $0x628] sm:$0xff]
    %v2564 = vld [vmem:[#allocation7 + $0x630] sm:$0xff]
    %v2565 = vld [vmem:[#allocation7 + $0x638] sm:$0xff]
    %v2566 = vld [vmem:[#allocation7 + $0x640] sm:$0xff]
    %v2567 = vld [vmem:[#allocation7 + $0x648] sm:$0xff]
    %v2568 = vld [vmem:[#allocation7 + $0x650] sm:$0xff]
    %v2569 = vld [vmem:[#allocation7 + $0x658] sm:$0xff]
    %v2570 = vld [vmem:[#allocation7 + $0x660] sm:$0xff]
    %v2571 = vld [vmem:[#allocation7 + $0x668] sm:$0xff]
    %v2572 = vld [vmem:[#allocation7 + $0x670] sm:$0xff]
    %v2573 = vld [vmem:[#allocation7 + $0x678] sm:$0xff]
    %v2574 = vld [vmem:[#allocation7 + $0x680] sm:$0xff]
    %v2575 = vld [vmem:[#allocation7 + $0x688] sm:$0xff]
    %v2576 = vld [vmem:[#allocation7 + $0x690] sm:$0xff]
    %v2577 = vld [vmem:[#allocation7 + $0x698] sm:$0xff]
    %v2578 = vld [vmem:[#allocation7 + $0x6a0] sm:$0xff]
    %v2579 = vld [vmem:[#allocation7 + $0x6a8] sm:$0xff]
    %v2580 = vld [vmem:[#allocation7 + $0x6b0] sm:$0xff]
    %v2581 = vld [vmem:[#allocation7 + $0x6b8] sm:$0xff]
    %v2582 = vld [vmem:[#allocation7 + $0x6c0] sm:$0xff]
    %v2583 = vld [vmem:[#allocation7 + $0x6c8] sm:$0xff]
    %v2584 = vld [vmem:[#allocation7 + $0x6d0] sm:$0xff]
    %v2585 = vld [vmem:[#allocation7 + $0x6d8] sm:$0xff]
    %v2586 = vld [vmem:[#allocation7 + $0x6e0] sm:$0xff]
    %v2587 = vld [vmem:[#allocation7 + $0x6e8] sm:$0xff]
    %v2588 = vld [vmem:[#allocation7 + $0x6f0] sm:$0xff]
    %v2589 = vld [vmem:[#allocation7 + $0x6f8] sm:$0xff]
    %v2590 = vld [vmem:[#allocation7 + $0x700] sm:$0xff]
    %v2591 = vld [vmem:[#allocation7 + $0x708] sm:$0xff]
    %v2592 = vld [vmem:[#allocation7 + $0x710] sm:$0xff]
    %v2593 = vld [vmem:[#allocation7 + $0x718] sm:$0xff]
    %v2594 = vld [vmem:[#allocation7 + $0x720] sm:$0xff]
    %v2595 = vld [vmem:[#allocation7 + $0x728] sm:$0xff]
    %v2596 = vld [vmem:[#allocation7 + $0x730] sm:$0xff]
    %v2597 = vld [vmem:[#allocation7 + $0x738] sm:$0xff]
    %v2598 = vld [vmem:[#allocation7 + $0x740] sm:$0xff]
    %v2599 = vld [vmem:[#allocation7 + $0x748] sm:$0xff]
    %v2600 = vld [vmem:[#allocation7 + $0x750] sm:$0xff]
    %v2601 = vld [vmem:[#allocation7 + $0x758] sm:$0xff]
    %v2602 = vld [vmem:[#allocation7 + $0x760] sm:$0xff]
    %v2603 = vld [vmem:[#allocation7 + $0x768] sm:$0xff]
    %v2604 = vld [vmem:[#allocation7 + $0x770] sm:$0xff]
    %v2605 = vld [vmem:[#allocation7 + $0x778] sm:$0xff]
    %v2606 = vld [vmem:[#allocation7 + $0x780] sm:$0xff]
    %v2607 = vld [vmem:[#allocation7 + $0x788] sm:$0xff]
    %v2608 = vld [vmem:[#allocation7 + $0x790] sm:$0xff]
    %v2609 = vld [vmem:[#allocation7 + $0x798] sm:$0xff]
    %v2610 = vld [vmem:[#allocation7 + $0x7a0] sm:$0xff]
    %v2611 = vld [vmem:[#allocation7 + $0x7a8] sm:$0xff]
    %v2612 = vld [vmem:[#allocation7 + $0x7b0] sm:$0xff]
    %v2613 = vld [vmem:[#allocation7 + $0x7b8] sm:$0xff]
    %v2614 = vld [vmem:[#allocation7 + $0x7c0] sm:$0xff]
    %v2615 = vld [vmem:[#allocation7 + $0x7c8] sm:$0xff]
    %v2616 = vld [vmem:[#allocation7 + $0x7d0] sm:$0xff]
    %v2617 = vld [vmem:[#allocation7 + $0x7d8] sm:$0xff]
    %v2618 = vld [vmem:[#allocation7 + $0x7e0] sm:$0xff]
    %v2619 = vld [vmem:[#allocation7 + $0x7e8] sm:$0xff]
    %v2620 = vld [vmem:[#allocation7 + $0x7f0] sm:$0xff]
    %v2621 = vld [vmem:[#allocation7 + $0x7f8] sm:$0xff]
    %v2622 = vld [vmem:[#allocation7 + $0x800] sm:$0xff]
    %v2623 = vld [vmem:[#allocation7 + $0x808] sm:$0xff]
    %v2624 = vld [vmem:[#allocation7 + $0x810] sm:$0xff]
    %v2625 = vld [vmem:[#allocation7 + $0x818] sm:$0xff]
    %v2626 = vld [vmem:[#allocation7 + $0x820] sm:$0xff]
    %v2627 = vld [vmem:[#allocation7 + $0x828] sm:$0xff]
    %v2628 = vld [vmem:[#allocation7 + $0x830] sm:$0xff]
    %v2629 = vld [vmem:[#allocation7 + $0x838] sm:$0xff]
    %v2630 = vld [vmem:[#allocation7 + $0x840] sm:$0xff]
    %v2631 = vld [vmem:[#allocation7 + $0x848] sm:$0xff]
    %v2632 = vld [vmem:[#allocation7 + $0x850] sm:$0xff]
    %v2633 = vld [vmem:[#allocation7 + $0x858] sm:$0xff]
    %v2634 = vld [vmem:[#allocation7 + $0x860] sm:$0xff]
    %v2635 = vld [vmem:[#allocation7 + $0x868] sm:$0xff]
    %v2636 = vld [vmem:[#allocation7 + $0x870] sm:$0xff]
    %v2637 = vld [vmem:[#allocation7 + $0x878] sm:$0xff]
    %v2638 = vld [vmem:[#allocation7 + $0x880] sm:$0xff]
    %v2639 = vld [vmem:[#allocation7 + $0x888] sm:$0xff]
    %v2640 = vld [vmem:[#allocation7 + $0x890] sm:$0xff]
    %v2641 = vld [vmem:[#allocation7 + $0x898] sm:$0xff]
    %v2642 = vld [vmem:[#allocation7 + $0x8a0] sm:$0xff]
    %v2643 = vld [vmem:[#allocation7 + $0x8a8] sm:$0xff]
    %v2644 = vld [vmem:[#allocation7 + $0x8b0] sm:$0xff]
    %v2645 = vld [vmem:[#allocation7 + $0x8b8] sm:$0xff]
    %v2646 = vld [vmem:[#allocation7 + $0x8c0] sm:$0xff]
    %v2647 = vld [vmem:[#allocation7 + $0x8c8] sm:$0xff]
    %v2648 = vld [vmem:[#allocation7 + $0x8d0] sm:$0xff]
    %v2649 = vld [vmem:[#allocation7 + $0x8d8] sm:$0xff]
    %v2650 = vld [vmem:[#allocation7 + $0x8e0] sm:$0xff]
    %v2651 = vld [vmem:[#allocation7 + $0x8e8] sm:$0xff]
    %v2652 = vld [vmem:[#allocation7 + $0x8f0] sm:$0xff]
    %v2653 = vld [vmem:[#allocation7 + $0x8f8] sm:$0xff]
    %v2654 = vld [vmem:[#allocation7 + $0x900] sm:$0xff]
    %v2655 = vld [vmem:[#allocation7 + $0x908] sm:$0xff]
    %v2656 = vld [vmem:[#allocation7 + $0x910] sm:$0xff]
    %v2657 = vld [vmem:[#allocation7 + $0x918] sm:$0xff]
    %v2658 = vld [vmem:[#allocation7 + $0x920] sm:$0xff]
    %v2659 = vld [vmem:[#allocation7 + $0x928] sm:$0xff]
    %v2660 = vld [vmem:[#allocation7 + $0x930] sm:$0xff]
    %v2661 = vld [vmem:[#allocation7 + $0x938] sm:$0xff]
    %v2662 = vld [vmem:[#allocation7 + $0x940] sm:$0xff]
    %v2663 = vld [vmem:[#allocation7 + $0x948] sm:$0xff]
    %v2664 = vld [vmem:[#allocation7 + $0x950] sm:$0xff]
    %v2665 = vld [vmem:[#allocation7 + $0x958] sm:$0xff]
    %v2666 = vld [vmem:[#allocation7 + $0x960] sm:$0xff]
    %v2667 = vld [vmem:[#allocation7 + $0x968] sm:$0xff]
    %v2668 = vld [vmem:[#allocation7 + $0x970] sm:$0xff]
    %v2669 = vld [vmem:[#allocation7 + $0x978] sm:$0xff]
    %v2670 = vld [vmem:[#allocation7 + $0x980] sm:$0xff]
    %v2671 = vld [vmem:[#allocation7 + $0x988] sm:$0xff]
    %v2672 = vld [vmem:[#allocation7 + $0x990] sm:$0xff]
    %v2673 = vld [vmem:[#allocation7 + $0x998] sm:$0xff]
    %v2674 = vld [vmem:[#allocation7 + $0x9a0] sm:$0xff]
    %v2675 = vld [vmem:[#allocation7 + $0x9a8] sm:$0xff]
    %v2676 = vld [vmem:[#allocation7 + $0x9b0] sm:$0xff]
    %v2677 = vld [vmem:[#allocation7 + $0x9b8] sm:$0xff]
    %v2678 = vld [vmem:[#allocation7 + $0x9c0] sm:$0xff]
    %v2679 = vld [vmem:[#allocation7 + $0x9c8] sm:$0xff]
    %v2680 = vld [vmem:[#allocation7 + $0x9d0] sm:$0xff]
    %v2681 = vld [vmem:[#allocation7 + $0x9d8] sm:$0xff]
    %v2682 = vld [vmem:[#allocation7 + $0x9e0] sm:$0xff]
    %v2683 = vld [vmem:[#allocation7 + $0x9e8] sm:$0xff]
    %v2684 = vld [vmem:[#allocation7 + $0x9f0] sm:$0xff]
    %v2685 = vld [vmem:[#allocation7 + $0x9f8] sm:$0xff]
    %v2686 = vld [vmem:[#allocation7 + $0xa00] sm:$0xff]
    %v2687 = vld [vmem:[#allocation7 + $0xa08] sm:$0xff]
    %v2688 = vld [vmem:[#allocation7 + $0xa10] sm:$0xff]
    %v2689 = vld [vmem:[#allocation7 + $0xa18] sm:$0xff]
    %v2690 = vld [vmem:[#allocation7 + $0xa20] sm:$0xff]
    %v2691 = vld [vmem:[#allocation7 + $0xa28] sm:$0xff]
    %v2692 = vld [vmem:[#allocation7 + $0xa30] sm:$0xff]
    %v2693 = vld [vmem:[#allocation7 + $0xa38] sm:$0xff]
    %v2694 = vld [vmem:[#allocation7 + $0xa40] sm:$0xff]
    %v2695 = vld [vmem:[#allocation7 + $0xa48] sm:$0xff]
    %v2696 = vld [vmem:[#allocation7 + $0xa50] sm:$0xff]
    %v2697 = vld [vmem:[#allocation7 + $0xa58] sm:$0xff]
    %v2698 = vld [vmem:[#allocation7 + $0xa60] sm:$0xff]
    %v2699 = vld [vmem:[#allocation7 + $0xa68] sm:$0xff]
    %v2700 = vld [vmem:[#allocation7 + $0xa70] sm:$0xff]
    %v2701 = vld [vmem:[#allocation7 + $0xa78] sm:$0xff]
    %v2702 = vld [vmem:[#allocation7 + $0xa80] sm:$0xff]
    %v2703 = vld [vmem:[#allocation7 + $0xa88] sm:$0xff]
    %v2704 = vld [vmem:[#allocation7 + $0xa90] sm:$0xff]
    %v2705 = vld [vmem:[#allocation7 + $0xa98] sm:$0xff]
    %v2706 = vld [vmem:[#allocation7 + $0xaa0] sm:$0xff]
    %v2707 = vld [vmem:[#allocation7 + $0xaa8] sm:$0xff]
    %v2708 = vld [vmem:[#allocation7 + $0xab0] sm:$0xff]
    %v2709 = vld [vmem:[#allocation7 + $0xab8] sm:$0xff]
    %v2710 = vld [vmem:[#allocation7 + $0xac0] sm:$0xff]
    %v2711 = vld [vmem:[#allocation7 + $0xac8] sm:$0xff]
    %v2712 = vld [vmem:[#allocation7 + $0xad0] sm:$0xff]
    %v2713 = vld [vmem:[#allocation7 + $0xad8] sm:$0xff]
    %v2714 = vld [vmem:[#allocation7 + $0xae0] sm:$0xff]
    %v2715 = vld [vmem:[#allocation7 + $0xae8] sm:$0xff]
    %v2716 = vld [vmem:[#allocation7 + $0xaf0] sm:$0xff]
    %v2717 = vld [vmem:[#allocation7 + $0xaf8] sm:$0xff]
    %v2718 = vld [vmem:[#allocation7 + $0xb00] sm:$0xff]
    %v2719 = vld [vmem:[#allocation7 + $0xb08] sm:$0xff]
    %v2720 = vld [vmem:[#allocation7 + $0xb10] sm:$0xff]
    %v2721 = vld [vmem:[#allocation7 + $0xb18] sm:$0xff]
    %v2722 = vld [vmem:[#allocation7 + $0xb20] sm:$0xff]
    %v2723 = vld [vmem:[#allocation7 + $0xb28] sm:$0xff]
    %v2724 = vld [vmem:[#allocation7 + $0xb30] sm:$0xff]
    %v2725 = vld [vmem:[#allocation7 + $0xb38] sm:$0xff]
    %v2726 = vld [vmem:[#allocation7 + $0xb40] sm:$0xff]
    %v2727 = vld [vmem:[#allocation7 + $0xb48] sm:$0xff]
    %v2728 = vld [vmem:[#allocation7 + $0xb50] sm:$0xff]
    %v2729 = vld [vmem:[#allocation7 + $0xb58] sm:$0xff]
    %v2730 = vld [vmem:[#allocation7 + $0xb60] sm:$0xff]
    %v2731 = vld [vmem:[#allocation7 + $0xb68] sm:$0xff]
    %v2732 = vld [vmem:[#allocation7 + $0xb70] sm:$0xff]
    %v2733 = vld [vmem:[#allocation7 + $0xb78] sm:$0xff]
    %v2734 = vld [vmem:[#allocation7 + $0xb80] sm:$0xff]
    %v2735 = vld [vmem:[#allocation7 + $0xb88] sm:$0xff]
    %v2736 = vld [vmem:[#allocation7 + $0xb90] sm:$0xff]
    %v2737 = vld [vmem:[#allocation7 + $0xb98] sm:$0xff]
    %v2738 = vld [vmem:[#allocation7 + $0xba0] sm:$0xff]
    %v2739 = vld [vmem:[#allocation7 + $0xba8] sm:$0xff]
    %v2740 = vld [vmem:[#allocation7 + $0xbb0] sm:$0xff]
    %v2741 = vld [vmem:[#allocation7 + $0xbb8] sm:$0xff]
    %v2742 = vld [vmem:[#allocation7 + $0xbc0] sm:$0xff]
    %v2743 = vld [vmem:[#allocation7 + $0xbc8] sm:$0xff]
    %v2744 = vld [vmem:[#allocation7 + $0xbd0] sm:$0xff]
    %v2745 = vld [vmem:[#allocation7 + $0xbd8] sm:$0xff]
    %v2746 = vld [vmem:[#allocation7 + $0xbe0] sm:$0xff]
    %v2747 = vld [vmem:[#allocation7 + $0xbe8] sm:$0xff]
    %v2748 = vld [vmem:[#allocation7 + $0xbf0] sm:$0xff]
    %v2749 = vld [vmem:[#allocation7 + $0xbf8] sm:$0xff]
    %v2750 = vld [vmem:[#allocation7 + $0xc00] sm:$0xff]
    %v2751 = vld [vmem:[#allocation7 + $0xc08] sm:$0xff]
    %v2752 = vld [vmem:[#allocation7 + $0xc10] sm:$0xff]
    %v2753 = vld [vmem:[#allocation7 + $0xc18] sm:$0xff]
    %v2754 = vld [vmem:[#allocation7 + $0xc20] sm:$0xff]
    %v2755 = vld [vmem:[#allocation7 + $0xc28] sm:$0xff]
    %v2756 = vld [vmem:[#allocation7 + $0xc30] sm:$0xff]
    %v2757 = vld [vmem:[#allocation7 + $0xc38] sm:$0xff]
    %v2758 = vld [vmem:[#allocation7 + $0xc40] sm:$0xff]
    %v2759 = vld [vmem:[#allocation7 + $0xc48] sm:$0xff]
    %v2760 = vld [vmem:[#allocation7 + $0xc50] sm:$0xff]
    %v2761 = vld [vmem:[#allocation7 + $0xc58] sm:$0xff]
    %v2762 = vld [vmem:[#allocation7 + $0xc60] sm:$0xff]
    %v2763 = vld [vmem:[#allocation7 + $0xc68] sm:$0xff]
    %v2764 = vld [vmem:[#allocation7 + $0xc70] sm:$0xff]
    %v2765 = vld [vmem:[#allocation7 + $0xc78] sm:$0xff]
    %v2766 = vld [vmem:[#allocation7 + $0xc80] sm:$0xff]
    %v2767 = vld [vmem:[#allocation7 + $0xc88] sm:$0xff]
    %v2768 = vld [vmem:[#allocation7 + $0xc90] sm:$0xff]
    %v2769 = vld [vmem:[#allocation7 + $0xc98] sm:$0xff]
    %v2770 = vld [vmem:[#allocation7 + $0xca0] sm:$0xff]
    %v2771 = vld [vmem:[#allocation7 + $0xca8] sm:$0xff]
    %v2772 = vld [vmem:[#allocation7 + $0xcb0] sm:$0xff]
    %v2773 = vld [vmem:[#allocation7 + $0xcb8] sm:$0xff]
    %v2774 = vld [vmem:[#allocation7 + $0xcc0] sm:$0xff]
    %v2775 = vld [vmem:[#allocation7 + $0xcc8] sm:$0xff]
    %v2776 = vld [vmem:[#allocation7 + $0xcd0] sm:$0xff]
    %v2777 = vld [vmem:[#allocation7 + $0xcd8] sm:$0xff]
    %v2778 = vld [vmem:[#allocation7 + $0xce0] sm:$0xff]
    %v2779 = vld [vmem:[#allocation7 + $0xce8] sm:$0xff]
    %v2780 = vld [vmem:[#allocation7 + $0xcf0] sm:$0xff]
    %v2781 = vld [vmem:[#allocation7 + $0xcf8] sm:$0xff]
    %v2782 = vld [vmem:[#allocation7 + $0xd00] sm:$0xff]
    %v2783 = vld [vmem:[#allocation7 + $0xd08] sm:$0xff]
    %v2784 = vld [vmem:[#allocation7 + $0xd10] sm:$0xff]
    %v2785 = vld [vmem:[#allocation7 + $0xd18] sm:$0xff]
    %v2786 = vld [vmem:[#allocation7 + $0xd20] sm:$0xff]
    %v2787 = vld [vmem:[#allocation7 + $0xd28] sm:$0xff]
    %v2788 = vld [vmem:[#allocation7 + $0xd30] sm:$0xff]
    %v2789 = vld [vmem:[#allocation7 + $0xd38] sm:$0xff]
    %v2790 = vld [vmem:[#allocation7 + $0xd40] sm:$0xff]
    %v2791 = vld [vmem:[#allocation7 + $0xd48] sm:$0xff]
    %v2792 = vld [vmem:[#allocation7 + $0xd50] sm:$0xff]
    %v2793 = vld [vmem:[#allocation7 + $0xd58] sm:$0xff]
    %v2794 = vld [vmem:[#allocation7 + $0xd60] sm:$0xff]
    %v2795 = vld [vmem:[#allocation7 + $0xd68] sm:$0xff]
    %v2796 = vld [vmem:[#allocation7 + $0xd70] sm:$0xff]
    %v2797 = vld [vmem:[#allocation7 + $0xd78] sm:$0xff]
    %v2798 = vld [vmem:[#allocation7 + $0xd80] sm:$0xff]
    %v2799 = vld [vmem:[#allocation7 + $0xd88] sm:$0xff]
    %v2800 = vld [vmem:[#allocation7 + $0xd90] sm:$0xff]
    %v2801 = vld [vmem:[#allocation7 + $0xd98] sm:$0xff]
    %v2802 = vld [vmem:[#allocation7 + $0xda0] sm:$0xff]
    %v2803 = vld [vmem:[#allocation7 + $0xda8] sm:$0xff]
    %v2804 = vld [vmem:[#allocation7 + $0xdb0] sm:$0xff]
    %v2805 = vld [vmem:[#allocation7 + $0xdb8] sm:$0xff]
    %v2806 = vld [vmem:[#allocation7 + $0xdc0] sm:$0xff]
    %v2807 = vld [vmem:[#allocation7 + $0xdc8] sm:$0xff]
    %v2808 = vld [vmem:[#allocation7 + $0xdd0] sm:$0xff]
    %v2809 = vld [vmem:[#allocation7 + $0xdd8] sm:$0xff]
    %v2810 = vld [vmem:[#allocation7 + $0xde0] sm:$0xff]
    %v2811 = vld [vmem:[#allocation7 + $0xde8] sm:$0xff]
    %v2812 = vld [vmem:[#allocation7 + $0xdf0] sm:$0xff]
    %v2813 = vld [vmem:[#allocation7 + $0xdf8] sm:$0xff]
    %v2814 = vld [vmem:[#allocation7 + $0xe00] sm:$0xff]
    %v2815 = vld [vmem:[#allocation7 + $0xe08] sm:$0xff]
    %v2816 = vld [vmem:[#allocation7 + $0xe10] sm:$0xff]
    %v2817 = vld [vmem:[#allocation7 + $0xe18] sm:$0xff]
    %v2818 = vld [vmem:[#allocation7 + $0xe20] sm:$0xff]
    %v2819 = vld [vmem:[#allocation7 + $0xe28] sm:$0xff]
    %v2820 = vld [vmem:[#allocation7 + $0xe30] sm:$0xff]
    %v2821 = vld [vmem:[#allocation7 + $0xe38] sm:$0xff]
    %v2822 = vld [vmem:[#allocation7 + $0xe40] sm:$0xff]
    %v2823 = vld [vmem:[#allocation7 + $0xe48] sm:$0xff]
    %v2824 = vld [vmem:[#allocation7 + $0xe50] sm:$0xff]
    %v2825 = vld [vmem:[#allocation7 + $0xe58] sm:$0xff]
    %v2826 = vld [vmem:[#allocation7 + $0xe60] sm:$0xff]
    %v2827 = vld [vmem:[#allocation7 + $0xe68] sm:$0xff]
    %v2828 = vld [vmem:[#allocation7 + $0xe70] sm:$0xff]
    %v2829 = vld [vmem:[#allocation7 + $0xe78] sm:$0xff]
    %v2830 = vld [vmem:[#allocation7 + $0xe80] sm:$0xff]
    %v2831 = vld [vmem:[#allocation7 + $0xe88] sm:$0xff]
    %v2832 = vld [vmem:[#allocation7 + $0xe90] sm:$0xff]
    %v2833 = vld [vmem:[#allocation7 + $0xe98] sm:$0xff]
    %v2834 = vld [vmem:[#allocation7 + $0xea0] sm:$0xff]
    %v2835 = vld [vmem:[#allocation7 + $0xea8] sm:$0xff]
    %v2836 = vld [vmem:[#allocation7 + $0xeb0] sm:$0xff]
    %v2837 = vld [vmem:[#allocation7 + $0xeb8] sm:$0xff]
    %v2838 = vld [vmem:[#allocation7 + $0xec0] sm:$0xff]
    %v2839 = vld [vmem:[#allocation7 + $0xec8] sm:$0xff]
    %v2840 = vld [vmem:[#allocation7 + $0xed0] sm:$0xff]
    %v2841 = vld [vmem:[#allocation7 + $0xed8] sm:$0xff]
    %v2842 = vld [vmem:[#allocation7 + $0xee0] sm:$0xff]
    %v2843 = vld [vmem:[#allocation7 + $0xee8] sm:$0xff]
    %v2844 = vld [vmem:[#allocation7 + $0xef0] sm:$0xff]
    %v2845 = vld [vmem:[#allocation7 + $0xef8] sm:$0xff]
    %v2846 = vld [vmem:[#allocation7 + $0xf00] sm:$0xff]
    %v2847 = vld [vmem:[#allocation7 + $0xf08] sm:$0xff]
    %v2848 = vld [vmem:[#allocation7 + $0xf10] sm:$0xff]
    %v2849 = vld [vmem:[#allocation7 + $0xf18] sm:$0xff]
    %v2850 = vld [vmem:[#allocation7 + $0xf20] sm:$0xff]
    %v2851 = vld [vmem:[#allocation7 + $0xf28] sm:$0xff]
    %v2852 = vld [vmem:[#allocation7 + $0xf30] sm:$0xff]
    %v2853 = vld [vmem:[#allocation7 + $0xf38] sm:$0xff]
    %v2854 = vld [vmem:[#allocation7 + $0xf40] sm:$0xff]
    %v2855 = vld [vmem:[#allocation7 + $0xf48] sm:$0xff]
    %v2856 = vld [vmem:[#allocation7 + $0xf50] sm:$0xff]
    %v2857 = vld [vmem:[#allocation7 + $0xf58] sm:$0xff]
    %v2858 = vld [vmem:[#allocation7 + $0xf60] sm:$0xff]
    %v2859 = vld [vmem:[#allocation7 + $0xf68] sm:$0xff]
    %v2860 = vld [vmem:[#allocation7 + $0xf70] sm:$0xff]
    %v2861 = vld [vmem:[#allocation7 + $0xf78] sm:$0xff]
    %v2862 = vld [vmem:[#allocation7 + $0xf80] sm:$0xff]
    %v2863 = vld [vmem:[#allocation7 + $0xf88] sm:$0xff]
    %v2864 = vld [vmem:[#allocation7 + $0xf90] sm:$0xff]
    %v2865 = vld [vmem:[#allocation7 + $0xf98] sm:$0xff]
    %v2866 = vld [vmem:[#allocation7 + $0xfa0] sm:$0xff]
    %v2867 = vld [vmem:[#allocation7 + $0xfa8] sm:$0xff]
    %v2868 = vld [vmem:[#allocation7 + $0xfb0] sm:$0xff]
    %v2869 = vld [vmem:[#allocation7 + $0xfb8] sm:$0xff]
    %v2870 = vld [vmem:[#allocation7 + $0xfc0] sm:$0xff]
    %v2871 = vld [vmem:[#allocation7 + $0xfc8] sm:$0xff]
    %v2872 = vld [vmem:[#allocation7 + $0xfd0] sm:$0xff]
    %v2873 = vld [vmem:[#allocation7 + $0xfd8] sm:$0xff]
    %v2874 = vld [vmem:[#allocation7 + $0xfe0] sm:$0xff]
    %v2875 = vld [vmem:[#allocation7 + $0xfe8] sm:$0xff]
    %v2876 = vld [vmem:[#allocation7 + $0xff0] sm:$0xff]
    %v2877 = vld [vmem:[#allocation7 + $0xff8] sm:$0xff]
    %v2878 = vld [vmem:[#allocation7 + $0x1000] sm:$0xff]
    %v2879 = vld [vmem:[#allocation7 + $0x1008] sm:$0xff]
    %v2880 = vld [vmem:[#allocation7 + $0x1010] sm:$0xff]
    %v2881 = vld [vmem:[#allocation7 + $0x1018] sm:$0xff]
    %v2882 = vld [vmem:[#allocation7 + $0x1020] sm:$0xff]
    %v2883 = vld [vmem:[#allocation7 + $0x1028] sm:$0xff]
    %v2884 = vld [vmem:[#allocation7 + $0x1030] sm:$0xff]
    %v2885 = vld [vmem:[#allocation7 + $0x1038] sm:$0xff]
    %v2886 = vld [vmem:[#allocation7 + $0x1040] sm:$0xff]
    %v2887 = vld [vmem:[#allocation7 + $0x1048] sm:$0xff]
    %v2888 = vld [vmem:[#allocation7 + $0x1050] sm:$0xff]
    %v2889 = vld [vmem:[#allocation7 + $0x1058] sm:$0xff]
    %v2890 = vld [vmem:[#allocation7 + $0x1060] sm:$0xff]
    %v2891 = vld [vmem:[#allocation7 + $0x1068] sm:$0xff]
    %v2892 = vld [vmem:[#allocation7 + $0x1070] sm:$0xff]
    %v2893 = vld [vmem:[#allocation7 + $0x1078] sm:$0xff]
    %v2894 = vld [vmem:[#allocation7 + $0x1080] sm:$0xff]
    %v2895 = vld [vmem:[#allocation7 + $0x1088] sm:$0xff]
    %v2896 = vld [vmem:[#allocation7 + $0x1090] sm:$0xff]
    %v2897 = vld [vmem:[#allocation7 + $0x1098] sm:$0xff]
    %v2898 = vld [vmem:[#allocation7 + $0x10a0] sm:$0xff]
    %v2899 = vld [vmem:[#allocation7 + $0x10a8] sm:$0xff]
    %v2900 = vld [vmem:[#allocation7 + $0x10b0] sm:$0xff]
    %v2901 = vld [vmem:[#allocation7 + $0x10b8] sm:$0xff]
    %v2902 = vld [vmem:[#allocation7 + $0x10c0] sm:$0xff]
    %v2903 = vld [vmem:[#allocation7 + $0x10c8] sm:$0xff]
    %v2904 = vld [vmem:[#allocation7 + $0x10d0] sm:$0xff]
    %v2905 = vld [vmem:[#allocation7 + $0x10d8] sm:$0xff]
    %v2906 = vld [vmem:[#allocation7 + $0x10e0] sm:$0xff]
    %v2907 = vld [vmem:[#allocation7 + $0x10e8] sm:$0xff]
    %v2908 = vld [vmem:[#allocation7 + $0x10f0] sm:$0xff]
    %v2909 = vld [vmem:[#allocation7 + $0x10f8] sm:$0xff]
    %v2910 = vld [vmem:[#allocation7 + $0x1100] sm:$0xff]
    %v2911 = vld [vmem:[#allocation7 + $0x1108] sm:$0xff]
    %v2912 = vld [vmem:[#allocation7 + $0x1110] sm:$0xff]
    %v2913 = vld [vmem:[#allocation7 + $0x1118] sm:$0xff]
    %v2914 = vld [vmem:[#allocation7 + $0x1120] sm:$0xff]
    %v2915 = vld [vmem:[#allocation7 + $0x1128] sm:$0xff]
    %v2916 = vld [vmem:[#allocation7 + $0x1130] sm:$0xff]
    %v2917 = vld [vmem:[#allocation7 + $0x1138] sm:$0xff]
    %v2918 = vld [vmem:[#allocation7 + $0x1140] sm:$0xff]
    %v2919 = vld [vmem:[#allocation7 + $0x1148] sm:$0xff]
    %v2920 = vld [vmem:[#allocation7 + $0x1150] sm:$0xff]
    %v2921 = vld [vmem:[#allocation7 + $0x1158] sm:$0xff]
    %v2922 = vld [vmem:[#allocation7 + $0x1160] sm:$0xff]
    %v2923 = vld [vmem:[#allocation7 + $0x1168] sm:$0xff]
    %v2924 = vld [vmem:[#allocation7 + $0x1170] sm:$0xff]
    %v2925 = vld [vmem:[#allocation7 + $0x1178] sm:$0xff]
    %v2926 = vld [vmem:[#allocation7 + $0x1180] sm:$0xff]
    %v2927 = vld [vmem:[#allocation7 + $0x1188] sm:$0xff]
    %v2928 = vld [vmem:[#allocation7 + $0x1190] sm:$0xff]
    %v2929 = vld [vmem:[#allocation7 + $0x1198] sm:$0xff]
    %v2930 = vld [vmem:[#allocation7 + $0x11a0] sm:$0xff]
    %v2931 = vld [vmem:[#allocation7 + $0x11a8] sm:$0xff]
    %v2932 = vld [vmem:[#allocation7 + $0x11b0] sm:$0xff]
    %v2933 = vld [vmem:[#allocation7 + $0x11b8] sm:$0xff]
    %v2934 = vld [vmem:[#allocation7 + $0x11c0] sm:$0xff]
    %v2935 = vld [vmem:[#allocation7 + $0x11c8] sm:$0xff]
    %v2936 = vld [vmem:[#allocation7 + $0x11d0] sm:$0xff]
    %v2937 = vld [vmem:[#allocation7 + $0x11d8] sm:$0xff]
    %v2938 = vld [vmem:[#allocation7 + $0x11e0] sm:$0xff]
    %v2939 = vld [vmem:[#allocation7 + $0x11e8] sm:$0xff]
    %v2940 = vld [vmem:[#allocation7 + $0x11f0] sm:$0xff]
    %v2941 = vld [vmem:[#allocation7 + $0x11f8] sm:$0xff]
    %v2942 = vld [vmem:[#allocation7 + $0x1200] sm:$0xff]
    %v2943 = vld [vmem:[#allocation7 + $0x1208] sm:$0xff]
    %v2944 = vld [vmem:[#allocation7 + $0x1210] sm:$0xff]
    %v2945 = vld [vmem:[#allocation7 + $0x1218] sm:$0xff]
    %v2946 = vld [vmem:[#allocation7 + $0x1220] sm:$0xff]
    %v2947 = vld [vmem:[#allocation7 + $0x1228] sm:$0xff]
    %v2948 = vld [vmem:[#allocation7 + $0x1230] sm:$0xff]
    %v2949 = vld [vmem:[#allocation7 + $0x1238] sm:$0xff]
    %v2950 = vld [vmem:[#allocation7 + $0x1240] sm:$0xff]
    %v2951 = vld [vmem:[#allocation7 + $0x1248] sm:$0xff]
    %v2952 = vld [vmem:[#allocation7 + $0x1250] sm:$0xff]
    %v2953 = vld [vmem:[#allocation7 + $0x1258] sm:$0xff]
    %v2954 = vld [vmem:[#allocation7 + $0x1260] sm:$0xff]
    %v2955 = vld [vmem:[#allocation7 + $0x1268] sm:$0xff]
    %v2956 = vld [vmem:[#allocation7 + $0x1270] sm:$0xff]
    %v2957 = vld [vmem:[#allocation7 + $0x1278] sm:$0xff]
    %v2958 = vld [vmem:[#allocation7 + $0x1280] sm:$0xff]
    %v2959 = vld [vmem:[#allocation7 + $0x1288] sm:$0xff]
    %v2960 = vld [vmem:[#allocation7 + $0x1290] sm:$0xff]
    %v2961 = vld [vmem:[#allocation7 + $0x1298] sm:$0xff]
    %v2962 = vld [vmem:[#allocation7 + $0x12a0] sm:$0xff]
    %v2963 = vld [vmem:[#allocation7 + $0x12a8] sm:$0xff]
    %v2964 = vld [vmem:[#allocation7 + $0x12b0] sm:$0xff]
    %v2965 = vld [vmem:[#allocation7 + $0x12b8] sm:$0xff]
    %v2966 = vld [vmem:[#allocation7 + $0x12c0] sm:$0xff]
    %v2967 = vld [vmem:[#allocation7 + $0x12c8] sm:$0xff]
    %v2968 = vld [vmem:[#allocation7 + $0x12d0] sm:$0xff]
    %v2969 = vld [vmem:[#allocation7 + $0x12d8] sm:$0xff]
    %v2970 = vld [vmem:[#allocation7 + $0x12e0] sm:$0xff]
    %v2971 = vld [vmem:[#allocation7 + $0x12e8] sm:$0xff]
    %v2972 = vld [vmem:[#allocation7 + $0x12f0] sm:$0xff]
    %v2973 = vld [vmem:[#allocation7 + $0x12f8] sm:$0xff]
    %v2974 = vld [vmem:[#allocation7 + $0x1300] sm:$0xff]
    %v2975 = vld [vmem:[#allocation7 + $0x1308] sm:$0xff]
    %v2976 = vld [vmem:[#allocation7 + $0x1310] sm:$0xff]
    %v2977 = vld [vmem:[#allocation7 + $0x1318] sm:$0xff]
    %v2978 = vld [vmem:[#allocation7 + $0x1320] sm:$0xff]
    %v2979 = vld [vmem:[#allocation7 + $0x1328] sm:$0xff]
    %v2980 = vld [vmem:[#allocation7 + $0x1330] sm:$0xff]
    %v2981 = vld [vmem:[#allocation7 + $0x1338] sm:$0xff]
    %v2982 = vld [vmem:[#allocation7 + $0x1340] sm:$0xff]
    %v2983 = vld [vmem:[#allocation7 + $0x1348] sm:$0xff]
    %v2984 = vld [vmem:[#allocation7 + $0x1350] sm:$0xff]
    %v2985 = vld [vmem:[#allocation7 + $0x1358] sm:$0xff]
    %v2986 = vld [vmem:[#allocation7 + $0x1360] sm:$0xff]
    %v2987 = vld [vmem:[#allocation7 + $0x1368] sm:$0xff]
    %v2988 = vld [vmem:[#allocation7 + $0x1370] sm:$0xff]
    %v2989 = vld [vmem:[#allocation7 + $0x1378] sm:$0xff]
    %v2990 = vld [vmem:[#allocation7 + $0x1380] sm:$0xff]
    %v2991 = vld [vmem:[#allocation7 + $0x1388] sm:$0xff]
    %v2992 = vld [vmem:[#allocation7 + $0x1390] sm:$0xff]
    %v2993 = vld [vmem:[#allocation7 + $0x1398] sm:$0xff]
    %v2994 = vld [vmem:[#allocation7 + $0x13a0] sm:$0xff]
    %v2995 = vld [vmem:[#allocation7 + $0x13a8] sm:$0xff]
    %v2996 = vld [vmem:[#allocation7 + $0x13b0] sm:$0xff]
    %v2997 = vld [vmem:[#allocation7 + $0x13b8] sm:$0xff]
    %v2998 = vld [vmem:[#allocation7 + $0x13c0] sm:$0xff]
    %v2999 = vld [vmem:[#allocation7 + $0x13c8] sm:$0xff]
    %v3000 = vld [vmem:[#allocation7 + $0x13d0] sm:$0xff]
    %v3001 = vld [vmem:[#allocation7 + $0x13d8] sm:$0xff]
    %v3002 = vld [vmem:[#allocation7 + $0x13e0] sm:$0xff]
    %v3003 = vld [vmem:[#allocation7 + $0x13e8] sm:$0xff]
    %v3004 = vld [vmem:[#allocation7 + $0x13f0] sm:$0xff]
    %v3005 = vld [vmem:[#allocation7 + $0x13f8] sm:$0xff]
    %v3006 = vld [vmem:[#allocation7 + $0x1400] sm:$0xff]
    %v3007 = vld [vmem:[#allocation7 + $0x1408] sm:$0xff]
    %v3008 = vld [vmem:[#allocation7 + $0x1410] sm:$0xff]
    %v3009 = vld [vmem:[#allocation7 + $0x1418] sm:$0xff]
    %v3010 = vld [vmem:[#allocation7 + $0x1420] sm:$0xff]
    %v3011 = vld [vmem:[#allocation7 + $0x1428] sm:$0xff]
    %v3012 = vld [vmem:[#allocation7 + $0x1430] sm:$0xff]
    %v3013 = vld [vmem:[#allocation7 + $0x1438] sm:$0xff]
    %v3014 = vld [vmem:[#allocation7 + $0x1440] sm:$0xff]
    %v3015 = vld [vmem:[#allocation7 + $0x1448] sm:$0xff]
    %v3016 = vld [vmem:[#allocation7 + $0x1450] sm:$0xff]
    %v3017 = vld [vmem:[#allocation7 + $0x1458] sm:$0xff]
    %v3018 = vld [vmem:[#allocation7 + $0x1460] sm:$0xff]
    %v3019 = vld [vmem:[#allocation7 + $0x1468] sm:$0xff]
    %v3020 = vld [vmem:[#allocation7 + $0x1470] sm:$0xff]
    %v3021 = vld [vmem:[#allocation7 + $0x1478] sm:$0xff]
    %v3022 = vld [vmem:[#allocation7 + $0x1480] sm:$0xff]
    %v3023 = vld [vmem:[#allocation7 + $0x1488] sm:$0xff]
    %v3024 = vld [vmem:[#allocation7 + $0x1490] sm:$0xff]
    %v3025 = vld [vmem:[#allocation7 + $0x1498] sm:$0xff]
    %v3026 = vld [vmem:[#allocation7 + $0x14a0] sm:$0xff]
    %v3027 = vld [vmem:[#allocation7 + $0x14a8] sm:$0xff]
    %v3028 = vld [vmem:[#allocation7 + $0x14b0] sm:$0xff]
    %v3029 = vld [vmem:[#allocation7 + $0x14b8] sm:$0xff]
    %v3030 = vld [vmem:[#allocation7 + $0x14c0] sm:$0xff]
    %v3031 = vld [vmem:[#allocation7 + $0x14c8] sm:$0xff]
    %v3032 = vld [vmem:[#allocation7 + $0x14d0] sm:$0xff]
    %v3033 = vld [vmem:[#allocation7 + $0x14d8] sm:$0xff]
    %v3034 = vld [vmem:[#allocation7 + $0x14e0] sm:$0xff]
    %v3035 = vld [vmem:[#allocation7 + $0x14e8] sm:$0xff]
    %v3036 = vld [vmem:[#allocation7 + $0x14f0] sm:$0xff]
    %v3037 = vld [vmem:[#allocation7 + $0x14f8] sm:$0xff]
    %v3038 = vld [vmem:[#allocation7 + $0x1500] sm:$0xff]
    %v3039 = vld [vmem:[#allocation7 + $0x1508] sm:$0xff]
    %v3040 = vld [vmem:[#allocation7 + $0x1510] sm:$0xff]
    %v3041 = vld [vmem:[#allocation7 + $0x1518] sm:$0xff]
    %v3042 = vld [vmem:[#allocation7 + $0x1520] sm:$0xff]
    %v3043 = vld [vmem:[#allocation7 + $0x1528] sm:$0xff]
    %v3044 = vld [vmem:[#allocation7 + $0x1530] sm:$0xff]
    %v3045 = vld [vmem:[#allocation7 + $0x1538] sm:$0xff]
    %v3046 = vld [vmem:[#allocation7 + $0x1540] sm:$0xff]
    %v3047 = vld [vmem:[#allocation7 + $0x1548] sm:$0xff]
    %v3048 = vld [vmem:[#allocation7 + $0x1550] sm:$0xff]
    %v3049 = vld [vmem:[#allocation7 + $0x1558] sm:$0xff]
    %v3050 = vld [vmem:[#allocation7 + $0x1560] sm:$0xff]
    %v3051 = vld [vmem:[#allocation7 + $0x1568] sm:$0xff]
    %v3052 = vld [vmem:[#allocation7 + $0x1570] sm:$0xff]
    %v3053 = vld [vmem:[#allocation7 + $0x1578] sm:$0xff]
    %v3054 = vld [vmem:[#allocation7 + $0x1580] sm:$0xff]
    %v3055 = vld [vmem:[#allocation7 + $0x1588] sm:$0xff]
    %v3056 = vld [vmem:[#allocation7 + $0x1590] sm:$0xff]
    %v3057 = vld [vmem:[#allocation7 + $0x1598] sm:$0xff]
    %v3058 = vld [vmem:[#allocation7 + $0x15a0] sm:$0xff]
    %v3059 = vld [vmem:[#allocation7 + $0x15a8] sm:$0xff]
    %v3060 = vld [vmem:[#allocation7 + $0x15b0] sm:$0xff]
    %v3061 = vld [vmem:[#allocation7 + $0x15b8] sm:$0xff]
    %v3062 = vld [vmem:[#allocation7 + $0x15c0] sm:$0xff]
    %v3063 = vld [vmem:[#allocation7 + $0x15c8] sm:$0xff]
    %v3064 = vld [vmem:[#allocation7 + $0x15d0] sm:$0xff]
    %v3065 = vld [vmem:[#allocation7 + $0x15d8] sm:$0xff]
    %v3066 = vld [vmem:[#allocation7 + $0x15e0] sm:$0xff]
    %v3067 = vld [vmem:[#allocation7 + $0x15e8] sm:$0xff]
    %v3068 = vld [vmem:[#allocation7 + $0x15f0] sm:$0xff]
    %v3069 = vld [vmem:[#allocation7 + $0x15f8] sm:$0xff]
    %v3070 = vld [vmem:[#allocation7 + $0x1600] sm:$0xff]
    %v3071 = vld [vmem:[#allocation7 + $0x1608] sm:$0xff]
    %v3072 = vld [vmem:[#allocation7 + $0x1610] sm:$0xff]
    %v3073 = vld [vmem:[#allocation7 + $0x1618] sm:$0xff]
    %v3074 = vld [vmem:[#allocation7 + $0x1620] sm:$0xff]
    %v3075 = vld [vmem:[#allocation7 + $0x1628] sm:$0xff]
    %v3076 = vld [vmem:[#allocation7 + $0x1630] sm:$0xff]
    %v3077 = vld [vmem:[#allocation7 + $0x1638] sm:$0xff]
    %v3078 = vld [vmem:[#allocation7 + $0x1640] sm:$0xff]
    %v3079 = vld [vmem:[#allocation7 + $0x1648] sm:$0xff]
    %v3080 = vld [vmem:[#allocation7 + $0x1650] sm:$0xff]
    %v3081 = vld [vmem:[#allocation7 + $0x1658] sm:$0xff]
    %v3082 = vld [vmem:[#allocation7 + $0x1660] sm:$0xff]
    %v3083 = vld [vmem:[#allocation7 + $0x1668] sm:$0xff]
    %v3084 = vld [vmem:[#allocation7 + $0x1670] sm:$0xff]
    %v3085 = vld [vmem:[#allocation7 + $0x1678] sm:$0xff]
    %v3086 = vld [vmem:[#allocation7 + $0x1680] sm:$0xff]
    %v3087 = vld [vmem:[#allocation7 + $0x1688] sm:$0xff]
    %v3088 = vld [vmem:[#allocation7 + $0x1690] sm:$0xff]
    %v3089 = vld [vmem:[#allocation7 + $0x1698] sm:$0xff]
    %v3090 = vld [vmem:[#allocation7 + $0x16a0] sm:$0xff]
    %v3091 = vld [vmem:[#allocation7 + $0x16a8] sm:$0xff]
    %v3092 = vld [vmem:[#allocation7 + $0x16b0] sm:$0xff]
    %v3093 = vld [vmem:[#allocation7 + $0x16b8] sm:$0xff]
    %v3094 = vld [vmem:[#allocation7 + $0x16c0] sm:$0xff]
    %v3095 = vld [vmem:[#allocation7 + $0x16c8] sm:$0xff]
    %v3096 = vld [vmem:[#allocation7 + $0x16d0] sm:$0xff]
    %v3097 = vld [vmem:[#allocation7 + $0x16d8] sm:$0xff]
    %v3098 = vld [vmem:[#allocation7 + $0x16e0] sm:$0xff]
    %v3099 = vld [vmem:[#allocation7 + $0x16e8] sm:$0xff]
    %v3100 = vld [vmem:[#allocation7 + $0x16f0] sm:$0xff]
    %v3101 = vld [vmem:[#allocation7 + $0x16f8] sm:$0xff]
    %v3102 = vld [vmem:[#allocation7 + $0x1700] sm:$0xff]
    %v3103 = vld [vmem:[#allocation7 + $0x1708] sm:$0xff]
    %v3104 = vld [vmem:[#allocation7 + $0x1710] sm:$0xff]
    %v3105 = vld [vmem:[#allocation7 + $0x1718] sm:$0xff]
    %v3106 = vld [vmem:[#allocation7 + $0x1720] sm:$0xff]
    %v3107 = vld [vmem:[#allocation7 + $0x1728] sm:$0xff]
    %v3108 = vld [vmem:[#allocation7 + $0x1730] sm:$0xff]
    %v3109 = vld [vmem:[#allocation7 + $0x1738] sm:$0xff]
    %v3110 = vld [vmem:[#allocation7 + $0x1740] sm:$0xff]
    %v3111 = vld [vmem:[#allocation7 + $0x1748] sm:$0xff]
    %v3112 = vld [vmem:[#allocation7 + $0x1750] sm:$0xff]
    %v3113 = vld [vmem:[#allocation7 + $0x1758] sm:$0xff]
    %v3114 = vld [vmem:[#allocation7 + $0x1760] sm:$0xff]
    %v3115 = vld [vmem:[#allocation7 + $0x1768] sm:$0xff]
    %v3116 = vld [vmem:[#allocation7 + $0x1770] sm:$0xff]
    %v3117 = vld [vmem:[#allocation7 + $0x1778] sm:$0xff]
    %v3118 = vld [vmem:[#allocation7 + $0x1780] sm:$0xff]
    %v3119 = vld [vmem:[#allocation7 + $0x1788] sm:$0xff]
    %v3120 = vld [vmem:[#allocation7 + $0x1790] sm:$0xff]
    %v3121 = vld [vmem:[#allocation7 + $0x1798] sm:$0xff]
    %v3122 = vld [vmem:[#allocation7 + $0x17a0] sm:$0xff]
    %v3123 = vld [vmem:[#allocation7 + $0x17a8] sm:$0xff]
    %v3124 = vld [vmem:[#allocation7 + $0x17b0] sm:$0xff]
    %v3125 = vld [vmem:[#allocation7 + $0x17b8] sm:$0xff]
    %v3126 = vld [vmem:[#allocation7 + $0x17c0] sm:$0xff]
    %v3127 = vld [vmem:[#allocation7 + $0x17c8] sm:$0xff]
    %v3128 = vld [vmem:[#allocation7 + $0x17d0] sm:$0xff]
    %v3129 = vld [vmem:[#allocation7 + $0x17d8] sm:$0xff]
    %v3130 = vld [vmem:[#allocation7 + $0x17e0] sm:$0xff]
    %v3131 = vld [vmem:[#allocation7 + $0x17e8] sm:$0xff]
    %v3132 = vld [vmem:[#allocation7 + $0x17f0] sm:$0xff]
    %v3133 = vld [vmem:[#allocation7 + $0x17f8] sm:$0xff]
    %v3134 = vadd.f32 %v1598, %v2366
    %v3135 = vadd.f32 %v1599, %v2367
    %v3136 = vadd.f32 %v1600, %v2368
    %v3137 = vadd.f32 %v1601, %v2369
    %v3138 = vadd.f32 %v1602, %v2370
    %v3139 = vadd.f32 %v1603, %v2371
    %v3140 = vadd.f32 %v1604, %v2372
    %v3141 = vadd.f32 %v1605, %v2373
    %v3142 = vadd.f32 %v1606, %v2374
    %v3143 = vadd.f32 %v1607, %v2375
    %v3144 = vadd.f32 %v1608, %v2376
    %v3145 = vadd.f32 %v1609, %v2377
    %v3146 = vadd.f32 %v1610, %v2378
    %v3147 = vadd.f32 %v1611, %v2379
    %v3148 = vadd.f32 %v1612, %v2380
    %v3149 = vadd.f32 %v1613, %v2381
    %v3150 = vadd.f32 %v1614, %v2382
    %v3151 = vadd.f32 %v1615, %v2383
    %v3152 = vadd.f32 %v1616, %v2384
    %v3153 = vadd.f32 %v1617, %v2385
    %v3154 = vadd.f32 %v1618, %v2386
    %v3155 = vadd.f32 %v1619, %v2387
    %v3156 = vadd.f32 %v1620, %v2388
    %v3157 = vadd.f32 %v1621, %v2389
    %v3158 = vadd.f32 %v1622, %v2390
    %v3159 = vadd.f32 %v1623, %v2391
    %v3160 = vadd.f32 %v1624, %v2392
    %v3161 = vadd.f32 %v1625, %v2393
    %v3162 = vadd.f32 %v1626, %v2394
    %v3163 = vadd.f32 %v1627, %v2395
    %v3164 = vadd.f32 %v1628, %v2396
    %v3165 = vadd.f32 %v1629, %v2397
    %v3166 = vadd.f32 %v1630, %v2398
    %v3167 = vadd.f32 %v1631, %v2399
    %v3168 = vadd.f32 %v1632, %v2400
    %v3169 = vadd.f32 %v1633, %v2401
    %v3170 = vadd.f32 %v1634, %v2402
    %v3171 = vadd.f32 %v1635, %v2403
    %v3172 = vadd.f32 %v1636, %v2404
    %v3173 = vadd.f32 %v1637, %v2405
    %v3174 = vadd.f32 %v1638, %v2406
    %v3175 = vadd.f32 %v1639, %v2407
    %v3176 = vadd.f32 %v1640, %v2408
    %v3177 = vadd.f32 %v1641, %v2409
    %v3178 = vadd.f32 %v1642, %v2410
    %v3179 = vadd.f32 %v1643, %v2411
    %v3180 = vadd.f32 %v1644, %v2412
    %v3181 = vadd.f32 %v1645, %v2413
    %v3182 = vadd.f32 %v1646, %v2414
    %v3183 = vadd.f32 %v1647, %v2415
    %v3184 = vadd.f32 %v1648, %v2416
    %v3185 = vadd.f32 %v1649, %v2417
    %v3186 = vadd.f32 %v1650, %v2418
    %v3187 = vadd.f32 %v1651, %v2419
    %v3188 = vadd.f32 %v1652, %v2420
    %v3189 = vadd.f32 %v1653, %v2421
    %v3190 = vadd.f32 %v1654, %v2422
    %v3191 = vadd.f32 %v1655, %v2423
    %v3192 = vadd.f32 %v1656, %v2424
    %v3193 = vadd.f32 %v1657, %v2425
    %v3194 = vadd.f32 %v1658, %v2426
    %v3195 = vadd.f32 %v1659, %v2427
    %v3196 = vadd.f32 %v1660, %v2428
    %v3197 = vadd.f32 %v1661, %v2429
    %v3198 = vadd.f32 %v1662, %v2430
    %v3199 = vadd.f32 %v1663, %v2431
    %v3200 = vadd.f32 %v1664, %v2432
    %v3201 = vadd.f32 %v1665, %v2433
    %v3202 = vadd.f32 %v1666, %v2434
    %v3203 = vadd.f32 %v1667, %v2435
    %v3204 = vadd.f32 %v1668, %v2436
    %v3205 = vadd.f32 %v1669, %v2437
    %v3206 = vadd.f32 %v1670, %v2438
    %v3207 = vadd.f32 %v1671, %v2439
    %v3208 = vadd.f32 %v1672, %v2440
    %v3209 = vadd.f32 %v1673, %v2441
    %v3210 = vadd.f32 %v1674, %v2442
    %v3211 = vadd.f32 %v1675, %v2443
    %v3212 = vadd.f32 %v1676, %v2444
    %v3213 = vadd.f32 %v1677, %v2445
    %v3214 = vadd.f32 %v1678, %v2446
    %v3215 = vadd.f32 %v1679, %v2447
    %v3216 = vadd.f32 %v1680, %v2448
    %v3217 = vadd.f32 %v1681, %v2449
    %v3218 = vadd.f32 %v1682, %v2450
    %v3219 = vadd.f32 %v1683, %v2451
    %v3220 = vadd.f32 %v1684, %v2452
    %v3221 = vadd.f32 %v1685, %v2453
    %v3222 = vadd.f32 %v1686, %v2454
    %v3223 = vadd.f32 %v1687, %v2455
    %v3224 = vadd.f32 %v1688, %v2456
    %v3225 = vadd.f32 %v1689, %v2457
    %v3226 = vadd.f32 %v1690, %v2458
    %v3227 = vadd.f32 %v1691, %v2459
    %v3228 = vadd.f32 %v1692, %v2460
    %v3229 = vadd.f32 %v1693, %v2461
    %v3230 = vadd.f32 %v1694, %v2462
    %v3231 = vadd.f32 %v1695, %v2463
    %v3232 = vadd.f32 %v1696, %v2464
    %v3233 = vadd.f32 %v1697, %v2465
    %v3234 = vadd.f32 %v1698, %v2466
    %v3235 = vadd.f32 %v1699, %v2467
    %v3236 = vadd.f32 %v1700, %v2468
    %v3237 = vadd.f32 %v1701, %v2469
    %v3238 = vadd.f32 %v1702, %v2470
    %v3239 = vadd.f32 %v1703, %v2471
    %v3240 = vadd.f32 %v1704, %v2472
    %v3241 = vadd.f32 %v1705, %v2473
    %v3242 = vadd.f32 %v1706, %v2474
    %v3243 = vadd.f32 %v1707, %v2475
    %v3244 = vadd.f32 %v1708, %v2476
    %v3245 = vadd.f32 %v1709, %v2477
    %v3246 = vadd.f32 %v1710, %v2478
    %v3247 = vadd.f32 %v1711, %v2479
    %v3248 = vadd.f32 %v1712, %v2480
    %v3249 = vadd.f32 %v1713, %v2481
    %v3250 = vadd.f32 %v1714, %v2482
    %v3251 = vadd.f32 %v1715, %v2483
    %v3252 = vadd.f32 %v1716, %v2484
    %v3253 = vadd.f32 %v1717, %v2485
    %v3254 = vadd.f32 %v1718, %v2486
    %v3255 = vadd.f32 %v1719, %v2487
    %v3256 = vadd.f32 %v1720, %v2488
    %v3257 = vadd.f32 %v1721, %v2489
    %v3258 = vadd.f32 %v1722, %v2490
    %v3259 = vadd.f32 %v1723, %v2491
    %v3260 = vadd.f32 %v1724, %v2492
    %v3261 = vadd.f32 %v1725, %v2493
    %v3262 = vadd.f32 %v1726, %v2494
    %v3263 = vadd.f32 %v1727, %v2495
    %v3264 = vadd.f32 %v1728, %v2496
    %v3265 = vadd.f32 %v1729, %v2497
    %v3266 = vadd.f32 %v1730, %v2498
    %v3267 = vadd.f32 %v1731, %v2499
    %v3268 = vadd.f32 %v1732, %v2500
    %v3269 = vadd.f32 %v1733, %v2501
    %v3270 = vadd.f32 %v1734, %v2502
    %v3271 = vadd.f32 %v1735, %v2503
    %v3272 = vadd.f32 %v1736, %v2504
    %v3273 = vadd.f32 %v1737, %v2505
    %v3274 = vadd.f32 %v1738, %v2506
    %v3275 = vadd.f32 %v1739, %v2507
    %v3276 = vadd.f32 %v1740, %v2508
    %v3277 = vadd.f32 %v1741, %v2509
    %v3278 = vadd.f32 %v1742, %v2510
    %v3279 = vadd.f32 %v1743, %v2511
    %v3280 = vadd.f32 %v1744, %v2512
    %v3281 = vadd.f32 %v1745, %v2513
    %v3282 = vadd.f32 %v1746, %v2514
    %v3283 = vadd.f32 %v1747, %v2515
    %v3284 = vadd.f32 %v1748, %v2516
    %v3285 = vadd.f32 %v1749, %v2517
    %v3286 = vadd.f32 %v1750, %v2518
    %v3287 = vadd.f32 %v1751, %v2519
    %v3288 = vadd.f32 %v1752, %v2520
    %v3289 = vadd.f32 %v1753, %v2521
    %v3290 = vadd.f32 %v1754, %v2522
    %v3291 = vadd.f32 %v1755, %v2523
    %v3292 = vadd.f32 %v1756, %v2524
    %v3293 = vadd.f32 %v1757, %v2525
    %v3294 = vadd.f32 %v1758, %v2526
    %v3295 = vadd.f32 %v1759, %v2527
    %v3296 = vadd.f32 %v1760, %v2528
    %v3297 = vadd.f32 %v1761, %v2529
    %v3298 = vadd.f32 %v1762, %v2530
    %v3299 = vadd.f32 %v1763, %v2531
    %v3300 = vadd.f32 %v1764, %v2532
    %v3301 = vadd.f32 %v1765, %v2533
    %v3302 = vadd.f32 %v1766, %v2534
    %v3303 = vadd.f32 %v1767, %v2535
    %v3304 = vadd.f32 %v1768, %v2536
    %v3305 = vadd.f32 %v1769, %v2537
    %v3306 = vadd.f32 %v1770, %v2538
    %v3307 = vadd.f32 %v1771, %v2539
    %v3308 = vadd.f32 %v1772, %v2540
    %v3309 = vadd.f32 %v1773, %v2541
    %v3310 = vadd.f32 %v1774, %v2542
    %v3311 = vadd.f32 %v1775, %v2543
    %v3312 = vadd.f32 %v1776, %v2544
    %v3313 = vadd.f32 %v1777, %v2545
    %v3314 = vadd.f32 %v1778, %v2546
    %v3315 = vadd.f32 %v1779, %v2547
    %v3316 = vadd.f32 %v1780, %v2548
    %v3317 = vadd.f32 %v1781, %v2549
    %v3318 = vadd.f32 %v1782, %v2550
    %v3319 = vadd.f32 %v1783, %v2551
    %v3320 = vadd.f32 %v1784, %v2552
    %v3321 = vadd.f32 %v1785, %v2553
    %v3322 = vadd.f32 %v1786, %v2554
    %v3323 = vadd.f32 %v1787, %v2555
    %v3324 = vadd.f32 %v1788, %v2556
    %v3325 = vadd.f32 %v1789, %v2557
    %v3326 = vadd.f32 %v1790, %v2558
    %v3327 = vadd.f32 %v1791, %v2559
    %v3328 = vadd.f32 %v1792, %v2560
    %v3329 = vadd.f32 %v1793, %v2561
    %v3330 = vadd.f32 %v1794, %v2562
    %v3331 = vadd.f32 %v1795, %v2563
    %v3332 = vadd.f32 %v1796, %v2564
    %v3333 = vadd.f32 %v1797, %v2565
    %v3334 = vadd.f32 %v1798, %v2566
    %v3335 = vadd.f32 %v1799, %v2567
    %v3336 = vadd.f32 %v1800, %v2568
    %v3337 = vadd.f32 %v1801, %v2569
    %v3338 = vadd.f32 %v1802, %v2570
    %v3339 = vadd.f32 %v1803, %v2571
    %v3340 = vadd.f32 %v1804, %v2572
    %v3341 = vadd.f32 %v1805, %v2573
    %v3342 = vadd.f32 %v1806, %v2574
    %v3343 = vadd.f32 %v1807, %v2575
    %v3344 = vadd.f32 %v1808, %v2576
    %v3345 = vadd.f32 %v1809, %v2577
    %v3346 = vadd.f32 %v1810, %v2578
    %v3347 = vadd.f32 %v1811, %v2579
    %v3348 = vadd.f32 %v1812, %v2580
    %v3349 = vadd.f32 %v1813, %v2581
    %v3350 = vadd.f32 %v1814, %v2582
    %v3351 = vadd.f32 %v1815, %v2583
    %v3352 = vadd.f32 %v1816, %v2584
    %v3353 = vadd.f32 %v1817, %v2585
    %v3354 = vadd.f32 %v1818, %v2586
    %v3355 = vadd.f32 %v1819, %v2587
    %v3356 = vadd.f32 %v1820, %v2588
    %v3357 = vadd.f32 %v1821, %v2589
    %v3358 = vadd.f32 %v1822, %v2590
    %v3359 = vadd.f32 %v1823, %v2591
    %v3360 = vadd.f32 %v1824, %v2592
    %v3361 = vadd.f32 %v1825, %v2593
    %v3362 = vadd.f32 %v1826, %v2594
    %v3363 = vadd.f32 %v1827, %v2595
    %v3364 = vadd.f32 %v1828, %v2596
    %v3365 = vadd.f32 %v1829, %v2597
    %v3366 = vadd.f32 %v1830, %v2598
    %v3367 = vadd.f32 %v1831, %v2599
    %v3368 = vadd.f32 %v1832, %v2600
    %v3369 = vadd.f32 %v1833, %v2601
    %v3370 = vadd.f32 %v1834, %v2602
    %v3371 = vadd.f32 %v1835, %v2603
    %v3372 = vadd.f32 %v1836, %v2604
    %v3373 = vadd.f32 %v1837, %v2605
    %v3374 = vadd.f32 %v1838, %v2606
    %v3375 = vadd.f32 %v1839, %v2607
    %v3376 = vadd.f32 %v1840, %v2608
    %v3377 = vadd.f32 %v1841, %v2609
    %v3378 = vadd.f32 %v1842, %v2610
    %v3379 = vadd.f32 %v1843, %v2611
    %v3380 = vadd.f32 %v1844, %v2612
    %v3381 = vadd.f32 %v1845, %v2613
    %v3382 = vadd.f32 %v1846, %v2614
    %v3383 = vadd.f32 %v1847, %v2615
    %v3384 = vadd.f32 %v1848, %v2616
    %v3385 = vadd.f32 %v1849, %v2617
    %v3386 = vadd.f32 %v1850, %v2618
    %v3387 = vadd.f32 %v1851, %v2619
    %v3388 = vadd.f32 %v1852, %v2620
    %v3389 = vadd.f32 %v1853, %v2621
    %v3390 = vadd.f32 %v1854, %v2622
    %v3391 = vadd.f32 %v1855, %v2623
    %v3392 = vadd.f32 %v1856, %v2624
    %v3393 = vadd.f32 %v1857, %v2625
    %v3394 = vadd.f32 %v1858, %v2626
    %v3395 = vadd.f32 %v1859, %v2627
    %v3396 = vadd.f32 %v1860, %v2628
    %v3397 = vadd.f32 %v1861, %v2629
    %v3398 = vadd.f32 %v1862, %v2630
    %v3399 = vadd.f32 %v1863, %v2631
    %v3400 = vadd.f32 %v1864, %v2632
    %v3401 = vadd.f32 %v1865, %v2633
    %v3402 = vadd.f32 %v1866, %v2634
    %v3403 = vadd.f32 %v1867, %v2635
    %v3404 = vadd.f32 %v1868, %v2636
    %v3405 = vadd.f32 %v1869, %v2637
    %v3406 = vadd.f32 %v1870, %v2638
    %v3407 = vadd.f32 %v1871, %v2639
    %v3408 = vadd.f32 %v1872, %v2640
    %v3409 = vadd.f32 %v1873, %v2641
    %v3410 = vadd.f32 %v1874, %v2642
    %v3411 = vadd.f32 %v1875, %v2643
    %v3412 = vadd.f32 %v1876, %v2644
    %v3413 = vadd.f32 %v1877, %v2645
    %v3414 = vadd.f32 %v1878, %v2646
    %v3415 = vadd.f32 %v1879, %v2647
    %v3416 = vadd.f32 %v1880, %v2648
    %v3417 = vadd.f32 %v1881, %v2649
    %v3418 = vadd.f32 %v1882, %v2650
    %v3419 = vadd.f32 %v1883, %v2651
    %v3420 = vadd.f32 %v1884, %v2652
    %v3421 = vadd.f32 %v1885, %v2653
    %v3422 = vadd.f32 %v1886, %v2654
    %v3423 = vadd.f32 %v1887, %v2655
    %v3424 = vadd.f32 %v1888, %v2656
    %v3425 = vadd.f32 %v1889, %v2657
    %v3426 = vadd.f32 %v1890, %v2658
    %v3427 = vadd.f32 %v1891, %v2659
    %v3428 = vadd.f32 %v1892, %v2660
    %v3429 = vadd.f32 %v1893, %v2661
    %v3430 = vadd.f32 %v1894, %v2662
    %v3431 = vadd.f32 %v1895, %v2663
    %v3432 = vadd.f32 %v1896, %v2664
    %v3433 = vadd.f32 %v1897, %v2665
    %v3434 = vadd.f32 %v1898, %v2666
    %v3435 = vadd.f32 %v1899, %v2667
    %v3436 = vadd.f32 %v1900, %v2668
    %v3437 = vadd.f32 %v1901, %v2669
    %v3438 = vadd.f32 %v1902, %v2670
    %v3439 = vadd.f32 %v1903, %v2671
    %v3440 = vadd.f32 %v1904, %v2672
    %v3441 = vadd.f32 %v1905, %v2673
    %v3442 = vadd.f32 %v1906, %v2674
    %v3443 = vadd.f32 %v1907, %v2675
    %v3444 = vadd.f32 %v1908, %v2676
    %v3445 = vadd.f32 %v1909, %v2677
    %v3446 = vadd.f32 %v1910, %v2678
    %v3447 = vadd.f32 %v1911, %v2679
    %v3448 = vadd.f32 %v1912, %v2680
    %v3449 = vadd.f32 %v1913, %v2681
    %v3450 = vadd.f32 %v1914, %v2682
    %v3451 = vadd.f32 %v1915, %v2683
    %v3452 = vadd.f32 %v1916, %v2684
    %v3453 = vadd.f32 %v1917, %v2685
    %v3454 = vadd.f32 %v1918, %v2686
    %v3455 = vadd.f32 %v1919, %v2687
    %v3456 = vadd.f32 %v1920, %v2688
    %v3457 = vadd.f32 %v1921, %v2689
    %v3458 = vadd.f32 %v1922, %v2690
    %v3459 = vadd.f32 %v1923, %v2691
    %v3460 = vadd.f32 %v1924, %v2692
    %v3461 = vadd.f32 %v1925, %v2693
    %v3462 = vadd.f32 %v1926, %v2694
    %v3463 = vadd.f32 %v1927, %v2695
    %v3464 = vadd.f32 %v1928, %v2696
    %v3465 = vadd.f32 %v1929, %v2697
    %v3466 = vadd.f32 %v1930, %v2698
    %v3467 = vadd.f32 %v1931, %v2699
    %v3468 = vadd.f32 %v1932, %v2700
    %v3469 = vadd.f32 %v1933, %v2701
    %v3470 = vadd.f32 %v1934, %v2702
    %v3471 = vadd.f32 %v1935, %v2703
    %v3472 = vadd.f32 %v1936, %v2704
    %v3473 = vadd.f32 %v1937, %v2705
    %v3474 = vadd.f32 %v1938, %v2706
    %v3475 = vadd.f32 %v1939, %v2707
    %v3476 = vadd.f32 %v1940, %v2708
    %v3477 = vadd.f32 %v1941, %v2709
    %v3478 = vadd.f32 %v1942, %v2710
    %v3479 = vadd.f32 %v1943, %v2711
    %v3480 = vadd.f32 %v1944, %v2712
    %v3481 = vadd.f32 %v1945, %v2713
    %v3482 = vadd.f32 %v1946, %v2714
    %v3483 = vadd.f32 %v1947, %v2715
    %v3484 = vadd.f32 %v1948, %v2716
    %v3485 = vadd.f32 %v1949, %v2717
    %v3486 = vadd.f32 %v1950, %v2718
    %v3487 = vadd.f32 %v1951, %v2719
    %v3488 = vadd.f32 %v1952, %v2720
    %v3489 = vadd.f32 %v1953, %v2721
    %v3490 = vadd.f32 %v1954, %v2722
    %v3491 = vadd.f32 %v1955, %v2723
    %v3492 = vadd.f32 %v1956, %v2724
    %v3493 = vadd.f32 %v1957, %v2725
    %v3494 = vadd.f32 %v1958, %v2726
    %v3495 = vadd.f32 %v1959, %v2727
    %v3496 = vadd.f32 %v1960, %v2728
    %v3497 = vadd.f32 %v1961, %v2729
    %v3498 = vadd.f32 %v1962, %v2730
    %v3499 = vadd.f32 %v1963, %v2731
    %v3500 = vadd.f32 %v1964, %v2732
    %v3501 = vadd.f32 %v1965, %v2733
    %v3502 = vadd.f32 %v1966, %v2734
    %v3503 = vadd.f32 %v1967, %v2735
    %v3504 = vadd.f32 %v1968, %v2736
    %v3505 = vadd.f32 %v1969, %v2737
    %v3506 = vadd.f32 %v1970, %v2738
    %v3507 = vadd.f32 %v1971, %v2739
    %v3508 = vadd.f32 %v1972, %v2740
    %v3509 = vadd.f32 %v1973, %v2741
    %v3510 = vadd.f32 %v1974, %v2742
    %v3511 = vadd.f32 %v1975, %v2743
    %v3512 = vadd.f32 %v1976, %v2744
    %v3513 = vadd.f32 %v1977, %v2745
    %v3514 = vadd.f32 %v1978, %v2746
    %v3515 = vadd.f32 %v1979, %v2747
    %v3516 = vadd.f32 %v1980, %v2748
    %v3517 = vadd.f32 %v1981, %v2749
    %v3518 = vadd.f32 %v1982, %v2750
    %v3519 = vadd.f32 %v1983, %v2751
    %v3520 = vadd.f32 %v1984, %v2752
    %v3521 = vadd.f32 %v1985, %v2753
    %v3522 = vadd.f32 %v1986, %v2754
    %v3523 = vadd.f32 %v1987, %v2755
    %v3524 = vadd.f32 %v1988, %v2756
    %v3525 = vadd.f32 %v1989, %v2757
    %v3526 = vadd.f32 %v1990, %v2758
    %v3527 = vadd.f32 %v1991, %v2759
    %v3528 = vadd.f32 %v1992, %v2760
    %v3529 = vadd.f32 %v1993, %v2761
    %v3530 = vadd.f32 %v1994, %v2762
    %v3531 = vadd.f32 %v1995, %v2763
    %v3532 = vadd.f32 %v1996, %v2764
    %v3533 = vadd.f32 %v1997, %v2765
    %v3534 = vadd.f32 %v1998, %v2766
    %v3535 = vadd.f32 %v1999, %v2767
    %v3536 = vadd.f32 %v2000, %v2768
    %v3537 = vadd.f32 %v2001, %v2769
    %v3538 = vadd.f32 %v2002, %v2770
    %v3539 = vadd.f32 %v2003, %v2771
    %v3540 = vadd.f32 %v2004, %v2772
    %v3541 = vadd.f32 %v2005, %v2773
    %v3542 = vadd.f32 %v2006, %v2774
    %v3543 = vadd.f32 %v2007, %v2775
    %v3544 = vadd.f32 %v2008, %v2776
    %v3545 = vadd.f32 %v2009, %v2777
    %v3546 = vadd.f32 %v2010, %v2778
    %v3547 = vadd.f32 %v2011, %v2779
    %v3548 = vadd.f32 %v2012, %v2780
    %v3549 = vadd.f32 %v2013, %v2781
    %v3550 = vadd.f32 %v2014, %v2782
    %v3551 = vadd.f32 %v2015, %v2783
    %v3552 = vadd.f32 %v2016, %v2784
    %v3553 = vadd.f32 %v2017, %v2785
    %v3554 = vadd.f32 %v2018, %v2786
    %v3555 = vadd.f32 %v2019, %v2787
    %v3556 = vadd.f32 %v2020, %v2788
    %v3557 = vadd.f32 %v2021, %v2789
    %v3558 = vadd.f32 %v2022, %v2790
    %v3559 = vadd.f32 %v2023, %v2791
    %v3560 = vadd.f32 %v2024, %v2792
    %v3561 = vadd.f32 %v2025, %v2793
    %v3562 = vadd.f32 %v2026, %v2794
    %v3563 = vadd.f32 %v2027, %v2795
    %v3564 = vadd.f32 %v2028, %v2796
    %v3565 = vadd.f32 %v2029, %v2797
    %v3566 = vadd.f32 %v2030, %v2798
    %v3567 = vadd.f32 %v2031, %v2799
    %v3568 = vadd.f32 %v2032, %v2800
    %v3569 = vadd.f32 %v2033, %v2801
    %v3570 = vadd.f32 %v2034, %v2802
    %v3571 = vadd.f32 %v2035, %v2803
    %v3572 = vadd.f32 %v2036, %v2804
    %v3573 = vadd.f32 %v2037, %v2805
    %v3574 = vadd.f32 %v2038, %v2806
    %v3575 = vadd.f32 %v2039, %v2807
    %v3576 = vadd.f32 %v2040, %v2808
    %v3577 = vadd.f32 %v2041, %v2809
    %v3578 = vadd.f32 %v2042, %v2810
    %v3579 = vadd.f32 %v2043, %v2811
    %v3580 = vadd.f32 %v2044, %v2812
    %v3581 = vadd.f32 %v2045, %v2813
    %v3582 = vadd.f32 %v2046, %v2814
    %v3583 = vadd.f32 %v2047, %v2815
    %v3584 = vadd.f32 %v2048, %v2816
    %v3585 = vadd.f32 %v2049, %v2817
    %v3586 = vadd.f32 %v2050, %v2818
    %v3587 = vadd.f32 %v2051, %v2819
    %v3588 = vadd.f32 %v2052, %v2820
    %v3589 = vadd.f32 %v2053, %v2821
    %v3590 = vadd.f32 %v2054, %v2822
    %v3591 = vadd.f32 %v2055, %v2823
    %v3592 = vadd.f32 %v2056, %v2824
    %v3593 = vadd.f32 %v2057, %v2825
    %v3594 = vadd.f32 %v2058, %v2826
    %v3595 = vadd.f32 %v2059, %v2827
    %v3596 = vadd.f32 %v2060, %v2828
    %v3597 = vadd.f32 %v2061, %v2829
    %v3598 = vadd.f32 %v2062, %v2830
    %v3599 = vadd.f32 %v2063, %v2831
    %v3600 = vadd.f32 %v2064, %v2832
    %v3601 = vadd.f32 %v2065, %v2833
    %v3602 = vadd.f32 %v2066, %v2834
    %v3603 = vadd.f32 %v2067, %v2835
    %v3604 = vadd.f32 %v2068, %v2836
    %v3605 = vadd.f32 %v2069, %v2837
    %v3606 = vadd.f32 %v2070, %v2838
    %v3607 = vadd.f32 %v2071, %v2839
    %v3608 = vadd.f32 %v2072, %v2840
    %v3609 = vadd.f32 %v2073, %v2841
    %v3610 = vadd.f32 %v2074, %v2842
    %v3611 = vadd.f32 %v2075, %v2843
    %v3612 = vadd.f32 %v2076, %v2844
    %v3613 = vadd.f32 %v2077, %v2845
    %v3614 = vadd.f32 %v2078, %v2846
    %v3615 = vadd.f32 %v2079, %v2847
    %v3616 = vadd.f32 %v2080, %v2848
    %v3617 = vadd.f32 %v2081, %v2849
    %v3618 = vadd.f32 %v2082, %v2850
    %v3619 = vadd.f32 %v2083, %v2851
    %v3620 = vadd.f32 %v2084, %v2852
    %v3621 = vadd.f32 %v2085, %v2853
    %v3622 = vadd.f32 %v2086, %v2854
    %v3623 = vadd.f32 %v2087, %v2855
    %v3624 = vadd.f32 %v2088, %v2856
    %v3625 = vadd.f32 %v2089, %v2857
    %v3626 = vadd.f32 %v2090, %v2858
    %v3627 = vadd.f32 %v2091, %v2859
    %v3628 = vadd.f32 %v2092, %v2860
    %v3629 = vadd.f32 %v2093, %v2861
    %v3630 = vadd.f32 %v2094, %v2862
    %v3631 = vadd.f32 %v2095, %v2863
    %v3632 = vadd.f32 %v2096, %v2864
    %v3633 = vadd.f32 %v2097, %v2865
    %v3634 = vadd.f32 %v2098, %v2866
    %v3635 = vadd.f32 %v2099, %v2867
    %v3636 = vadd.f32 %v2100, %v2868
    %v3637 = vadd.f32 %v2101, %v2869
    %v3638 = vadd.f32 %v2102, %v2870
    %v3639 = vadd.f32 %v2103, %v2871
    %v3640 = vadd.f32 %v2104, %v2872
    %v3641 = vadd.f32 %v2105, %v2873
    %v3642 = vadd.f32 %v2106, %v2874
    %v3643 = vadd.f32 %v2107, %v2875
    %v3644 = vadd.f32 %v2108, %v2876
    %v3645 = vadd.f32 %v2109, %v2877
    %v3646 = vadd.f32 %v2110, %v2878
    %v3647 = vadd.f32 %v2111, %v2879
    %v3648 = vadd.f32 %v2112, %v2880
    %v3649 = vadd.f32 %v2113, %v2881
    %v3650 = vadd.f32 %v2114, %v2882
    %v3651 = vadd.f32 %v2115, %v2883
    %v3652 = vadd.f32 %v2116, %v2884
    %v3653 = vadd.f32 %v2117, %v2885
    %v3654 = vadd.f32 %v2118, %v2886
    %v3655 = vadd.f32 %v2119, %v2887
    %v3656 = vadd.f32 %v2120, %v2888
    %v3657 = vadd.f32 %v2121, %v2889
    %v3658 = vadd.f32 %v2122, %v2890
    %v3659 = vadd.f32 %v2123, %v2891
    %v3660 = vadd.f32 %v2124, %v2892
    %v3661 = vadd.f32 %v2125, %v2893
    %v3662 = vadd.f32 %v2126, %v2894
    %v3663 = vadd.f32 %v2127, %v2895
    %v3664 = vadd.f32 %v2128, %v2896
    %v3665 = vadd.f32 %v2129, %v2897
    %v3666 = vadd.f32 %v2130, %v2898
    %v3667 = vadd.f32 %v2131, %v2899
    %v3668 = vadd.f32 %v2132, %v2900
    %v3669 = vadd.f32 %v2133, %v2901
    %v3670 = vadd.f32 %v2134, %v2902
    %v3671 = vadd.f32 %v2135, %v2903
    %v3672 = vadd.f32 %v2136, %v2904
    %v3673 = vadd.f32 %v2137, %v2905
    %v3674 = vadd.f32 %v2138, %v2906
    %v3675 = vadd.f32 %v2139, %v2907
    %v3676 = vadd.f32 %v2140, %v2908
    %v3677 = vadd.f32 %v2141, %v2909
    %v3678 = vadd.f32 %v2142, %v2910
    %v3679 = vadd.f32 %v2143, %v2911
    %v3680 = vadd.f32 %v2144, %v2912
    %v3681 = vadd.f32 %v2145, %v2913
    %v3682 = vadd.f32 %v2146, %v2914
    %v3683 = vadd.f32 %v2147, %v2915
    %v3684 = vadd.f32 %v2148, %v2916
    %v3685 = vadd.f32 %v2149, %v2917
    %v3686 = vadd.f32 %v2150, %v2918
    %v3687 = vadd.f32 %v2151, %v2919
    %v3688 = vadd.f32 %v2152, %v2920
    %v3689 = vadd.f32 %v2153, %v2921
    %v3690 = vadd.f32 %v2154, %v2922
    %v3691 = vadd.f32 %v2155, %v2923
    %v3692 = vadd.f32 %v2156, %v2924
    %v3693 = vadd.f32 %v2157, %v2925
    %v3694 = vadd.f32 %v2158, %v2926
    %v3695 = vadd.f32 %v2159, %v2927
    %v3696 = vadd.f32 %v2160, %v2928
    %v3697 = vadd.f32 %v2161, %v2929
    %v3698 = vadd.f32 %v2162, %v2930
    %v3699 = vadd.f32 %v2163, %v2931
    %v3700 = vadd.f32 %v2164, %v2932
    %v3701 = vadd.f32 %v2165, %v2933
    %v3702 = vadd.f32 %v2166, %v2934
    %v3703 = vadd.f32 %v2167, %v2935
    %v3704 = vadd.f32 %v2168, %v2936
    %v3705 = vadd.f32 %v2169, %v2937
    %v3706 = vadd.f32 %v2170, %v2938
    %v3707 = vadd.f32 %v2171, %v2939
    %v3708 = vadd.f32 %v2172, %v2940
    %v3709 = vadd.f32 %v2173, %v2941
    %v3710 = vadd.f32 %v2174, %v2942
    %v3711 = vadd.f32 %v2175, %v2943
    %v3712 = vadd.f32 %v2176, %v2944
    %v3713 = vadd.f32 %v2177, %v2945
    %v3714 = vadd.f32 %v2178, %v2946
    %v3715 = vadd.f32 %v2179, %v2947
    %v3716 = vadd.f32 %v2180, %v2948
    %v3717 = vadd.f32 %v2181, %v2949
    %v3718 = vadd.f32 %v2182, %v2950
    %v3719 = vadd.f32 %v2183, %v2951
    %v3720 = vadd.f32 %v2184, %v2952
    %v3721 = vadd.f32 %v2185, %v2953
    %v3722 = vadd.f32 %v2186, %v2954
    %v3723 = vadd.f32 %v2187, %v2955
    %v3724 = vadd.f32 %v2188, %v2956
    %v3725 = vadd.f32 %v2189, %v2957
    %v3726 = vadd.f32 %v2190, %v2958
    %v3727 = vadd.f32 %v2191, %v2959
    %v3728 = vadd.f32 %v2192, %v2960
    %v3729 = vadd.f32 %v2193, %v2961
    %v3730 = vadd.f32 %v2194, %v2962
    %v3731 = vadd.f32 %v2195, %v2963
    %v3732 = vadd.f32 %v2196, %v2964
    %v3733 = vadd.f32 %v2197, %v2965
    %v3734 = vadd.f32 %v2198, %v2966
    %v3735 = vadd.f32 %v2199, %v2967
    %v3736 = vadd.f32 %v2200, %v2968
    %v3737 = vadd.f32 %v2201, %v2969
    %v3738 = vadd.f32 %v2202, %v2970
    %v3739 = vadd.f32 %v2203, %v2971
    %v3740 = vadd.f32 %v2204, %v2972
    %v3741 = vadd.f32 %v2205, %v2973
    %v3742 = vadd.f32 %v2206, %v2974
    %v3743 = vadd.f32 %v2207, %v2975
    %v3744 = vadd.f32 %v2208, %v2976
    %v3745 = vadd.f32 %v2209, %v2977
    %v3746 = vadd.f32 %v2210, %v2978
    %v3747 = vadd.f32 %v2211, %v2979
    %v3748 = vadd.f32 %v2212, %v2980
    %v3749 = vadd.f32 %v2213, %v2981
    %v3750 = vadd.f32 %v2214, %v2982
    %v3751 = vadd.f32 %v2215, %v2983
    %v3752 = vadd.f32 %v2216, %v2984
    %v3753 = vadd.f32 %v2217, %v2985
    %v3754 = vadd.f32 %v2218, %v2986
    %v3755 = vadd.f32 %v2219, %v2987
    %v3756 = vadd.f32 %v2220, %v2988
    %v3757 = vadd.f32 %v2221, %v2989
    %v3758 = vadd.f32 %v2222, %v2990
    %v3759 = vadd.f32 %v2223, %v2991
    %v3760 = vadd.f32 %v2224, %v2992
    %v3761 = vadd.f32 %v2225, %v2993
    %v3762 = vadd.f32 %v2226, %v2994
    %v3763 = vadd.f32 %v2227, %v2995
    %v3764 = vadd.f32 %v2228, %v2996
    %v3765 = vadd.f32 %v2229, %v2997
    %v3766 = vadd.f32 %v2230, %v2998
    %v3767 = vadd.f32 %v2231, %v2999
    %v3768 = vadd.f32 %v2232, %v3000
    %v3769 = vadd.f32 %v2233, %v3001
    %v3770 = vadd.f32 %v2234, %v3002
    %v3771 = vadd.f32 %v2235, %v3003
    %v3772 = vadd.f32 %v2236, %v3004
    %v3773 = vadd.f32 %v2237, %v3005
    %v3774 = vadd.f32 %v2238, %v3006
    %v3775 = vadd.f32 %v2239, %v3007
    %v3776 = vadd.f32 %v2240, %v3008
    %v3777 = vadd.f32 %v2241, %v3009
    %v3778 = vadd.f32 %v2242, %v3010
    %v3779 = vadd.f32 %v2243, %v3011
    %v3780 = vadd.f32 %v2244, %v3012
    %v3781 = vadd.f32 %v2245, %v3013
    %v3782 = vadd.f32 %v2246, %v3014
    %v3783 = vadd.f32 %v2247, %v3015
    %v3784 = vadd.f32 %v2248, %v3016
    %v3785 = vadd.f32 %v2249, %v3017
    %v3786 = vadd.f32 %v2250, %v3018
    %v3787 = vadd.f32 %v2251, %v3019
    %v3788 = vadd.f32 %v2252, %v3020
    %v3789 = vadd.f32 %v2253, %v3021
    %v3790 = vadd.f32 %v2254, %v3022
    %v3791 = vadd.f32 %v2255, %v3023
    %v3792 = vadd.f32 %v2256, %v3024
    %v3793 = vadd.f32 %v2257, %v3025
    %v3794 = vadd.f32 %v2258, %v3026
    %v3795 = vadd.f32 %v2259, %v3027
    %v3796 = vadd.f32 %v2260, %v3028
    %v3797 = vadd.f32 %v2261, %v3029
    %v3798 = vadd.f32 %v2262, %v3030
    %v3799 = vadd.f32 %v2263, %v3031
    %v3800 = vadd.f32 %v2264, %v3032
    %v3801 = vadd.f32 %v2265, %v3033
    %v3802 = vadd.f32 %v2266, %v3034
    %v3803 = vadd.f32 %v2267, %v3035
    %v3804 = vadd.f32 %v2268, %v3036
    %v3805 = vadd.f32 %v2269, %v3037
    %v3806 = vadd.f32 %v2270, %v3038
    %v3807 = vadd.f32 %v2271, %v3039
    %v3808 = vadd.f32 %v2272, %v3040
    %v3809 = vadd.f32 %v2273, %v3041
    %v3810 = vadd.f32 %v2274, %v3042
    %v3811 = vadd.f32 %v2275, %v3043
    %v3812 = vadd.f32 %v2276, %v3044
    %v3813 = vadd.f32 %v2277, %v3045
    %v3814 = vadd.f32 %v2278, %v3046
    %v3815 = vadd.f32 %v2279, %v3047
    %v3816 = vadd.f32 %v2280, %v3048
    %v3817 = vadd.f32 %v2281, %v3049
    %v3818 = vadd.f32 %v2282, %v3050
    %v3819 = vadd.f32 %v2283, %v3051
    %v3820 = vadd.f32 %v2284, %v3052
    %v3821 = vadd.f32 %v2285, %v3053
    %v3822 = vadd.f32 %v2286, %v3054
    %v3823 = vadd.f32 %v2287, %v3055
    %v3824 = vadd.f32 %v2288, %v3056
    %v3825 = vadd.f32 %v2289, %v3057
    %v3826 = vadd.f32 %v2290, %v3058
    %v3827 = vadd.f32 %v2291, %v3059
    %v3828 = vadd.f32 %v2292, %v3060
    %v3829 = vadd.f32 %v2293, %v3061
    %v3830 = vadd.f32 %v2294, %v3062
    %v3831 = vadd.f32 %v2295, %v3063
    %v3832 = vadd.f32 %v2296, %v3064
    %v3833 = vadd.f32 %v2297, %v3065
    %v3834 = vadd.f32 %v2298, %v3066
    %v3835 = vadd.f32 %v2299, %v3067
    %v3836 = vadd.f32 %v2300, %v3068
    %v3837 = vadd.f32 %v2301, %v3069
    %v3838 = vadd.f32 %v2302, %v3070
    %v3839 = vadd.f32 %v2303, %v3071
    %v3840 = vadd.f32 %v2304, %v3072
    %v3841 = vadd.f32 %v2305, %v3073
    %v3842 = vadd.f32 %v2306, %v3074
    %v3843 = vadd.f32 %v2307, %v3075
    %v3844 = vadd.f32 %v2308, %v3076
    %v3845 = vadd.f32 %v2309, %v3077
    %v3846 = vadd.f32 %v2310, %v3078
    %v3847 = vadd.f32 %v2311, %v3079
    %v3848 = vadd.f32 %v2312, %v3080
    %v3849 = vadd.f32 %v2313, %v3081
    %v3850 = vadd.f32 %v2314, %v3082
    %v3851 = vadd.f32 %v2315, %v3083
    %v3852 = vadd.f32 %v2316, %v3084
    %v3853 = vadd.f32 %v2317, %v3085
    %v3854 = vadd.f32 %v2318, %v3086
    %v3855 = vadd.f32 %v2319, %v3087
    %v3856 = vadd.f32 %v2320, %v3088
    %v3857 = vadd.f32 %v2321, %v3089
    %v3858 = vadd.f32 %v2322, %v3090
    %v3859 = vadd.f32 %v2323, %v3091
    %v3860 = vadd.f32 %v2324, %v3092
    %v3861 = vadd.f32 %v2325, %v3093
    %v3862 = vadd.f32 %v2326, %v3094
    %v3863 = vadd.f32 %v2327, %v3095
    %v3864 = vadd.f32 %v2328, %v3096
    %v3865 = vadd.f32 %v2329, %v3097
    %v3866 = vadd.f32 %v2330, %v3098
    %v3867 = vadd.f32 %v2331, %v3099
    %v3868 = vadd.f32 %v2332, %v3100
    %v3869 = vadd.f32 %v2333, %v3101
    %v3870 = vadd.f32 %v2334, %v3102
    %v3871 = vadd.f32 %v2335, %v3103
    %v3872 = vadd.f32 %v2336, %v3104
    %v3873 = vadd.f32 %v2337, %v3105
    %v3874 = vadd.f32 %v2338, %v3106
    %v3875 = vadd.f32 %v2339, %v3107
    %v3876 = vadd.f32 %v2340, %v3108
    %v3877 = vadd.f32 %v2341, %v3109
    %v3878 = vadd.f32 %v2342, %v3110
    %v3879 = vadd.f32 %v2343, %v3111
    %v3880 = vadd.f32 %v2344, %v3112
    %v3881 = vadd.f32 %v2345, %v3113
    %v3882 = vadd.f32 %v2346, %v3114
    %v3883 = vadd.f32 %v2347, %v3115
    %v3884 = vadd.f32 %v2348, %v3116
    %v3885 = vadd.f32 %v2349, %v3117
    %v3886 = vadd.f32 %v2350, %v3118
    %v3887 = vadd.f32 %v2351, %v3119
    %v3888 = vadd.f32 %v2352, %v3120
    %v3889 = vadd.f32 %v2353, %v3121
    %v3890 = vadd.f32 %v2354, %v3122
    %v3891 = vadd.f32 %v2355, %v3123
    %v3892 = vadd.f32 %v2356, %v3124
    %v3893 = vadd.f32 %v2357, %v3125
    %v3894 = vadd.f32 %v2358, %v3126
    %v3895 = vadd.f32 %v2359, %v3127
    %v3896 = vadd.f32 %v2360, %v3128
    %v3897 = vadd.f32 %v2361, %v3129
    %v3898 = vadd.f32 %v2362, %v3130
    %v3899 = vadd.f32 %v2363, %v3131
    %v3900 = vadd.f32 %v2364, %v3132
    %v3901 = vadd.f32 %v2365, %v3133
    %3902 = vst [vmem:[#allocation8] sm:$0xff] %v3134
    %3903 = vst [vmem:[#allocation8 + $0x8] sm:$0xff] %v3135
    %3904 = vst [vmem:[#allocation8 + $0x10] sm:$0xff] %v3136
    %3905 = vst [vmem:[#allocation8 + $0x18] sm:$0xff] %v3137
    %3906 = vst [vmem:[#allocation8 + $0x20] sm:$0xff] %v3138
    %3907 = vst [vmem:[#allocation8 + $0x28] sm:$0xff] %v3139
    %3908 = vst [vmem:[#allocation8 + $0x30] sm:$0xff] %v3140
    %3909 = vst [vmem:[#allocation8 + $0x38] sm:$0xff] %v3141
    %3910 = vst [vmem:[#allocation8 + $0x40] sm:$0xff] %v3142
    %3911 = vst [vmem:[#allocation8 + $0x48] sm:$0xff] %v3143
    %3912 = vst [vmem:[#allocation8 + $0x50] sm:$0xff] %v3144
    %3913 = vst [vmem:[#allocation8 + $0x58] sm:$0xff] %v3145
    %3914 = vst [vmem:[#allocation8 + $0x60] sm:$0xff] %v3146
    %3915 = vst [vmem:[#allocation8 + $0x68] sm:$0xff] %v3147
    %3916 = vst [vmem:[#allocation8 + $0x70] sm:$0xff] %v3148
    %3917 = vst [vmem:[#allocation8 + $0x78] sm:$0xff] %v3149
    %3918 = vst [vmem:[#allocation8 + $0x80] sm:$0xff] %v3150
    %3919 = vst [vmem:[#allocation8 + $0x88] sm:$0xff] %v3151
    %3920 = vst [vmem:[#allocation8 + $0x90] sm:$0xff] %v3152
    %3921 = vst [vmem:[#allocation8 + $0x98] sm:$0xff] %v3153
    %3922 = vst [vmem:[#allocation8 + $0xa0] sm:$0xff] %v3154
    %3923 = vst [vmem:[#allocation8 + $0xa8] sm:$0xff] %v3155
    %3924 = vst [vmem:[#allocation8 + $0xb0] sm:$0xff] %v3156
    %3925 = vst [vmem:[#allocation8 + $0xb8] sm:$0xff] %v3157
    %3926 = vst [vmem:[#allocation8 + $0xc0] sm:$0xff] %v3158
    %3927 = vst [vmem:[#allocation8 + $0xc8] sm:$0xff] %v3159
    %3928 = vst [vmem:[#allocation8 + $0xd0] sm:$0xff] %v3160
    %3929 = vst [vmem:[#allocation8 + $0xd8] sm:$0xff] %v3161
    %3930 = vst [vmem:[#allocation8 + $0xe0] sm:$0xff] %v3162
    %3931 = vst [vmem:[#allocation8 + $0xe8] sm:$0xff] %v3163
    %3932 = vst [vmem:[#allocation8 + $0xf0] sm:$0xff] %v3164
    %3933 = vst [vmem:[#allocation8 + $0xf8] sm:$0xff] %v3165
    %3934 = vst [vmem:[#allocation8 + $0x100] sm:$0xff] %v3166
    %3935 = vst [vmem:[#allocation8 + $0x108] sm:$0xff] %v3167
    %3936 = vst [vmem:[#allocation8 + $0x110] sm:$0xff] %v3168
    %3937 = vst [vmem:[#allocation8 + $0x118] sm:$0xff] %v3169
    %3938 = vst [vmem:[#allocation8 + $0x120] sm:$0xff] %v3170
    %3939 = vst [vmem:[#allocation8 + $0x128] sm:$0xff] %v3171
    %3940 = vst [vmem:[#allocation8 + $0x130] sm:$0xff] %v3172
    %3941 = vst [vmem:[#allocation8 + $0x138] sm:$0xff] %v3173
    %3942 = vst [vmem:[#allocation8 + $0x140] sm:$0xff] %v3174
    %3943 = vst [vmem:[#allocation8 + $0x148] sm:$0xff] %v3175
    %3944 = vst [vmem:[#allocation8 + $0x150] sm:$0xff] %v3176
    %3945 = vst [vmem:[#allocation8 + $0x158] sm:$0xff] %v3177
    %3946 = vst [vmem:[#allocation8 + $0x160] sm:$0xff] %v3178
    %3947 = vst [vmem:[#allocation8 + $0x168] sm:$0xff] %v3179
    %3948 = vst [vmem:[#allocation8 + $0x170] sm:$0xff] %v3180
    %3949 = vst [vmem:[#allocation8 + $0x178] sm:$0xff] %v3181
    %3950 = vst [vmem:[#allocation8 + $0x180] sm:$0xff] %v3182
    %3951 = vst [vmem:[#allocation8 + $0x188] sm:$0xff] %v3183
    %3952 = vst [vmem:[#allocation8 + $0x190] sm:$0xff] %v3184
    %3953 = vst [vmem:[#allocation8 + $0x198] sm:$0xff] %v3185
    %3954 = vst [vmem:[#allocation8 + $0x1a0] sm:$0xff] %v3186
    %3955 = vst [vmem:[#allocation8 + $0x1a8] sm:$0xff] %v3187
    %3956 = vst [vmem:[#allocation8 + $0x1b0] sm:$0xff] %v3188
    %3957 = vst [vmem:[#allocation8 + $0x1b8] sm:$0xff] %v3189
    %3958 = vst [vmem:[#allocation8 + $0x1c0] sm:$0xff] %v3190
    %3959 = vst [vmem:[#allocation8 + $0x1c8] sm:$0xff] %v3191
    %3960 = vst [vmem:[#allocation8 + $0x1d0] sm:$0xff] %v3192
    %3961 = vst [vmem:[#allocation8 + $0x1d8] sm:$0xff] %v3193
    %3962 = vst [vmem:[#allocation8 + $0x1e0] sm:$0xff] %v3194
    %3963 = vst [vmem:[#allocation8 + $0x1e8] sm:$0xff] %v3195
    %3964 = vst [vmem:[#allocation8 + $0x1f0] sm:$0xff] %v3196
    %3965 = vst [vmem:[#allocation8 + $0x1f8] sm:$0xff] %v3197
    %3966 = vst [vmem:[#allocation8 + $0x200] sm:$0xff] %v3198
    %3967 = vst [vmem:[#allocation8 + $0x208] sm:$0xff] %v3199
    %3968 = vst [vmem:[#allocation8 + $0x210] sm:$0xff] %v3200
    %3969 = vst [vmem:[#allocation8 + $0x218] sm:$0xff] %v3201
    %3970 = vst [vmem:[#allocation8 + $0x220] sm:$0xff] %v3202
    %3971 = vst [vmem:[#allocation8 + $0x228] sm:$0xff] %v3203
    %3972 = vst [vmem:[#allocation8 + $0x230] sm:$0xff] %v3204
    %3973 = vst [vmem:[#allocation8 + $0x238] sm:$0xff] %v3205
    %3974 = vst [vmem:[#allocation8 + $0x240] sm:$0xff] %v3206
    %3975 = vst [vmem:[#allocation8 + $0x248] sm:$0xff] %v3207
    %3976 = vst [vmem:[#allocation8 + $0x250] sm:$0xff] %v3208
    %3977 = vst [vmem:[#allocation8 + $0x258] sm:$0xff] %v3209
    %3978 = vst [vmem:[#allocation8 + $0x260] sm:$0xff] %v3210
    %3979 = vst [vmem:[#allocation8 + $0x268] sm:$0xff] %v3211
    %3980 = vst [vmem:[#allocation8 + $0x270] sm:$0xff] %v3212
    %3981 = vst [vmem:[#allocation8 + $0x278] sm:$0xff] %v3213
    %3982 = vst [vmem:[#allocation8 + $0x280] sm:$0xff] %v3214
    %3983 = vst [vmem:[#allocation8 + $0x288] sm:$0xff] %v3215
    %3984 = vst [vmem:[#allocation8 + $0x290] sm:$0xff] %v3216
    %3985 = vst [vmem:[#allocation8 + $0x298] sm:$0xff] %v3217
    %3986 = vst [vmem:[#allocation8 + $0x2a0] sm:$0xff] %v3218
    %3987 = vst [vmem:[#allocation8 + $0x2a8] sm:$0xff] %v3219
    %3988 = vst [vmem:[#allocation8 + $0x2b0] sm:$0xff] %v3220
    %3989 = vst [vmem:[#allocation8 + $0x2b8] sm:$0xff] %v3221
    %3990 = vst [vmem:[#allocation8 + $0x2c0] sm:$0xff] %v3222
    %3991 = vst [vmem:[#allocation8 + $0x2c8] sm:$0xff] %v3223
    %3992 = vst [vmem:[#allocation8 + $0x2d0] sm:$0xff] %v3224
    %3993 = vst [vmem:[#allocation8 + $0x2d8] sm:$0xff] %v3225
    %3994 = vst [vmem:[#allocation8 + $0x2e0] sm:$0xff] %v3226
    %3995 = vst [vmem:[#allocation8 + $0x2e8] sm:$0xff] %v3227
    %3996 = vst [vmem:[#allocation8 + $0x2f0] sm:$0xff] %v3228
    %3997 = vst [vmem:[#allocation8 + $0x2f8] sm:$0xff] %v3229
    %3998 = vst [vmem:[#allocation8 + $0x300] sm:$0xff] %v3230
    %3999 = vst [vmem:[#allocation8 + $0x308] sm:$0xff] %v3231
    %4000 = vst [vmem:[#allocation8 + $0x310] sm:$0xff] %v3232
    %4001 = vst [vmem:[#allocation8 + $0x318] sm:$0xff] %v3233
    %4002 = vst [vmem:[#allocation8 + $0x320] sm:$0xff] %v3234
    %4003 = vst [vmem:[#allocation8 + $0x328] sm:$0xff] %v3235
    %4004 = vst [vmem:[#allocation8 + $0x330] sm:$0xff] %v3236
    %4005 = vst [vmem:[#allocation8 + $0x338] sm:$0xff] %v3237
    %4006 = vst [vmem:[#allocation8 + $0x340] sm:$0xff] %v3238
    %4007 = vst [vmem:[#allocation8 + $0x348] sm:$0xff] %v3239
    %4008 = vst [vmem:[#allocation8 + $0x350] sm:$0xff] %v3240
    %4009 = vst [vmem:[#allocation8 + $0x358] sm:$0xff] %v3241
    %4010 = vst [vmem:[#allocation8 + $0x360] sm:$0xff] %v3242
    %4011 = vst [vmem:[#allocation8 + $0x368] sm:$0xff] %v3243
    %4012 = vst [vmem:[#allocation8 + $0x370] sm:$0xff] %v3244
    %4013 = vst [vmem:[#allocation8 + $0x378] sm:$0xff] %v3245
    %4014 = vst [vmem:[#allocation8 + $0x380] sm:$0xff] %v3246
    %4015 = vst [vmem:[#allocation8 + $0x388] sm:$0xff] %v3247
    %4016 = vst [vmem:[#allocation8 + $0x390] sm:$0xff] %v3248
    %4017 = vst [vmem:[#allocation8 + $0x398] sm:$0xff] %v3249
    %4018 = vst [vmem:[#allocation8 + $0x3a0] sm:$0xff] %v3250
    %4019 = vst [vmem:[#allocation8 + $0x3a8] sm:$0xff] %v3251
    %4020 = vst [vmem:[#allocation8 + $0x3b0] sm:$0xff] %v3252
    %4021 = vst [vmem:[#allocation8 + $0x3b8] sm:$0xff] %v3253
    %4022 = vst [vmem:[#allocation8 + $0x3c0] sm:$0xff] %v3254
    %4023 = vst [vmem:[#allocation8 + $0x3c8] sm:$0xff] %v3255
    %4024 = vst [vmem:[#allocation8 + $0x3d0] sm:$0xff] %v3256
    %4025 = vst [vmem:[#allocation8 + $0x3d8] sm:$0xff] %v3257
    %4026 = vst [vmem:[#allocation8 + $0x3e0] sm:$0xff] %v3258
    %4027 = vst [vmem:[#allocation8 + $0x3e8] sm:$0xff] %v3259
    %4028 = vst [vmem:[#allocation8 + $0x3f0] sm:$0xff] %v3260
    %4029 = vst [vmem:[#allocation8 + $0x3f8] sm:$0xff] %v3261
    %4030 = vst [vmem:[#allocation8 + $0x400] sm:$0xff] %v3262
    %4031 = vst [vmem:[#allocation8 + $0x408] sm:$0xff] %v3263
    %4032 = vst [vmem:[#allocation8 + $0x410] sm:$0xff] %v3264
    %4033 = vst [vmem:[#allocation8 + $0x418] sm:$0xff] %v3265
    %4034 = vst [vmem:[#allocation8 + $0x420] sm:$0xff] %v3266
    %4035 = vst [vmem:[#allocation8 + $0x428] sm:$0xff] %v3267
    %4036 = vst [vmem:[#allocation8 + $0x430] sm:$0xff] %v3268
    %4037 = vst [vmem:[#allocation8 + $0x438] sm:$0xff] %v3269
    %4038 = vst [vmem:[#allocation8 + $0x440] sm:$0xff] %v3270
    %4039 = vst [vmem:[#allocation8 + $0x448] sm:$0xff] %v3271
    %4040 = vst [vmem:[#allocation8 + $0x450] sm:$0xff] %v3272
    %4041 = vst [vmem:[#allocation8 + $0x458] sm:$0xff] %v3273
    %4042 = vst [vmem:[#allocation8 + $0x460] sm:$0xff] %v3274
    %4043 = vst [vmem:[#allocation8 + $0x468] sm:$0xff] %v3275
    %4044 = vst [vmem:[#allocation8 + $0x470] sm:$0xff] %v3276
    %4045 = vst [vmem:[#allocation8 + $0x478] sm:$0xff] %v3277
    %4046 = vst [vmem:[#allocation8 + $0x480] sm:$0xff] %v3278
    %4047 = vst [vmem:[#allocation8 + $0x488] sm:$0xff] %v3279
    %4048 = vst [vmem:[#allocation8 + $0x490] sm:$0xff] %v3280
    %4049 = vst [vmem:[#allocation8 + $0x498] sm:$0xff] %v3281
    %4050 = vst [vmem:[#allocation8 + $0x4a0] sm:$0xff] %v3282
    %4051 = vst [vmem:[#allocation8 + $0x4a8] sm:$0xff] %v3283
    %4052 = vst [vmem:[#allocation8 + $0x4b0] sm:$0xff] %v3284
    %4053 = vst [vmem:[#allocation8 + $0x4b8] sm:$0xff] %v3285
    %4054 = vst [vmem:[#allocation8 + $0x4c0] sm:$0xff] %v3286
    %4055 = vst [vmem:[#allocation8 + $0x4c8] sm:$0xff] %v3287
    %4056 = vst [vmem:[#allocation8 + $0x4d0] sm:$0xff] %v3288
    %4057 = vst [vmem:[#allocation8 + $0x4d8] sm:$0xff] %v3289
    %4058 = vst [vmem:[#allocation8 + $0x4e0] sm:$0xff] %v3290
    %4059 = vst [vmem:[#allocation8 + $0x4e8] sm:$0xff] %v3291
    %4060 = vst [vmem:[#allocation8 + $0x4f0] sm:$0xff] %v3292
    %4061 = vst [vmem:[#allocation8 + $0x4f8] sm:$0xff] %v3293
    %4062 = vst [vmem:[#allocation8 + $0x500] sm:$0xff] %v3294
    %4063 = vst [vmem:[#allocation8 + $0x508] sm:$0xff] %v3295
    %4064 = vst [vmem:[#allocation8 + $0x510] sm:$0xff] %v3296
    %4065 = vst [vmem:[#allocation8 + $0x518] sm:$0xff] %v3297
    %4066 = vst [vmem:[#allocation8 + $0x520] sm:$0xff] %v3298
    %4067 = vst [vmem:[#allocation8 + $0x528] sm:$0xff] %v3299
    %4068 = vst [vmem:[#allocation8 + $0x530] sm:$0xff] %v3300
    %4069 = vst [vmem:[#allocation8 + $0x538] sm:$0xff] %v3301
    %4070 = vst [vmem:[#allocation8 + $0x540] sm:$0xff] %v3302
    %4071 = vst [vmem:[#allocation8 + $0x548] sm:$0xff] %v3303
    %4072 = vst [vmem:[#allocation8 + $0x550] sm:$0xff] %v3304
    %4073 = vst [vmem:[#allocation8 + $0x558] sm:$0xff] %v3305
    %4074 = vst [vmem:[#allocation8 + $0x560] sm:$0xff] %v3306
    %4075 = vst [vmem:[#allocation8 + $0x568] sm:$0xff] %v3307
    %4076 = vst [vmem:[#allocation8 + $0x570] sm:$0xff] %v3308
    %4077 = vst [vmem:[#allocation8 + $0x578] sm:$0xff] %v3309
    %4078 = vst [vmem:[#allocation8 + $0x580] sm:$0xff] %v3310
    %4079 = vst [vmem:[#allocation8 + $0x588] sm:$0xff] %v3311
    %4080 = vst [vmem:[#allocation8 + $0x590] sm:$0xff] %v3312
    %4081 = vst [vmem:[#allocation8 + $0x598] sm:$0xff] %v3313
    %4082 = vst [vmem:[#allocation8 + $0x5a0] sm:$0xff] %v3314
    %4083 = vst [vmem:[#allocation8 + $0x5a8] sm:$0xff] %v3315
    %4084 = vst [vmem:[#allocation8 + $0x5b0] sm:$0xff] %v3316
    %4085 = vst [vmem:[#allocation8 + $0x5b8] sm:$0xff] %v3317
    %4086 = vst [vmem:[#allocation8 + $0x5c0] sm:$0xff] %v3318
    %4087 = vst [vmem:[#allocation8 + $0x5c8] sm:$0xff] %v3319
    %4088 = vst [vmem:[#allocation8 + $0x5d0] sm:$0xff] %v3320
    %4089 = vst [vmem:[#allocation8 + $0x5d8] sm:$0xff] %v3321
    %4090 = vst [vmem:[#allocation8 + $0x5e0] sm:$0xff] %v3322
    %4091 = vst [vmem:[#allocation8 + $0x5e8] sm:$0xff] %v3323
    %4092 = vst [vmem:[#allocation8 + $0x5f0] sm:$0xff] %v3324
    %4093 = vst [vmem:[#allocation8 + $0x5f8] sm:$0xff] %v3325
    %4094 = vst [vmem:[#allocation8 + $0x600] sm:$0xff] %v3326
    %4095 = vst [vmem:[#allocation8 + $0x608] sm:$0xff] %v3327
    %4096 = vst [vmem:[#allocation8 + $0x610] sm:$0xff] %v3328
    %4097 = vst [vmem:[#allocation8 + $0x618] sm:$0xff] %v3329
    %4098 = vst [vmem:[#allocation8 + $0x620] sm:$0xff] %v3330
    %4099 = vst [vmem:[#allocation8 + $0x628] sm:$0xff] %v3331
    %4100 = vst [vmem:[#allocation8 + $0x630] sm:$0xff] %v3332
    %4101 = vst [vmem:[#allocation8 + $0x638] sm:$0xff] %v3333
    %4102 = vst [vmem:[#allocation8 + $0x640] sm:$0xff] %v3334
    %4103 = vst [vmem:[#allocation8 + $0x648] sm:$0xff] %v3335
    %4104 = vst [vmem:[#allocation8 + $0x650] sm:$0xff] %v3336
    %4105 = vst [vmem:[#allocation8 + $0x658] sm:$0xff] %v3337
    %4106 = vst [vmem:[#allocation8 + $0x660] sm:$0xff] %v3338
    %4107 = vst [vmem:[#allocation8 + $0x668] sm:$0xff] %v3339
    %4108 = vst [vmem:[#allocation8 + $0x670] sm:$0xff] %v3340
    %4109 = vst [vmem:[#allocation8 + $0x678] sm:$0xff] %v3341
    %4110 = vst [vmem:[#allocation8 + $0x680] sm:$0xff] %v3342
    %4111 = vst [vmem:[#allocation8 + $0x688] sm:$0xff] %v3343
    %4112 = vst [vmem:[#allocation8 + $0x690] sm:$0xff] %v3344
    %4113 = vst [vmem:[#allocation8 + $0x698] sm:$0xff] %v3345
    %4114 = vst [vmem:[#allocation8 + $0x6a0] sm:$0xff] %v3346
    %4115 = vst [vmem:[#allocation8 + $0x6a8] sm:$0xff] %v3347
    %4116 = vst [vmem:[#allocation8 + $0x6b0] sm:$0xff] %v3348
    %4117 = vst [vmem:[#allocation8 + $0x6b8] sm:$0xff] %v3349
    %4118 = vst [vmem:[#allocation8 + $0x6c0] sm:$0xff] %v3350
    %4119 = vst [vmem:[#allocation8 + $0x6c8] sm:$0xff] %v3351
    %4120 = vst [vmem:[#allocation8 + $0x6d0] sm:$0xff] %v3352
    %4121 = vst [vmem:[#allocation8 + $0x6d8] sm:$0xff] %v3353
    %4122 = vst [vmem:[#allocation8 + $0x6e0] sm:$0xff] %v3354
    %4123 = vst [vmem:[#allocation8 + $0x6e8] sm:$0xff] %v3355
    %4124 = vst [vmem:[#allocation8 + $0x6f0] sm:$0xff] %v3356
    %4125 = vst [vmem:[#allocation8 + $0x6f8] sm:$0xff] %v3357
    %4126 = vst [vmem:[#allocation8 + $0x700] sm:$0xff] %v3358
    %4127 = vst [vmem:[#allocation8 + $0x708] sm:$0xff] %v3359
    %4128 = vst [vmem:[#allocation8 + $0x710] sm:$0xff] %v3360
    %4129 = vst [vmem:[#allocation8 + $0x718] sm:$0xff] %v3361
    %4130 = vst [vmem:[#allocation8 + $0x720] sm:$0xff] %v3362
    %4131 = vst [vmem:[#allocation8 + $0x728] sm:$0xff] %v3363
    %4132 = vst [vmem:[#allocation8 + $0x730] sm:$0xff] %v3364
    %4133 = vst [vmem:[#allocation8 + $0x738] sm:$0xff] %v3365
    %4134 = vst [vmem:[#allocation8 + $0x740] sm:$0xff] %v3366
    %4135 = vst [vmem:[#allocation8 + $0x748] sm:$0xff] %v3367
    %4136 = vst [vmem:[#allocation8 + $0x750] sm:$0xff] %v3368
    %4137 = vst [vmem:[#allocation8 + $0x758] sm:$0xff] %v3369
    %4138 = vst [vmem:[#allocation8 + $0x760] sm:$0xff] %v3370
    %4139 = vst [vmem:[#allocation8 + $0x768] sm:$0xff] %v3371
    %4140 = vst [vmem:[#allocation8 + $0x770] sm:$0xff] %v3372
    %4141 = vst [vmem:[#allocation8 + $0x778] sm:$0xff] %v3373
    %4142 = vst [vmem:[#allocation8 + $0x780] sm:$0xff] %v3374
    %4143 = vst [vmem:[#allocation8 + $0x788] sm:$0xff] %v3375
    %4144 = vst [vmem:[#allocation8 + $0x790] sm:$0xff] %v3376
    %4145 = vst [vmem:[#allocation8 + $0x798] sm:$0xff] %v3377
    %4146 = vst [vmem:[#allocation8 + $0x7a0] sm:$0xff] %v3378
    %4147 = vst [vmem:[#allocation8 + $0x7a8] sm:$0xff] %v3379
    %4148 = vst [vmem:[#allocation8 + $0x7b0] sm:$0xff] %v3380
    %4149 = vst [vmem:[#allocation8 + $0x7b8] sm:$0xff] %v3381
    %4150 = vst [vmem:[#allocation8 + $0x7c0] sm:$0xff] %v3382
    %4151 = vst [vmem:[#allocation8 + $0x7c8] sm:$0xff] %v3383
    %4152 = vst [vmem:[#allocation8 + $0x7d0] sm:$0xff] %v3384
    %4153 = vst [vmem:[#allocation8 + $0x7d8] sm:$0xff] %v3385
    %4154 = vst [vmem:[#allocation8 + $0x7e0] sm:$0xff] %v3386
    %4155 = vst [vmem:[#allocation8 + $0x7e8] sm:$0xff] %v3387
    %4156 = vst [vmem:[#allocation8 + $0x7f0] sm:$0xff] %v3388
    %4157 = vst [vmem:[#allocation8 + $0x7f8] sm:$0xff] %v3389
    %4158 = vst [vmem:[#allocation8 + $0x800] sm:$0xff] %v3390
    %4159 = vst [vmem:[#allocation8 + $0x808] sm:$0xff] %v3391
    %4160 = vst [vmem:[#allocation8 + $0x810] sm:$0xff] %v3392
    %4161 = vst [vmem:[#allocation8 + $0x818] sm:$0xff] %v3393
    %4162 = vst [vmem:[#allocation8 + $0x820] sm:$0xff] %v3394
    %4163 = vst [vmem:[#allocation8 + $0x828] sm:$0xff] %v3395
    %4164 = vst [vmem:[#allocation8 + $0x830] sm:$0xff] %v3396
    %4165 = vst [vmem:[#allocation8 + $0x838] sm:$0xff] %v3397
    %4166 = vst [vmem:[#allocation8 + $0x840] sm:$0xff] %v3398
    %4167 = vst [vmem:[#allocation8 + $0x848] sm:$0xff] %v3399
    %4168 = vst [vmem:[#allocation8 + $0x850] sm:$0xff] %v3400
    %4169 = vst [vmem:[#allocation8 + $0x858] sm:$0xff] %v3401
    %4170 = vst [vmem:[#allocation8 + $0x860] sm:$0xff] %v3402
    %4171 = vst [vmem:[#allocation8 + $0x868] sm:$0xff] %v3403
    %4172 = vst [vmem:[#allocation8 + $0x870] sm:$0xff] %v3404
    %4173 = vst [vmem:[#allocation8 + $0x878] sm:$0xff] %v3405
    %4174 = vst [vmem:[#allocation8 + $0x880] sm:$0xff] %v3406
    %4175 = vst [vmem:[#allocation8 + $0x888] sm:$0xff] %v3407
    %4176 = vst [vmem:[#allocation8 + $0x890] sm:$0xff] %v3408
    %4177 = vst [vmem:[#allocation8 + $0x898] sm:$0xff] %v3409
    %4178 = vst [vmem:[#allocation8 + $0x8a0] sm:$0xff] %v3410
    %4179 = vst [vmem:[#allocation8 + $0x8a8] sm:$0xff] %v3411
    %4180 = vst [vmem:[#allocation8 + $0x8b0] sm:$0xff] %v3412
    %4181 = vst [vmem:[#allocation8 + $0x8b8] sm:$0xff] %v3413
    %4182 = vst [vmem:[#allocation8 + $0x8c0] sm:$0xff] %v3414
    %4183 = vst [vmem:[#allocation8 + $0x8c8] sm:$0xff] %v3415
    %4184 = vst [vmem:[#allocation8 + $0x8d0] sm:$0xff] %v3416
    %4185 = vst [vmem:[#allocation8 + $0x8d8] sm:$0xff] %v3417
    %4186 = vst [vmem:[#allocation8 + $0x8e0] sm:$0xff] %v3418
    %4187 = vst [vmem:[#allocation8 + $0x8e8] sm:$0xff] %v3419
    %4188 = vst [vmem:[#allocation8 + $0x8f0] sm:$0xff] %v3420
    %4189 = vst [vmem:[#allocation8 + $0x8f8] sm:$0xff] %v3421
    %4190 = vst [vmem:[#allocation8 + $0x900] sm:$0xff] %v3422
    %4191 = vst [vmem:[#allocation8 + $0x908] sm:$0xff] %v3423
    %4192 = vst [vmem:[#allocation8 + $0x910] sm:$0xff] %v3424
    %4193 = vst [vmem:[#allocation8 + $0x918] sm:$0xff] %v3425
    %4194 = vst [vmem:[#allocation8 + $0x920] sm:$0xff] %v3426
    %4195 = vst [vmem:[#allocation8 + $0x928] sm:$0xff] %v3427
    %4196 = vst [vmem:[#allocation8 + $0x930] sm:$0xff] %v3428
    %4197 = vst [vmem:[#allocation8 + $0x938] sm:$0xff] %v3429
    %4198 = vst [vmem:[#allocation8 + $0x940] sm:$0xff] %v3430
    %4199 = vst [vmem:[#allocation8 + $0x948] sm:$0xff] %v3431
    %4200 = vst [vmem:[#allocation8 + $0x950] sm:$0xff] %v3432
    %4201 = vst [vmem:[#allocation8 + $0x958] sm:$0xff] %v3433
    %4202 = vst [vmem:[#allocation8 + $0x960] sm:$0xff] %v3434
    %4203 = vst [vmem:[#allocation8 + $0x968] sm:$0xff] %v3435
    %4204 = vst [vmem:[#allocation8 + $0x970] sm:$0xff] %v3436
    %4205 = vst [vmem:[#allocation8 + $0x978] sm:$0xff] %v3437
    %4206 = vst [vmem:[#allocation8 + $0x980] sm:$0xff] %v3438
    %4207 = vst [vmem:[#allocation8 + $0x988] sm:$0xff] %v3439
    %4208 = vst [vmem:[#allocation8 + $0x990] sm:$0xff] %v3440
    %4209 = vst [vmem:[#allocation8 + $0x998] sm:$0xff] %v3441
    %4210 = vst [vmem:[#allocation8 + $0x9a0] sm:$0xff] %v3442
    %4211 = vst [vmem:[#allocation8 + $0x9a8] sm:$0xff] %v3443
    %4212 = vst [vmem:[#allocation8 + $0x9b0] sm:$0xff] %v3444
    %4213 = vst [vmem:[#allocation8 + $0x9b8] sm:$0xff] %v3445
    %4214 = vst [vmem:[#allocation8 + $0x9c0] sm:$0xff] %v3446
    %4215 = vst [vmem:[#allocation8 + $0x9c8] sm:$0xff] %v3447
    %4216 = vst [vmem:[#allocation8 + $0x9d0] sm:$0xff] %v3448
    %4217 = vst [vmem:[#allocation8 + $0x9d8] sm:$0xff] %v3449
    %4218 = vst [vmem:[#allocation8 + $0x9e0] sm:$0xff] %v3450
    %4219 = vst [vmem:[#allocation8 + $0x9e8] sm:$0xff] %v3451
    %4220 = vst [vmem:[#allocation8 + $0x9f0] sm:$0xff] %v3452
    %4221 = vst [vmem:[#allocation8 + $0x9f8] sm:$0xff] %v3453
    %4222 = vst [vmem:[#allocation8 + $0xa00] sm:$0xff] %v3454
    %4223 = vst [vmem:[#allocation8 + $0xa08] sm:$0xff] %v3455
    %4224 = vst [vmem:[#allocation8 + $0xa10] sm:$0xff] %v3456
    %4225 = vst [vmem:[#allocation8 + $0xa18] sm:$0xff] %v3457
    %4226 = vst [vmem:[#allocation8 + $0xa20] sm:$0xff] %v3458
    %4227 = vst [vmem:[#allocation8 + $0xa28] sm:$0xff] %v3459
    %4228 = vst [vmem:[#allocation8 + $0xa30] sm:$0xff] %v3460
    %4229 = vst [vmem:[#allocation8 + $0xa38] sm:$0xff] %v3461
    %4230 = vst [vmem:[#allocation8 + $0xa40] sm:$0xff] %v3462
    %4231 = vst [vmem:[#allocation8 + $0xa48] sm:$0xff] %v3463
    %4232 = vst [vmem:[#allocation8 + $0xa50] sm:$0xff] %v3464
    %4233 = vst [vmem:[#allocation8 + $0xa58] sm:$0xff] %v3465
    %4234 = vst [vmem:[#allocation8 + $0xa60] sm:$0xff] %v3466
    %4235 = vst [vmem:[#allocation8 + $0xa68] sm:$0xff] %v3467
    %4236 = vst [vmem:[#allocation8 + $0xa70] sm:$0xff] %v3468
    %4237 = vst [vmem:[#allocation8 + $0xa78] sm:$0xff] %v3469
    %4238 = vst [vmem:[#allocation8 + $0xa80] sm:$0xff] %v3470
    %4239 = vst [vmem:[#allocation8 + $0xa88] sm:$0xff] %v3471
    %4240 = vst [vmem:[#allocation8 + $0xa90] sm:$0xff] %v3472
    %4241 = vst [vmem:[#allocation8 + $0xa98] sm:$0xff] %v3473
    %4242 = vst [vmem:[#allocation8 + $0xaa0] sm:$0xff] %v3474
    %4243 = vst [vmem:[#allocation8 + $0xaa8] sm:$0xff] %v3475
    %4244 = vst [vmem:[#allocation8 + $0xab0] sm:$0xff] %v3476
    %4245 = vst [vmem:[#allocation8 + $0xab8] sm:$0xff] %v3477
    %4246 = vst [vmem:[#allocation8 + $0xac0] sm:$0xff] %v3478
    %4247 = vst [vmem:[#allocation8 + $0xac8] sm:$0xff] %v3479
    %4248 = vst [vmem:[#allocation8 + $0xad0] sm:$0xff] %v3480
    %4249 = vst [vmem:[#allocation8 + $0xad8] sm:$0xff] %v3481
    %4250 = vst [vmem:[#allocation8 + $0xae0] sm:$0xff] %v3482
    %4251 = vst [vmem:[#allocation8 + $0xae8] sm:$0xff] %v3483
    %4252 = vst [vmem:[#allocation8 + $0xaf0] sm:$0xff] %v3484
    %4253 = vst [vmem:[#allocation8 + $0xaf8] sm:$0xff] %v3485
    %4254 = vst [vmem:[#allocation8 + $0xb00] sm:$0xff] %v3486
    %4255 = vst [vmem:[#allocation8 + $0xb08] sm:$0xff] %v3487
    %4256 = vst [vmem:[#allocation8 + $0xb10] sm:$0xff] %v3488
    %4257 = vst [vmem:[#allocation8 + $0xb18] sm:$0xff] %v3489
    %4258 = vst [vmem:[#allocation8 + $0xb20] sm:$0xff] %v3490
    %4259 = vst [vmem:[#allocation8 + $0xb28] sm:$0xff] %v3491
    %4260 = vst [vmem:[#allocation8 + $0xb30] sm:$0xff] %v3492
    %4261 = vst [vmem:[#allocation8 + $0xb38] sm:$0xff] %v3493
    %4262 = vst [vmem:[#allocation8 + $0xb40] sm:$0xff] %v3494
    %4263 = vst [vmem:[#allocation8 + $0xb48] sm:$0xff] %v3495
    %4264 = vst [vmem:[#allocation8 + $0xb50] sm:$0xff] %v3496
    %4265 = vst [vmem:[#allocation8 + $0xb58] sm:$0xff] %v3497
    %4266 = vst [vmem:[#allocation8 + $0xb60] sm:$0xff] %v3498
    %4267 = vst [vmem:[#allocation8 + $0xb68] sm:$0xff] %v3499
    %4268 = vst [vmem:[#allocation8 + $0xb70] sm:$0xff] %v3500
    %4269 = vst [vmem:[#allocation8 + $0xb78] sm:$0xff] %v3501
    %4270 = vst [vmem:[#allocation8 + $0xb80] sm:$0xff] %v3502
    %4271 = vst [vmem:[#allocation8 + $0xb88] sm:$0xff] %v3503
    %4272 = vst [vmem:[#allocation8 + $0xb90] sm:$0xff] %v3504
    %4273 = vst [vmem:[#allocation8 + $0xb98] sm:$0xff] %v3505
    %4274 = vst [vmem:[#allocation8 + $0xba0] sm:$0xff] %v3506
    %4275 = vst [vmem:[#allocation8 + $0xba8] sm:$0xff] %v3507
    %4276 = vst [vmem:[#allocation8 + $0xbb0] sm:$0xff] %v3508
    %4277 = vst [vmem:[#allocation8 + $0xbb8] sm:$0xff] %v3509
    %4278 = vst [vmem:[#allocation8 + $0xbc0] sm:$0xff] %v3510
    %4279 = vst [vmem:[#allocation8 + $0xbc8] sm:$0xff] %v3511
    %4280 = vst [vmem:[#allocation8 + $0xbd0] sm:$0xff] %v3512
    %4281 = vst [vmem:[#allocation8 + $0xbd8] sm:$0xff] %v3513
    %4282 = vst [vmem:[#allocation8 + $0xbe0] sm:$0xff] %v3514
    %4283 = vst [vmem:[#allocation8 + $0xbe8] sm:$0xff] %v3515
    %4284 = vst [vmem:[#allocation8 + $0xbf0] sm:$0xff] %v3516
    %4285 = vst [vmem:[#allocation8 + $0xbf8] sm:$0xff] %v3517
    %4286 = vst [vmem:[#allocation8 + $0xc00] sm:$0xff] %v3518
    %4287 = vst [vmem:[#allocation8 + $0xc08] sm:$0xff] %v3519
    %4288 = vst [vmem:[#allocation8 + $0xc10] sm:$0xff] %v3520
    %4289 = vst [vmem:[#allocation8 + $0xc18] sm:$0xff] %v3521
    %4290 = vst [vmem:[#allocation8 + $0xc20] sm:$0xff] %v3522
    %4291 = vst [vmem:[#allocation8 + $0xc28] sm:$0xff] %v3523
    %4292 = vst [vmem:[#allocation8 + $0xc30] sm:$0xff] %v3524
    %4293 = vst [vmem:[#allocation8 + $0xc38] sm:$0xff] %v3525
    %4294 = vst [vmem:[#allocation8 + $0xc40] sm:$0xff] %v3526
    %4295 = vst [vmem:[#allocation8 + $0xc48] sm:$0xff] %v3527
    %4296 = vst [vmem:[#allocation8 + $0xc50] sm:$0xff] %v3528
    %4297 = vst [vmem:[#allocation8 + $0xc58] sm:$0xff] %v3529
    %4298 = vst [vmem:[#allocation8 + $0xc60] sm:$0xff] %v3530
    %4299 = vst [vmem:[#allocation8 + $0xc68] sm:$0xff] %v3531
    %4300 = vst [vmem:[#allocation8 + $0xc70] sm:$0xff] %v3532
    %4301 = vst [vmem:[#allocation8 + $0xc78] sm:$0xff] %v3533
    %4302 = vst [vmem:[#allocation8 + $0xc80] sm:$0xff] %v3534
    %4303 = vst [vmem:[#allocation8 + $0xc88] sm:$0xff] %v3535
    %4304 = vst [vmem:[#allocation8 + $0xc90] sm:$0xff] %v3536
    %4305 = vst [vmem:[#allocation8 + $0xc98] sm:$0xff] %v3537
    %4306 = vst [vmem:[#allocation8 + $0xca0] sm:$0xff] %v3538
    %4307 = vst [vmem:[#allocation8 + $0xca8] sm:$0xff] %v3539
    %4308 = vst [vmem:[#allocation8 + $0xcb0] sm:$0xff] %v3540
    %4309 = vst [vmem:[#allocation8 + $0xcb8] sm:$0xff] %v3541
    %4310 = vst [vmem:[#allocation8 + $0xcc0] sm:$0xff] %v3542
    %4311 = vst [vmem:[#allocation8 + $0xcc8] sm:$0xff] %v3543
    %4312 = vst [vmem:[#allocation8 + $0xcd0] sm:$0xff] %v3544
    %4313 = vst [vmem:[#allocation8 + $0xcd8] sm:$0xff] %v3545
    %4314 = vst [vmem:[#allocation8 + $0xce0] sm:$0xff] %v3546
    %4315 = vst [vmem:[#allocation8 + $0xce8] sm:$0xff] %v3547
    %4316 = vst [vmem:[#allocation8 + $0xcf0] sm:$0xff] %v3548
    %4317 = vst [vmem:[#allocation8 + $0xcf8] sm:$0xff] %v3549
    %4318 = vst [vmem:[#allocation8 + $0xd00] sm:$0xff] %v3550
    %4319 = vst [vmem:[#allocation8 + $0xd08] sm:$0xff] %v3551
    %4320 = vst [vmem:[#allocation8 + $0xd10] sm:$0xff] %v3552
    %4321 = vst [vmem:[#allocation8 + $0xd18] sm:$0xff] %v3553
    %4322 = vst [vmem:[#allocation8 + $0xd20] sm:$0xff] %v3554
    %4323 = vst [vmem:[#allocation8 + $0xd28] sm:$0xff] %v3555
    %4324 = vst [vmem:[#allocation8 + $0xd30] sm:$0xff] %v3556
    %4325 = vst [vmem:[#allocation8 + $0xd38] sm:$0xff] %v3557
    %4326 = vst [vmem:[#allocation8 + $0xd40] sm:$0xff] %v3558
    %4327 = vst [vmem:[#allocation8 + $0xd48] sm:$0xff] %v3559
    %4328 = vst [vmem:[#allocation8 + $0xd50] sm:$0xff] %v3560
    %4329 = vst [vmem:[#allocation8 + $0xd58] sm:$0xff] %v3561
    %4330 = vst [vmem:[#allocation8 + $0xd60] sm:$0xff] %v3562
    %4331 = vst [vmem:[#allocation8 + $0xd68] sm:$0xff] %v3563
    %4332 = vst [vmem:[#allocation8 + $0xd70] sm:$0xff] %v3564
    %4333 = vst [vmem:[#allocation8 + $0xd78] sm:$0xff] %v3565
    %4334 = vst [vmem:[#allocation8 + $0xd80] sm:$0xff] %v3566
    %4335 = vst [vmem:[#allocation8 + $0xd88] sm:$0xff] %v3567
    %4336 = vst [vmem:[#allocation8 + $0xd90] sm:$0xff] %v3568
    %4337 = vst [vmem:[#allocation8 + $0xd98] sm:$0xff] %v3569
    %4338 = vst [vmem:[#allocation8 + $0xda0] sm:$0xff] %v3570
    %4339 = vst [vmem:[#allocation8 + $0xda8] sm:$0xff] %v3571
    %4340 = vst [vmem:[#allocation8 + $0xdb0] sm:$0xff] %v3572
    %4341 = vst [vmem:[#allocation8 + $0xdb8] sm:$0xff] %v3573
    %4342 = vst [vmem:[#allocation8 + $0xdc0] sm:$0xff] %v3574
    %4343 = vst [vmem:[#allocation8 + $0xdc8] sm:$0xff] %v3575
    %4344 = vst [vmem:[#allocation8 + $0xdd0] sm:$0xff] %v3576
    %4345 = vst [vmem:[#allocation8 + $0xdd8] sm:$0xff] %v3577
    %4346 = vst [vmem:[#allocation8 + $0xde0] sm:$0xff] %v3578
    %4347 = vst [vmem:[#allocation8 + $0xde8] sm:$0xff] %v3579
    %4348 = vst [vmem:[#allocation8 + $0xdf0] sm:$0xff] %v3580
    %4349 = vst [vmem:[#allocation8 + $0xdf8] sm:$0xff] %v3581
    %4350 = vst [vmem:[#allocation8 + $0xe00] sm:$0xff] %v3582
    %4351 = vst [vmem:[#allocation8 + $0xe08] sm:$0xff] %v3583
    %4352 = vst [vmem:[#allocation8 + $0xe10] sm:$0xff] %v3584
    %4353 = vst [vmem:[#allocation8 + $0xe18] sm:$0xff] %v3585
    %4354 = vst [vmem:[#allocation8 + $0xe20] sm:$0xff] %v3586
    %4355 = vst [vmem:[#allocation8 + $0xe28] sm:$0xff] %v3587
    %4356 = vst [vmem:[#allocation8 + $0xe30] sm:$0xff] %v3588
    %4357 = vst [vmem:[#allocation8 + $0xe38] sm:$0xff] %v3589
    %4358 = vst [vmem:[#allocation8 + $0xe40] sm:$0xff] %v3590
    %4359 = vst [vmem:[#allocation8 + $0xe48] sm:$0xff] %v3591
    %4360 = vst [vmem:[#allocation8 + $0xe50] sm:$0xff] %v3592
    %4361 = vst [vmem:[#allocation8 + $0xe58] sm:$0xff] %v3593
    %4362 = vst [vmem:[#allocation8 + $0xe60] sm:$0xff] %v3594
    %4363 = vst [vmem:[#allocation8 + $0xe68] sm:$0xff] %v3595
    %4364 = vst [vmem:[#allocation8 + $0xe70] sm:$0xff] %v3596
    %4365 = vst [vmem:[#allocation8 + $0xe78] sm:$0xff] %v3597
    %4366 = vst [vmem:[#allocation8 + $0xe80] sm:$0xff] %v3598
    %4367 = vst [vmem:[#allocation8 + $0xe88] sm:$0xff] %v3599
    %4368 = vst [vmem:[#allocation8 + $0xe90] sm:$0xff] %v3600
    %4369 = vst [vmem:[#allocation8 + $0xe98] sm:$0xff] %v3601
    %4370 = vst [vmem:[#allocation8 + $0xea0] sm:$0xff] %v3602
    %4371 = vst [vmem:[#allocation8 + $0xea8] sm:$0xff] %v3603
    %4372 = vst [vmem:[#allocation8 + $0xeb0] sm:$0xff] %v3604
    %4373 = vst [vmem:[#allocation8 + $0xeb8] sm:$0xff] %v3605
    %4374 = vst [vmem:[#allocation8 + $0xec0] sm:$0xff] %v3606
    %4375 = vst [vmem:[#allocation8 + $0xec8] sm:$0xff] %v3607
    %4376 = vst [vmem:[#allocation8 + $0xed0] sm:$0xff] %v3608
    %4377 = vst [vmem:[#allocation8 + $0xed8] sm:$0xff] %v3609
    %4378 = vst [vmem:[#allocation8 + $0xee0] sm:$0xff] %v3610
    %4379 = vst [vmem:[#allocation8 + $0xee8] sm:$0xff] %v3611
    %4380 = vst [vmem:[#allocation8 + $0xef0] sm:$0xff] %v3612
    %4381 = vst [vmem:[#allocation8 + $0xef8] sm:$0xff] %v3613
    %4382 = vst [vmem:[#allocation8 + $0xf00] sm:$0xff] %v3614
    %4383 = vst [vmem:[#allocation8 + $0xf08] sm:$0xff] %v3615
    %4384 = vst [vmem:[#allocation8 + $0xf10] sm:$0xff] %v3616
    %4385 = vst [vmem:[#allocation8 + $0xf18] sm:$0xff] %v3617
    %4386 = vst [vmem:[#allocation8 + $0xf20] sm:$0xff] %v3618
    %4387 = vst [vmem:[#allocation8 + $0xf28] sm:$0xff] %v3619
    %4388 = vst [vmem:[#allocation8 + $0xf30] sm:$0xff] %v3620
    %4389 = vst [vmem:[#allocation8 + $0xf38] sm:$0xff] %v3621
    %4390 = vst [vmem:[#allocation8 + $0xf40] sm:$0xff] %v3622
    %4391 = vst [vmem:[#allocation8 + $0xf48] sm:$0xff] %v3623
    %4392 = vst [vmem:[#allocation8 + $0xf50] sm:$0xff] %v3624
    %4393 = vst [vmem:[#allocation8 + $0xf58] sm:$0xff] %v3625
    %4394 = vst [vmem:[#allocation8 + $0xf60] sm:$0xff] %v3626
    %4395 = vst [vmem:[#allocation8 + $0xf68] sm:$0xff] %v3627
    %4396 = vst [vmem:[#allocation8 + $0xf70] sm:$0xff] %v3628
    %4397 = vst [vmem:[#allocation8 + $0xf78] sm:$0xff] %v3629
    %4398 = vst [vmem:[#allocation8 + $0xf80] sm:$0xff] %v3630
    %4399 = vst [vmem:[#allocation8 + $0xf88] sm:$0xff] %v3631
    %4400 = vst [vmem:[#allocation8 + $0xf90] sm:$0xff] %v3632
    %4401 = vst [vmem:[#allocation8 + $0xf98] sm:$0xff] %v3633
    %4402 = vst [vmem:[#allocation8 + $0xfa0] sm:$0xff] %v3634
    %4403 = vst [vmem:[#allocation8 + $0xfa8] sm:$0xff] %v3635
    %4404 = vst [vmem:[#allocation8 + $0xfb0] sm:$0xff] %v3636
    %4405 = vst [vmem:[#allocation8 + $0xfb8] sm:$0xff] %v3637
    %4406 = vst [vmem:[#allocation8 + $0xfc0] sm:$0xff] %v3638
    %4407 = vst [vmem:[#allocation8 + $0xfc8] sm:$0xff] %v3639
    %4408 = vst [vmem:[#allocation8 + $0xfd0] sm:$0xff] %v3640
    %4409 = vst [vmem:[#allocation8 + $0xfd8] sm:$0xff] %v3641
    %4410 = vst [vmem:[#allocation8 + $0xfe0] sm:$0xff] %v3642
    %4411 = vst [vmem:[#allocation8 + $0xfe8] sm:$0xff] %v3643
    %4412 = vst [vmem:[#allocation8 + $0xff0] sm:$0xff] %v3644
    %4413 = vst [vmem:[#allocation8 + $0xff8] sm:$0xff] %v3645
    %4414 = vst [vmem:[#allocation8 + $0x1000] sm:$0xff] %v3646
    %4415 = vst [vmem:[#allocation8 + $0x1008] sm:$0xff] %v3647
    %4416 = vst [vmem:[#allocation8 + $0x1010] sm:$0xff] %v3648
    %4417 = vst [vmem:[#allocation8 + $0x1018] sm:$0xff] %v3649
    %4418 = vst [vmem:[#allocation8 + $0x1020] sm:$0xff] %v3650
    %4419 = vst [vmem:[#allocation8 + $0x1028] sm:$0xff] %v3651
    %4420 = vst [vmem:[#allocation8 + $0x1030] sm:$0xff] %v3652
    %4421 = vst [vmem:[#allocation8 + $0x1038] sm:$0xff] %v3653
    %4422 = vst [vmem:[#allocation8 + $0x1040] sm:$0xff] %v3654
    %4423 = vst [vmem:[#allocation8 + $0x1048] sm:$0xff] %v3655
    %4424 = vst [vmem:[#allocation8 + $0x1050] sm:$0xff] %v3656
    %4425 = vst [vmem:[#allocation8 + $0x1058] sm:$0xff] %v3657
    %4426 = vst [vmem:[#allocation8 + $0x1060] sm:$0xff] %v3658
    %4427 = vst [vmem:[#allocation8 + $0x1068] sm:$0xff] %v3659
    %4428 = vst [vmem:[#allocation8 + $0x1070] sm:$0xff] %v3660
    %4429 = vst [vmem:[#allocation8 + $0x1078] sm:$0xff] %v3661
    %4430 = vst [vmem:[#allocation8 + $0x1080] sm:$0xff] %v3662
    %4431 = vst [vmem:[#allocation8 + $0x1088] sm:$0xff] %v3663
    %4432 = vst [vmem:[#allocation8 + $0x1090] sm:$0xff] %v3664
    %4433 = vst [vmem:[#allocation8 + $0x1098] sm:$0xff] %v3665
    %4434 = vst [vmem:[#allocation8 + $0x10a0] sm:$0xff] %v3666
    %4435 = vst [vmem:[#allocation8 + $0x10a8] sm:$0xff] %v3667
    %4436 = vst [vmem:[#allocation8 + $0x10b0] sm:$0xff] %v3668
    %4437 = vst [vmem:[#allocation8 + $0x10b8] sm:$0xff] %v3669
    %4438 = vst [vmem:[#allocation8 + $0x10c0] sm:$0xff] %v3670
    %4439 = vst [vmem:[#allocation8 + $0x10c8] sm:$0xff] %v3671
    %4440 = vst [vmem:[#allocation8 + $0x10d0] sm:$0xff] %v3672
    %4441 = vst [vmem:[#allocation8 + $0x10d8] sm:$0xff] %v3673
    %4442 = vst [vmem:[#allocation8 + $0x10e0] sm:$0xff] %v3674
    %4443 = vst [vmem:[#allocation8 + $0x10e8] sm:$0xff] %v3675
    %4444 = vst [vmem:[#allocation8 + $0x10f0] sm:$0xff] %v3676
    %4445 = vst [vmem:[#allocation8 + $0x10f8] sm:$0xff] %v3677
    %4446 = vst [vmem:[#allocation8 + $0x1100] sm:$0xff] %v3678
    %4447 = vst [vmem:[#allocation8 + $0x1108] sm:$0xff] %v3679
    %4448 = vst [vmem:[#allocation8 + $0x1110] sm:$0xff] %v3680
    %4449 = vst [vmem:[#allocation8 + $0x1118] sm:$0xff] %v3681
    %4450 = vst [vmem:[#allocation8 + $0x1120] sm:$0xff] %v3682
    %4451 = vst [vmem:[#allocation8 + $0x1128] sm:$0xff] %v3683
    %4452 = vst [vmem:[#allocation8 + $0x1130] sm:$0xff] %v3684
    %4453 = vst [vmem:[#allocation8 + $0x1138] sm:$0xff] %v3685
    %4454 = vst [vmem:[#allocation8 + $0x1140] sm:$0xff] %v3686
    %4455 = vst [vmem:[#allocation8 + $0x1148] sm:$0xff] %v3687
    %4456 = vst [vmem:[#allocation8 + $0x1150] sm:$0xff] %v3688
    %4457 = vst [vmem:[#allocation8 + $0x1158] sm:$0xff] %v3689
    %4458 = vst [vmem:[#allocation8 + $0x1160] sm:$0xff] %v3690
    %4459 = vst [vmem:[#allocation8 + $0x1168] sm:$0xff] %v3691
    %4460 = vst [vmem:[#allocation8 + $0x1170] sm:$0xff] %v3692
    %4461 = vst [vmem:[#allocation8 + $0x1178] sm:$0xff] %v3693
    %4462 = vst [vmem:[#allocation8 + $0x1180] sm:$0xff] %v3694
    %4463 = vst [vmem:[#allocation8 + $0x1188] sm:$0xff] %v3695
    %4464 = vst [vmem:[#allocation8 + $0x1190] sm:$0xff] %v3696
    %4465 = vst [vmem:[#allocation8 + $0x1198] sm:$0xff] %v3697
    %4466 = vst [vmem:[#allocation8 + $0x11a0] sm:$0xff] %v3698
    %4467 = vst [vmem:[#allocation8 + $0x11a8] sm:$0xff] %v3699
    %4468 = vst [vmem:[#allocation8 + $0x11b0] sm:$0xff] %v3700
    %4469 = vst [vmem:[#allocation8 + $0x11b8] sm:$0xff] %v3701
    %4470 = vst [vmem:[#allocation8 + $0x11c0] sm:$0xff] %v3702
    %4471 = vst [vmem:[#allocation8 + $0x11c8] sm:$0xff] %v3703
    %4472 = vst [vmem:[#allocation8 + $0x11d0] sm:$0xff] %v3704
    %4473 = vst [vmem:[#allocation8 + $0x11d8] sm:$0xff] %v3705
    %4474 = vst [vmem:[#allocation8 + $0x11e0] sm:$0xff] %v3706
    %4475 = vst [vmem:[#allocation8 + $0x11e8] sm:$0xff] %v3707
    %4476 = vst [vmem:[#allocation8 + $0x11f0] sm:$0xff] %v3708
    %4477 = vst [vmem:[#allocation8 + $0x11f8] sm:$0xff] %v3709
    %4478 = vst [vmem:[#allocation8 + $0x1200] sm:$0xff] %v3710
    %4479 = vst [vmem:[#allocation8 + $0x1208] sm:$0xff] %v3711
    %4480 = vst [vmem:[#allocation8 + $0x1210] sm:$0xff] %v3712
    %4481 = vst [vmem:[#allocation8 + $0x1218] sm:$0xff] %v3713
    %4482 = vst [vmem:[#allocation8 + $0x1220] sm:$0xff] %v3714
    %4483 = vst [vmem:[#allocation8 + $0x1228] sm:$0xff] %v3715
    %4484 = vst [vmem:[#allocation8 + $0x1230] sm:$0xff] %v3716
    %4485 = vst [vmem:[#allocation8 + $0x1238] sm:$0xff] %v3717
    %4486 = vst [vmem:[#allocation8 + $0x1240] sm:$0xff] %v3718
    %4487 = vst [vmem:[#allocation8 + $0x1248] sm:$0xff] %v3719
    %4488 = vst [vmem:[#allocation8 + $0x1250] sm:$0xff] %v3720
    %4489 = vst [vmem:[#allocation8 + $0x1258] sm:$0xff] %v3721
    %4490 = vst [vmem:[#allocation8 + $0x1260] sm:$0xff] %v3722
    %4491 = vst [vmem:[#allocation8 + $0x1268] sm:$0xff] %v3723
    %4492 = vst [vmem:[#allocation8 + $0x1270] sm:$0xff] %v3724
    %4493 = vst [vmem:[#allocation8 + $0x1278] sm:$0xff] %v3725
    %4494 = vst [vmem:[#allocation8 + $0x1280] sm:$0xff] %v3726
    %4495 = vst [vmem:[#allocation8 + $0x1288] sm:$0xff] %v3727
    %4496 = vst [vmem:[#allocation8 + $0x1290] sm:$0xff] %v3728
    %4497 = vst [vmem:[#allocation8 + $0x1298] sm:$0xff] %v3729
    %4498 = vst [vmem:[#allocation8 + $0x12a0] sm:$0xff] %v3730
    %4499 = vst [vmem:[#allocation8 + $0x12a8] sm:$0xff] %v3731
    %4500 = vst [vmem:[#allocation8 + $0x12b0] sm:$0xff] %v3732
    %4501 = vst [vmem:[#allocation8 + $0x12b8] sm:$0xff] %v3733
    %4502 = vst [vmem:[#allocation8 + $0x12c0] sm:$0xff] %v3734
    %4503 = vst [vmem:[#allocation8 + $0x12c8] sm:$0xff] %v3735
    %4504 = vst [vmem:[#allocation8 + $0x12d0] sm:$0xff] %v3736
    %4505 = vst [vmem:[#allocation8 + $0x12d8] sm:$0xff] %v3737
    %4506 = vst [vmem:[#allocation8 + $0x12e0] sm:$0xff] %v3738
    %4507 = vst [vmem:[#allocation8 + $0x12e8] sm:$0xff] %v3739
    %4508 = vst [vmem:[#allocation8 + $0x12f0] sm:$0xff] %v3740
    %4509 = vst [vmem:[#allocation8 + $0x12f8] sm:$0xff] %v3741
    %4510 = vst [vmem:[#allocation8 + $0x1300] sm:$0xff] %v3742
    %4511 = vst [vmem:[#allocation8 + $0x1308] sm:$0xff] %v3743
    %4512 = vst [vmem:[#allocation8 + $0x1310] sm:$0xff] %v3744
    %4513 = vst [vmem:[#allocation8 + $0x1318] sm:$0xff] %v3745
    %4514 = vst [vmem:[#allocation8 + $0x1320] sm:$0xff] %v3746
    %4515 = vst [vmem:[#allocation8 + $0x1328] sm:$0xff] %v3747
    %4516 = vst [vmem:[#allocation8 + $0x1330] sm:$0xff] %v3748
    %4517 = vst [vmem:[#allocation8 + $0x1338] sm:$0xff] %v3749
    %4518 = vst [vmem:[#allocation8 + $0x1340] sm:$0xff] %v3750
    %4519 = vst [vmem:[#allocation8 + $0x1348] sm:$0xff] %v3751
    %4520 = vst [vmem:[#allocation8 + $0x1350] sm:$0xff] %v3752
    %4521 = vst [vmem:[#allocation8 + $0x1358] sm:$0xff] %v3753
    %4522 = vst [vmem:[#allocation8 + $0x1360] sm:$0xff] %v3754
    %4523 = vst [vmem:[#allocation8 + $0x1368] sm:$0xff] %v3755
    %4524 = vst [vmem:[#allocation8 + $0x1370] sm:$0xff] %v3756
    %4525 = vst [vmem:[#allocation8 + $0x1378] sm:$0xff] %v3757
    %4526 = vst [vmem:[#allocation8 + $0x1380] sm:$0xff] %v3758
    %4527 = vst [vmem:[#allocation8 + $0x1388] sm:$0xff] %v3759
    %4528 = vst [vmem:[#allocation8 + $0x1390] sm:$0xff] %v3760
    %4529 = vst [vmem:[#allocation8 + $0x1398] sm:$0xff] %v3761
    %4530 = vst [vmem:[#allocation8 + $0x13a0] sm:$0xff] %v3762
    %4531 = vst [vmem:[#allocation8 + $0x13a8] sm:$0xff] %v3763
    %4532 = vst [vmem:[#allocation8 + $0x13b0] sm:$0xff] %v3764
    %4533 = vst [vmem:[#allocation8 + $0x13b8] sm:$0xff] %v3765
    %4534 = vst [vmem:[#allocation8 + $0x13c0] sm:$0xff] %v3766
    %4535 = vst [vmem:[#allocation8 + $0x13c8] sm:$0xff] %v3767
    %4536 = vst [vmem:[#allocation8 + $0x13d0] sm:$0xff] %v3768
    %4537 = vst [vmem:[#allocation8 + $0x13d8] sm:$0xff] %v3769
    %4538 = vst [vmem:[#allocation8 + $0x13e0] sm:$0xff] %v3770
    %4539 = vst [vmem:[#allocation8 + $0x13e8] sm:$0xff] %v3771
    %4540 = vst [vmem:[#allocation8 + $0x13f0] sm:$0xff] %v3772
    %4541 = vst [vmem:[#allocation8 + $0x13f8] sm:$0xff] %v3773
    %4542 = vst [vmem:[#allocation8 + $0x1400] sm:$0xff] %v3774
    %4543 = vst [vmem:[#allocation8 + $0x1408] sm:$0xff] %v3775
    %4544 = vst [vmem:[#allocation8 + $0x1410] sm:$0xff] %v3776
    %4545 = vst [vmem:[#allocation8 + $0x1418] sm:$0xff] %v3777
    %4546 = vst [vmem:[#allocation8 + $0x1420] sm:$0xff] %v3778
    %4547 = vst [vmem:[#allocation8 + $0x1428] sm:$0xff] %v3779
    %4548 = vst [vmem:[#allocation8 + $0x1430] sm:$0xff] %v3780
    %4549 = vst [vmem:[#allocation8 + $0x1438] sm:$0xff] %v3781
    %4550 = vst [vmem:[#allocation8 + $0x1440] sm:$0xff] %v3782
    %4551 = vst [vmem:[#allocation8 + $0x1448] sm:$0xff] %v3783
    %4552 = vst [vmem:[#allocation8 + $0x1450] sm:$0xff] %v3784
    %4553 = vst [vmem:[#allocation8 + $0x1458] sm:$0xff] %v3785
    %4554 = vst [vmem:[#allocation8 + $0x1460] sm:$0xff] %v3786
    %4555 = vst [vmem:[#allocation8 + $0x1468] sm:$0xff] %v3787
    %4556 = vst [vmem:[#allocation8 + $0x1470] sm:$0xff] %v3788
    %4557 = vst [vmem:[#allocation8 + $0x1478] sm:$0xff] %v3789
    %4558 = vst [vmem:[#allocation8 + $0x1480] sm:$0xff] %v3790
    %4559 = vst [vmem:[#allocation8 + $0x1488] sm:$0xff] %v3791
    %4560 = vst [vmem:[#allocation8 + $0x1490] sm:$0xff] %v3792
    %4561 = vst [vmem:[#allocation8 + $0x1498] sm:$0xff] %v3793
    %4562 = vst [vmem:[#allocation8 + $0x14a0] sm:$0xff] %v3794
    %4563 = vst [vmem:[#allocation8 + $0x14a8] sm:$0xff] %v3795
    %4564 = vst [vmem:[#allocation8 + $0x14b0] sm:$0xff] %v3796
    %4565 = vst [vmem:[#allocation8 + $0x14b8] sm:$0xff] %v3797
    %4566 = vst [vmem:[#allocation8 + $0x14c0] sm:$0xff] %v3798
    %4567 = vst [vmem:[#allocation8 + $0x14c8] sm:$0xff] %v3799
    %4568 = vst [vmem:[#allocation8 + $0x14d0] sm:$0xff] %v3800
    %4569 = vst [vmem:[#allocation8 + $0x14d8] sm:$0xff] %v3801
    %4570 = vst [vmem:[#allocation8 + $0x14e0] sm:$0xff] %v3802
    %4571 = vst [vmem:[#allocation8 + $0x14e8] sm:$0xff] %v3803
    %4572 = vst [vmem:[#allocation8 + $0x14f0] sm:$0xff] %v3804
    %4573 = vst [vmem:[#allocation8 + $0x14f8] sm:$0xff] %v3805
    %4574 = vst [vmem:[#allocation8 + $0x1500] sm:$0xff] %v3806
    %4575 = vst [vmem:[#allocation8 + $0x1508] sm:$0xff] %v3807
    %4576 = vst [vmem:[#allocation8 + $0x1510] sm:$0xff] %v3808
    %4577 = vst [vmem:[#allocation8 + $0x1518] sm:$0xff] %v3809
    %4578 = vst [vmem:[#allocation8 + $0x1520] sm:$0xff] %v3810
    %4579 = vst [vmem:[#allocation8 + $0x1528] sm:$0xff] %v3811
    %4580 = vst [vmem:[#allocation8 + $0x1530] sm:$0xff] %v3812
    %4581 = vst [vmem:[#allocation8 + $0x1538] sm:$0xff] %v3813
    %4582 = vst [vmem:[#allocation8 + $0x1540] sm:$0xff] %v3814
    %4583 = vst [vmem:[#allocation8 + $0x1548] sm:$0xff] %v3815
    %4584 = vst [vmem:[#allocation8 + $0x1550] sm:$0xff] %v3816
    %4585 = vst [vmem:[#allocation8 + $0x1558] sm:$0xff] %v3817
    %4586 = vst [vmem:[#allocation8 + $0x1560] sm:$0xff] %v3818
    %4587 = vst [vmem:[#allocation8 + $0x1568] sm:$0xff] %v3819
    %4588 = vst [vmem:[#allocation8 + $0x1570] sm:$0xff] %v3820
    %4589 = vst [vmem:[#allocation8 + $0x1578] sm:$0xff] %v3821
    %4590 = vst [vmem:[#allocation8 + $0x1580] sm:$0xff] %v3822
    %4591 = vst [vmem:[#allocation8 + $0x1588] sm:$0xff] %v3823
    %4592 = vst [vmem:[#allocation8 + $0x1590] sm:$0xff] %v3824
    %4593 = vst [vmem:[#allocation8 + $0x1598] sm:$0xff] %v3825
    %4594 = vst [vmem:[#allocation8 + $0x15a0] sm:$0xff] %v3826
    %4595 = vst [vmem:[#allocation8 + $0x15a8] sm:$0xff] %v3827
    %4596 = vst [vmem:[#allocation8 + $0x15b0] sm:$0xff] %v3828
    %4597 = vst [vmem:[#allocation8 + $0x15b8] sm:$0xff] %v3829
    %4598 = vst [vmem:[#allocation8 + $0x15c0] sm:$0xff] %v3830
    %4599 = vst [vmem:[#allocation8 + $0x15c8] sm:$0xff] %v3831
    %4600 = vst [vmem:[#allocation8 + $0x15d0] sm:$0xff] %v3832
    %4601 = vst [vmem:[#allocation8 + $0x15d8] sm:$0xff] %v3833
    %4602 = vst [vmem:[#allocation8 + $0x15e0] sm:$0xff] %v3834
    %4603 = vst [vmem:[#allocation8 + $0x15e8] sm:$0xff] %v3835
    %4604 = vst [vmem:[#allocation8 + $0x15f0] sm:$0xff] %v3836
    %4605 = vst [vmem:[#allocation8 + $0x15f8] sm:$0xff] %v3837
    %4606 = vst [vmem:[#allocation8 + $0x1600] sm:$0xff] %v3838
    %4607 = vst [vmem:[#allocation8 + $0x1608] sm:$0xff] %v3839
    %4608 = vst [vmem:[#allocation8 + $0x1610] sm:$0xff] %v3840
    %4609 = vst [vmem:[#allocation8 + $0x1618] sm:$0xff] %v3841
    %4610 = vst [vmem:[#allocation8 + $0x1620] sm:$0xff] %v3842
    %4611 = vst [vmem:[#allocation8 + $0x1628] sm:$0xff] %v3843
    %4612 = vst [vmem:[#allocation8 + $0x1630] sm:$0xff] %v3844
    %4613 = vst [vmem:[#allocation8 + $0x1638] sm:$0xff] %v3845
    %4614 = vst [vmem:[#allocation8 + $0x1640] sm:$0xff] %v3846
    %4615 = vst [vmem:[#allocation8 + $0x1648] sm:$0xff] %v3847
    %4616 = vst [vmem:[#allocation8 + $0x1650] sm:$0xff] %v3848
    %4617 = vst [vmem:[#allocation8 + $0x1658] sm:$0xff] %v3849
    %4618 = vst [vmem:[#allocation8 + $0x1660] sm:$0xff] %v3850
    %4619 = vst [vmem:[#allocation8 + $0x1668] sm:$0xff] %v3851
    %4620 = vst [vmem:[#allocation8 + $0x1670] sm:$0xff] %v3852
    %4621 = vst [vmem:[#allocation8 + $0x1678] sm:$0xff] %v3853
    %4622 = vst [vmem:[#allocation8 + $0x1680] sm:$0xff] %v3854
    %4623 = vst [vmem:[#allocation8 + $0x1688] sm:$0xff] %v3855
    %4624 = vst [vmem:[#allocation8 + $0x1690] sm:$0xff] %v3856
    %4625 = vst [vmem:[#allocation8 + $0x1698] sm:$0xff] %v3857
    %4626 = vst [vmem:[#allocation8 + $0x16a0] sm:$0xff] %v3858
    %4627 = vst [vmem:[#allocation8 + $0x16a8] sm:$0xff] %v3859
    %4628 = vst [vmem:[#allocation8 + $0x16b0] sm:$0xff] %v3860
    %4629 = vst [vmem:[#allocation8 + $0x16b8] sm:$0xff] %v3861
    %4630 = vst [vmem:[#allocation8 + $0x16c0] sm:$0xff] %v3862
    %4631 = vst [vmem:[#allocation8 + $0x16c8] sm:$0xff] %v3863
    %4632 = vst [vmem:[#allocation8 + $0x16d0] sm:$0xff] %v3864
    %4633 = vst [vmem:[#allocation8 + $0x16d8] sm:$0xff] %v3865
    %4634 = vst [vmem:[#allocation8 + $0x16e0] sm:$0xff] %v3866
    %4635 = vst [vmem:[#allocation8 + $0x16e8] sm:$0xff] %v3867
    %4636 = vst [vmem:[#allocation8 + $0x16f0] sm:$0xff] %v3868
    %4637 = vst [vmem:[#allocation8 + $0x16f8] sm:$0xff] %v3869
    %4638 = vst [vmem:[#allocation8 + $0x1700] sm:$0xff] %v3870
    %4639 = vst [vmem:[#allocation8 + $0x1708] sm:$0xff] %v3871
    %4640 = vst [vmem:[#allocation8 + $0x1710] sm:$0xff] %v3872
    %4641 = vst [vmem:[#allocation8 + $0x1718] sm:$0xff] %v3873
    %4642 = vst [vmem:[#allocation8 + $0x1720] sm:$0xff] %v3874
    %4643 = vst [vmem:[#allocation8 + $0x1728] sm:$0xff] %v3875
    %4644 = vst [vmem:[#allocation8 + $0x1730] sm:$0xff] %v3876
    %4645 = vst [vmem:[#allocation8 + $0x1738] sm:$0xff] %v3877
    %4646 = vst [vmem:[#allocation8 + $0x1740] sm:$0xff] %v3878
    %4647 = vst [vmem:[#allocation8 + $0x1748] sm:$0xff] %v3879
    %4648 = vst [vmem:[#allocation8 + $0x1750] sm:$0xff] %v3880
    %4649 = vst [vmem:[#allocation8 + $0x1758] sm:$0xff] %v3881
    %4650 = vst [vmem:[#allocation8 + $0x1760] sm:$0xff] %v3882
    %4651 = vst [vmem:[#allocation8 + $0x1768] sm:$0xff] %v3883
    %4652 = vst [vmem:[#allocation8 + $0x1770] sm:$0xff] %v3884
    %4653 = vst [vmem:[#allocation8 + $0x1778] sm:$0xff] %v3885
    %4654 = vst [vmem:[#allocation8 + $0x1780] sm:$0xff] %v3886
    %4655 = vst [vmem:[#allocation8 + $0x1788] sm:$0xff] %v3887
    %4656 = vst [vmem:[#allocation8 + $0x1790] sm:$0xff] %v3888
    %4657 = vst [vmem:[#allocation8 + $0x1798] sm:$0xff] %v3889
    %4658 = vst [vmem:[#allocation8 + $0x17a0] sm:$0xff] %v3890
    %4659 = vst [vmem:[#allocation8 + $0x17a8] sm:$0xff] %v3891
    %4660 = vst [vmem:[#allocation8 + $0x17b0] sm:$0xff] %v3892
    %4661 = vst [vmem:[#allocation8 + $0x17b8] sm:$0xff] %v3893
    %4662 = vst [vmem:[#allocation8 + $0x17c0] sm:$0xff] %v3894
    %4663 = vst [vmem:[#allocation8 + $0x17c8] sm:$0xff] %v3895
    %4664 = vst [vmem:[#allocation8 + $0x17d0] sm:$0xff] %v3896
    %4665 = vst [vmem:[#allocation8 + $0x17d8] sm:$0xff] %v3897
    %4666 = vst [vmem:[#allocation8 + $0x17e0] sm:$0xff] %v3898
    %4667 = vst [vmem:[#allocation8 + $0x17e8] sm:$0xff] %v3899
    %4668 = vst [vmem:[#allocation8 + $0x17f0] sm:$0xff] %v3900
    %4669 = vst [vmem:[#allocation8 + $0x17f8] sm:$0xff] %v3901
    // Predicated region
    $region26: #{tpu_custom_call.1} parent=1 // pred_check
      _
    $region27: #{tpu_custom_call.1} parent=1 // pred_check_branch
      %4671 = sbr.rel (0) target = $region29
    $region28: #{tpu_custom_call.1} parent=1 // pred_region
      %4673 = vsyncadd [#allocation4], 0
      %s4674 = sshll.u32 [#allocation8], 4
      %s4675 = int_to_ptr.vmem [resolvable:$true] %s4674
      %s4676 = sshll.u32 %s3, 4
      %s4677 = int_to_ptr.hbm [resolvable:$true] %s4676
      %4682 = dma.vmem_to_hbm [thread:$0]  %s4675, 98304, %s4677, [#allocation4], 1024, 1024, 64
    $region29: #{tpu_custom_call.1} parent=1 // pred_fallthru
      _
    // Predicated region
    $region30: #{tpu_custom_call.1} parent=1 // pred_check
      _
    $region31: #{tpu_custom_call.1} parent=1 // pred_check_branch
      %4684 = sbr.rel (0) target = $region33
    $region32: #{tpu_custom_call.1} parent=1 // pred_region
      %4686 = dma.done [#allocation4], 98304
    $region33: #{tpu_custom_call.1} parent=1 // pred_fallthru
      _
    %4687 = vsyncpa [#allocation3], 1
    %4688 = vsyncpa [#allocation6], 1
    %4689 = vsyncpa [#allocation4], 1

</llo_original>
